<compile_context>
chip_gen: v5e
topology: v5e:2x2
jax: 0.10.0
libtpu: 0.0.40
codegen_flags: <defaults>
</compile_context>

<pallas_src>
import functools
import math

import jax
import jax.numpy as jnp
from jax.experimental import pallas as pl
from jax.experimental.pallas import tpu as pltpu


# ----------------------------- Pallas kernel ------------------------------- #

def _expert_ffn_kernel(xg_ref,          # VMEM (1, C_pad, H)  bf16 — gathered tokens
                       w1_ref, w3_ref,  # VMEM (1, H, TI)     bf16 — weight slices
                       w2_ref,          # VMEM (1, TI, H)     bf16
                       wgt_ref,         # VMEM (1, C_pad, 1)  f32  — routing weights
                       o_ref,           # VMEM (1, C_pad, H)  bf16 — weighted output
                       acc):            # VMEM scratch (C_pad, H) f32
    i = pl.program_id(1)

    @pl.when(i == 0)
    def _():
        acc[...] = jnp.zeros_like(acc)

    # SwiGLU FFN on this intermediate-dim tile, fp32 accumulation on the MXU.
    x = xg_ref[0]                                                      # (C_pad, H) bf16
    h1 = jnp.dot(x, w1_ref[0], preferred_element_type=jnp.float32)     # (C_pad, TI)
    h3 = jnp.dot(x, w3_ref[0], preferred_element_type=jnp.float32)     # (C_pad, TI)
    act = (h1 * jax.nn.sigmoid(h1) * h3).astype(jnp.bfloat16)          # SiLU(w1 x) * (w3 x)
    acc[...] += jnp.dot(act, w2_ref[0], preferred_element_type=jnp.float32)

    @pl.when(i == pl.num_programs(1) - 1)
    def _():
        # Apply per-token routing weight in fp32, then cast once for writeback.
        o_ref[0] = (acc[...] * wgt_ref[0]).astype(o_ref.dtype)


# ------------------------------ host wrappers ------------------------------ #

def _vmem_budgets():
    """Generation-aware VMEM budgets (v7x: 64 MiB/TC, v5e/v6e: 128 MiB)."""
    cap = None
    try:
        cap = getattr(pltpu.get_tpu_info(), "vmem_capacity_bytes", None)
    except Exception:
        cap = None
    if not cap:
        cap = 64 * 1024 * 1024  # conservative fallback, safe on every generation
    ti_budget = min(int(0.70 * cap), 90 * 1024 * 1024)    # tile-selection budget
    vmem_limit = min(int(0.78 * cap), 100 * 1024 * 1024)  # scoped-VMEM limit
    return ti_budget, vmem_limit


def _auto_ti(I, H, c_pad, budget_bytes):
    """Largest intermediate-dim tile whose VMEM footprint fits the budget."""
    cands = sorted(
        {ti for ti in (I, 4096, 2048, 1024, 512, 256, 128)
         if 0 < ti <= I and I % ti == 0 and (ti % 128 == 0 or ti == I)},
        reverse=True)
    for ti in cands:
        weights = 3 * H * ti * 2 * 2                 # w1/w3/w2 bf16 slices, double-buffered
        resident = c_pad * H * (2 * 2 + 4 + 2 * 2)   # x tile (db) + f32 acc + out (db)
        if weights + resident <= budget_bytes:
            return ti
    return cands[-1]


def _expert_ffn(x_gathered, w_pad3, w1, w3, w2, *, ti_block=None):
    """Per-expert SwiGLU FFN over gathered tokens, routing weight applied in-kernel.

    x_gathered: (E, C_pad, H) bf16, w_pad3: (E, C_pad, 1) f32 -> (E, C_pad, H) bf16.
    """
    E, c_pad, H = x_gathered.shape
    I = w1.shape[-1]
    ti_budget, vmem_limit = _vmem_budgets()
    if ti_block is None:
        ti_block = _auto_ti(I, H, c_pad, ti_budget)
    assert I % ti_block == 0, (I, ti_block)
    n_i = I // ti_block

    # TODO(synk): if the weight DMA is still exposed at very small C_pad, add
    #             pipeline_mode=pl.Buffered(3) on the w1/w3/w2 specs.
    return pl.pallas_call(
        _expert_ffn_kernel,
        out_shape=jax.ShapeDtypeStruct((E, c_pad, H), jnp.bfloat16),
        grid=(E, n_i),
        in_specs=[
            pl.BlockSpec((1, c_pad, H), lambda e, i: (e, 0, 0)),        # gathered tokens
            pl.BlockSpec((1, H, ti_block), lambda e, i: (e, 0, i)),     # w1 slice
            pl.BlockSpec((1, H, ti_block), lambda e, i: (e, 0, i)),     # w3 slice
            pl.BlockSpec((1, ti_block, H), lambda e, i: (e, i, 0)),     # w2 slice
            pl.BlockSpec((1, c_pad, 1), lambda e, i: (e, 0, 0)),        # routing weights
        ],
        out_specs=pl.BlockSpec((1, c_pad, H), lambda e, i: (e, 0, 0)),
        scratch_shapes=[pltpu.VMEM((c_pad, H), jnp.float32)],           # fp32 accumulator
        compiler_params=pltpu.CompilerParams(
            dimension_semantics=("parallel", "arbitrary"),              # expert axis -> v7x megacore
            vmem_limit_bytes=vmem_limit,
        ),
    )(x_gathered, w1, w3, w2, w_pad3)


def expert_choice_moe_forward(x, params, capacity_factor, *, ti_block=None):
    """Matches ExpertChoiceMoELayer.forward: returns (output, aux_loss=0.0)."""
    B, S, H = x.shape
    x_flat = x.reshape(-1, H)
    T = x_flat.shape[0]
    x_bf16 = x_flat.astype(jnp.bfloat16)

    gate_w = params["gate_w"]                               # (E, H) bf16
    w1, w3, w2 = params["w1"], params["w3"], params["w2"]   # bf16 stacks
    E = gate_w.shape[0]

    # Router: tiny (E = 8) — plain XLA matmul; a separate pallas_call is pure overhead.
    logits_et = jnp.dot(x_bf16, gate_w.T,
                        preferred_element_type=jnp.float32).T           # (E, T)

    # Expert-choice routing: each expert picks its top-`capacity` tokens.
    capacity = min(int(math.ceil(T / E * capacity_factor)), T)
    top_scores, top_idx = jax.lax.top_k(logits_et, capacity)            # (E, C)
    weights = jax.nn.softmax(top_scores, axis=-1)                       # softmax over selected logits

    # Pad capacity to a multiple of 16 (bf16 sublane packing); padded slots -> token 0, weight 0.
    c_pad = max(16, -(-capacity // 16) * 16)
    pad = c_pad - capacity
    idx_pad = jnp.pad(top_idx, ((0, 0), (0, pad))).astype(jnp.int32)    # (E, C_pad)
    w_pad = jnp.pad(weights, ((0, 0), (0, pad))).astype(jnp.float32)    # (E, C_pad)

    # Dense gather in the wrapper (replaces the per-row DMA gather that sat on the
    # critical path inside the kernel).
    x_gathered = jnp.take(x_bf16, idx_pad, axis=0)                      # (E, C_pad, H) bf16

    # Per-expert SwiGLU FFN + routing-weight application (Pallas).
    expert_out = _expert_ffn(x_gathered, w_pad[..., None], w1, w3, w2,
                             ti_block=ti_block)                         # (E, C_pad, H) bf16

    # Combine (index_add_ semantics) as a bf16 one-hot matmul with fp32 accumulation.
    # Padded slots were weighted by 0 in-kernel, so their rows contribute nothing.
    # TODO(synk): for very large T, replace with a Pallas scatter-add writeback kernel
    #             (input_output_aliases) to avoid materializing the (E*C_pad, T) one-hot.
    onehot = jax.nn.one_hot(idx_pad.reshape(-1), T, dtype=jnp.bfloat16)  # (E*C_pad, T)
    final_flat = jnp.einsum("kt,kh->th", onehot, expert_out.reshape(-1, H),
                            preferred_element_type=jnp.float32)
    return final_flat.reshape(B, S, H).astype(x.dtype), jnp.float32(0.0)


# --------------------------- deterministic params -------------------------- #

def init_params(key, hidden_size, num_experts, intermediate_size, dtype=jnp.bfloat16):
    kg, k1, k2, k3 = jax.random.split(key, 4)
    s = 0.02
    return {
        # gate: nn.Linear(H, E, bias=False) weight, PyTorch layout (E, H)
        "gate_w": (s * jax.random.normal(kg, (num_experts, hidden_size), jnp.float32)).astype(dtype),
        # experts' w1/w3: (E, H, I); w2: (E, I, H)  (Linear weights transposed, stacked)
        "w1": (s * jax.random.normal(k1, (num_experts, hidden_size, intermediate_size), jnp.float32)).astype(dtype),
        "w3": (s * jax.random.normal(k3, (num_experts, hidden_size, intermediate_size), jnp.float32)).astype(dtype),
        "w2": (s * jax.random.normal(k2, (num_experts, intermediate_size, hidden_size), jnp.float32)).astype(dtype),
    }


# ----------------------------- pure-JAX reference --------------------------- #

def _reference_forward(x, params, capacity_factor):
    """Plain-JAX mirror of ExpertChoiceMoELayer.forward (same bf16/f32 numeric path)."""
    B, S, H = x.shape
    x_flat = x.reshape(-1, H)
    T = x_flat.shape[0]
    xb = x_flat.astype(jnp.bfloat16)
    gate_w = params["gate_w"]
    E = gate_w.shape[0]

    scores = jnp.dot(xb, gate_w.T, preferred_element_type=jnp.float32).T   # (E, T)
    capacity = min(int(math.ceil(T / E * capacity_factor)), T)
    top_s, top_i = jax.lax.top_k(scores, capacity)

    out = jnp.zeros((T, H), jnp.float32)
    for e in range(E):
        xe = xb[top_i[e]]                                                  # (C, H)
        h1 = jnp.dot(xe, params["w1"][e], preferred_element_type=jnp.float32)
        h3 = jnp.dot(xe, params["w3"][e], preferred_element_type=jnp.float32)
        act = (h1 * jax.nn.sigmoid(h1) * h3).astype(jnp.bfloat16)
        ye = jnp.dot(act, params["w2"][e], preferred_element_type=jnp.float32)
        w = jax.nn.softmax(top_s[e])
        out = out.at[top_i[e]].add(ye * w[:, None])
    return out.reshape(B, S, H).astype(x.dtype), jnp.float32(0.0)


# ----------------------------------- main ----------------------------------- #

if __name__ == "__main__":
    # Small shapes consistent with the module config (H=256, I=1024, E=8, cf=1.0).
    batch, seq, hidden = 2, 64, 256
    num_experts, intermediate = 8, 1024
    capacity_factor = 1.0

    key = jax.random.PRNGKey(0)
    kx, kp = jax.random.split(key)
    x = jax.random.normal(kx, (batch, seq, hidden), jnp.float32)
    params = init_params(kp, hidden, num_experts, intermediate)

    fwd = jax.jit(functools.partial(expert_choice_moe_forward,
                                    capacity_factor=capacity_factor))
    out, aux = fwd(x, params)
    jax.block_until_ready((out, aux))

    assert out.shape == (batch, seq, hidden)
    assert bool(jnp.isfinite(out).all())

    ref, _ = _reference_forward(x, params, capacity_factor)
    err = float(jnp.max(jnp.abs(out - ref)))
    scale = float(jnp.max(jnp.abs(ref))) + 1e-6
    assert err <= 0.05 * scale, (err, scale)

    print("KERNEL_OK")
</pallas_src>

<mosaic_0001>
module attributes {stable_mosaic.version = 11 : i64} {
  func.func @_expert_ffn_kernel(%arg0: i32, %arg1: i32, %arg2: memref<1x16x256xbf16, #tpu.memory_space<vmem>>, %arg3: memref<1x256x1024xbf16, #tpu.memory_space<vmem>>, %arg4: memref<1x256x1024xbf16, #tpu.memory_space<vmem>>, %arg5: memref<1x1024x256xbf16, #tpu.memory_space<vmem>>, %arg6: memref<1x16x1xf32, #tpu.memory_space<vmem>>, %arg7: memref<1x16x256xbf16, #tpu.memory_space<vmem>>, %arg8: memref<16x256xf32, #tpu.memory_space<vmem>>) attributes {dimension_semantics = [#tpu.dimension_semantics<parallel>, #tpu.dimension_semantics<arbitrary>], iteration_bounds = array<i64: 8, 1>, scalar_prefetch = 0 : i64, scratch_operands = 1 : i64, tpu.core_type = #tpu.core_type<tc>, window_params = [{transform_indices = @transform_0, window_bounds = array<i64: 1, 16, 256>}, {transform_indices = @transform_1, window_bounds = array<i64: 1, 256, 1024>}, {transform_indices = @transform_2, window_bounds = array<i64: 1, 256, 1024>}, {transform_indices = @transform_3, window_bounds = array<i64: 1, 1024, 256>}, {transform_indices = @transform_4, window_bounds = array<i64: 1, 16, 1>}, {transform_indices = @transform_5, window_bounds = array<i64: 1, 16, 256>}]} {
    %c0_i32 = arith.constant 0 : i32
    %0 = arith.cmpi eq, %arg1, %c0_i32 : i32
    %1 = arith.extui %0 : i1 to i32
    %c0_i32_0 = arith.constant 0 : i32
    %2 = arith.cmpi ne, %1, %c0_i32_0 : i32
    scf.if %2 {
      %cst_21 = arith.constant 0.000000e+00 : f32
      %28 = vector.broadcast %cst_21 : f32 to vector<16x256xf32>
      %c0_22 = arith.constant 0 : index
      %c0_23 = arith.constant 0 : index
      %29 = vector.load %arg8[%c0_22, %c0_23] : memref<16x256xf32, #tpu.memory_space<vmem>>, vector<16x256xf32>
      tpu.vector_store %arg8[%c0_22, %c0_23], %28 {strides = array<i32>} : memref<16x256xf32, #tpu.memory_space<vmem>>, vector<16x256xf32>,
    } else {
    }
    %c0 = arith.constant 0 : index
    %c0_1 = arith.constant 0 : index
    %c0_2 = arith.constant 0 : index
    %3 = vector.load %arg2[%c0, %c0_1, %c0_2] : memref<1x16x256xbf16, #tpu.memory_space<vmem>>, vector<1x16x256xbf16>
    %4 = vector.shape_cast %3 : vector<1x16x256xbf16> to vector<16x256xbf16>
    %c0_3 = arith.constant 0 : index
    %c0_4 = arith.constant 0 : index
    %c0_5 = arith.constant 0 : index
    %5 = vector.load %arg3[%c0_3, %c0_4, %c0_5] : memref<1x256x1024xbf16, #tpu.memory_space<vmem>>, vector<1x256x1024xbf16>
    %6 = vector.shape_cast %5 : vector<1x256x1024xbf16> to vector<256x1024xbf16>
    %cst = arith.constant dense<0.000000e+00> : vector<16x1024xf32>
    %7 = tpu.matmul %4, %6, %cst {dimension_numbers = #tpu.dot_dimension_numbers<[1], [0], [0], [1], [0, 0, 1, 1], [], []>} : vector<16x256xbf16>, vector<256x1024xbf16>, vector<16x1024xf32> -> vector<16x1024xf32>
    %c0_6 = arith.constant 0 : index
    %c0_7 = arith.constant 0 : index
    %c0_8 = arith.constant 0 : index
    %8 = vector.load %arg4[%c0_6, %c0_7, %c0_8] : memref<1x256x1024xbf16, #tpu.memory_space<vmem>>, vector<1x256x1024xbf16>
    %9 = vector.shape_cast %8 : vector<1x256x1024xbf16> to vector<256x1024xbf16>
    %cst_9 = arith.constant dense<0.000000e+00> : vector<16x1024xf32>
    %10 = tpu.matmul %4, %9, %cst_9 {dimension_numbers = #tpu.dot_dimension_numbers<[1], [0], [0], [1], [0, 0, 1, 1], [], []>} : vector<16x256xbf16>, vector<256x1024xbf16>, vector<16x1024xf32> -> vector<16x1024xf32>
    %11 = arith.negf %7 : vector<16x1024xf32>
    %12 = math.exp %11 : vector<16x1024xf32>
    %cst_10 = arith.constant 1.000000e+00 : f32
    %13 = vector.broadcast %cst_10 : f32 to vector<16x1024xf32>
    %14 = arith.addf %13, %12 : vector<16x1024xf32>
    %15 = arith.divf %13, %14 : vector<16x1024xf32>
    %16 = arith.mulf %7, %15 : vector<16x1024xf32>
    %17 = arith.mulf %16, %10 : vector<16x1024xf32>
    %18 = arith.truncf %17 : vector<16x1024xf32> to vector<16x1024xbf16>
    %c0_11 = arith.constant 0 : index
    %c0_12 = arith.constant 0 : index
    %19 = vector.load %arg8[%c0_11, %c0_12] : memref<16x256xf32, #tpu.memory_space<vmem>>, vector<16x256xf32>
    %c0_13 = arith.constant 0 : index
    %c0_14 = arith.constant 0 : index
    %c0_15 = arith.constant 0 : index
    %20 = vector.load %arg5[%c0_13, %c0_14, %c0_15] : memref<1x1024x256xbf16, #tpu.memory_space<vmem>>, vector<1x1024x256xbf16>
    %21 = vector.shape_cast %20 : vector<1x1024x256xbf16> to vector<1024x256xbf16>
    %cst_16 = arith.constant dense<0.000000e+00> : vector<16x256xf32>
    %22 = tpu.matmul %18, %21, %cst_16 {dimension_numbers = #tpu.dot_dimension_numbers<[1], [0], [0], [1], [0, 0, 1, 1], [], []>} : vector<16x1024xbf16>, vector<1024x256xbf16>, vector<16x256xf32> -> vector<16x256xf32>
    %23 = arith.addf %19, %22 : vector<16x256xf32>
    %c0_17 = arith.constant 0 : index
    %c0_18 = arith.constant 0 : index
    %24 = vector.load %arg8[%c0_17, %c0_18] : memref<16x256xf32, #tpu.memory_space<vmem>>, vector<16x256xf32>
    tpu.vector_store %arg8[%c0_17, %c0_18], %23 {strides = array<i32>} : memref<16x256xf32, #tpu.memory_space<vmem>>, vector<16x256xf32>,
    %c0_i32_19 = arith.constant 0 : i32
    %25 = arith.cmpi eq, %arg1, %c0_i32_19 : i32
    %26 = arith.extui %25 : i1 to i32
    %c0_i32_20 = arith.constant 0 : i32
    %27 = arith.cmpi ne, %26, %c0_i32_20 : i32
    scf.if %27 {
      %c0_21 = arith.constant 0 : index
      %c0_22 = arith.constant 0 : index
      %28 = vector.load %arg8[%c0_21, %c0_22] : memref<16x256xf32, #tpu.memory_space<vmem>>, vector<16x256xf32>
      %c0_23 = arith.constant 0 : index
      %c0_24 = arith.constant 0 : index
      %c0_25 = arith.constant 0 : index
      %29 = vector.load %arg6[%c0_23, %c0_24, %c0_25] : memref<1x16x1xf32, #tpu.memory_space<vmem>>, vector<1x16x1xf32>
      %30 = vector.shape_cast %29 : vector<1x16x1xf32> to vector<16x1xf32>
      %31 = vector.broadcast %30 : vector<16x1xf32> to vector<16x256xf32>
      %32 = arith.mulf %28, %31 : vector<16x256xf32>
      %33 = arith.truncf %32 : vector<16x256xf32> to vector<16x256xbf16>
      %c0_26 = arith.constant 0 : index
      %c0_27 = arith.constant 0 : index
      %c0_28 = arith.constant 0 : index
      %34 = vector.load %arg7[%c0_26, %c0_27, %c0_28] : memref<1x16x256xbf16, #tpu.memory_space<vmem>>, vector<1x16x256xbf16>
      %35 = vector.shape_cast %34 : vector<1x16x256xbf16> to vector<16x256xbf16>
      %36 = vector.shape_cast %33 : vector<16x256xbf16> to vector<1x16x256xbf16>
      tpu.vector_store %arg7[%c0_26, %c0_27, %c0_28], %36 {strides = array<i32>} : memref<1x16x256xbf16, #tpu.memory_space<vmem>>, vector<1x16x256xbf16>,
    } else {
    }
    return
  }
  func.func @transform_0(%arg0: i32, %arg1: i32) -> (i32, i32, i32) {
    %c0_i32 = arith.constant 0 : i32
    %c0_i32_0 = arith.constant 0 : i32
    %c0_i32_1 = arith.constant 0 : i32
    return %arg0, %c0_i32, %c0_i32_0 : i32, i32, i32
  }
  func.func @transform_1(%arg0: i32, %arg1: i32) -> (i32, i32, i32) {
    %c0_i32 = arith.constant 0 : i32
    %c0_i32_0 = arith.constant 0 : i32
    return %arg0, %c0_i32, %arg1 : i32, i32, i32
  }
  func.func @transform_2(%arg0: i32, %arg1: i32) -> (i32, i32, i32) {
    %c0_i32 = arith.constant 0 : i32
    %c0_i32_0 = arith.constant 0 : i32
    return %arg0, %c0_i32, %arg1 : i32, i32, i32
  }
  func.func @transform_3(%arg0: i32, %arg1: i32) -> (i32, i32, i32) {
    %c0_i32 = arith.constant 0 : i32
    %c0_i32_0 = arith.constant 0 : i32
    return %arg0, %arg1, %c0_i32 : i32, i32, i32
  }
  func.func @transform_4(%arg0: i32, %arg1: i32) -> (i32, i32, i32) {
    %c0_i32 = arith.constant 0 : i32
    %c0_i32_0 = arith.constant 0 : i32
    %c0_i32_1 = arith.constant 0 : i32
    return %arg0, %c0_i32, %c0_i32_0 : i32, i32, i32
  }
  func.func @transform_5(%arg0: i32, %arg1: i32) -> (i32, i32, i32) {
    %c0_i32 = arith.constant 0 : i32
    %c0_i32_0 = arith.constant 0 : i32
    %c0_i32_1 = arith.constant 0 : i32
    return %arg0, %c0_i32, %c0_i32_0 : i32, i32, i32
  }
}

</mosaic_0001>

<llo_original>
// kernel: expert_choice_moe_forward.1
$region0: #{expert_choice_moe_forward.1}
  #allocation0 [shape = 'u32[]', space=smem, size = 0x4, offset = 0x4, fixed_abs, tag = 'smem constant byte address 0x4 - core index']
  #allocation1 [shape = 'u32[72,128]{1,0:T(1,128)}', space=vmem, size = 0x9000, scoped, tag = 'internal scratch']
  #allocation2 [shape = 'f32[16,256]{1,0:T(8,128)}', space=vmem, size = 0x4000, scoped, tag = 'scratch operand']
  %s0 = inlined_call_operand.vmem [shape: bf16[8,16,256], index: 0, kind: input, shape index: {}]
  %s1 = inlined_call_operand.hbm [shape: bf16[8,256,1024], index: 1, kind: input, shape index: {}]
  %s2 = inlined_call_operand.hbm [shape: bf16[8,256,1024], index: 2, kind: input, shape index: {}]
  %s3 = inlined_call_operand.hbm [shape: bf16[8,1024,256], index: 3, kind: input, shape index: {}]
  %s4 = inlined_call_operand.vmem [shape: f32[8,16,1], index: 4, kind: input, shape index: {}]
  %s5 = inlined_call_operand.vmem [shape: bf16[8,16,256], index: 5, kind: output, shape index: {}]
  %s6 = sld [smem:[#allocation0]]
  $region73: #{expert_choice_moe_forward.1} parent=0
    _
  %s8 = ssub.s32 1, %s6
  %s9 = scalar_select 0, %s8, %s6
  $region1: #{expert_choice_moe_forward.1} parent=0
    #allocation3 [shape = 'u8[1048576]{0}', space=vmem, size = 0x100000, scoped, tag = 'input window, operand 1']
    #allocation4 [shape = 's32[2]{0}', space=sflag, size = 0x8, scoped, tag = 'scoped memory for expert_choice_moe_forward.1']
    #allocation5 [shape = 'u8[1048576]{0}', space=vmem, size = 0x100000, scoped, tag = 'input window, operand 2']
    #allocation6 [shape = 's32[2]{0}', space=sflag, size = 0x8, scoped, tag = 'scoped memory for expert_choice_moe_forward.1']
    #allocation7 [shape = 'u8[1048576]{0}', space=vmem, size = 0x100000, scoped, tag = 'input window, operand 3']
    %10 = vsyncpa [#allocation4], 0
    %s11 = scalar_lea.sflag [#allocation4], 1
    %12 = vsyncpa %s11, 0
    %13 = vsyncpa [#allocation6], 0
    %s14 = scalar_lea.sflag [#allocation6], 1
    %15 = vsyncpa %s14, 0
    loop: start=0, step=1, limit=10
    $region2: #{expert_choice_moe_forward.1} parent=1 // loop_pre_header
      _
    $region3: #{expert_choice_moe_forward.1} parent=1 // loop_header
      %s17 = sphi 0, %s21
      %p18 = scmp.ge.s32.totalorder %s17, 10
      %s24 = sphi 0, %s36
      %s25 = sphi 0, %s32
      %s26 = sphi 0, %s24
      %s27 = sphi 0, %s25
      %s28 = sphi 0, %s26
      %s29 = sphi 0, %s27
      %s39 = sphi 0, %s41
      %s42 = sphi 0, %s39
      %s43 = sphi 0, %s42
      %s59 = sphi 0, %s43
      %s67 = sphi 0, %s69
      %s70 = sphi 0, %s67
      %s71 = sphi 0, %s70
      %s87 = sphi 0, %s71
      %s95 = sphi 0, %s97
      %s98 = sphi 0, %s95
      %s99 = sphi 0, %s98
      %s115 = sphi 0, %s99
      %s123 = sphi 0, %s125
      %s126 = sphi 0, %s123
      %s127 = sphi 0, %s126
      %s143 = sphi 0, %s127
      %s149 = sphi 0, %s151
      %s152 = sphi 0, %s149
      %s153 = sphi 0, %s152
      %s169 = sphi 0, %s153
      %s175 = sphi 0, %s177
      %s178 = sphi 0, %s175
      %s179 = sphi 0, %s178
      %s195 = sphi 0, %s179
    $region4: #{expert_choice_moe_forward.1} parent=1 // loop_header_branch
      %20 = sbr.rel (%p18) target = $region8
    $region5: #{expert_choice_moe_forward.1} parent=1 // loop_body
      %s22 = ssub.s32 %s17, 1
      %s23 = ssub.s32 %s17, 2
      %s30 = sadd.s32 1, %s25
      %p31 = scmp.ge.s32.totalorder %s30, 1
      %s32 = scalar_select %p31, 0, %s30
      %s33 = sadd.s32 1, %s24
      %s34 = scalar_select %p31, %s33, %s24
      %p35 = scmp.ge.s32.totalorder %s34, 8
      %s36 = scalar_select %p35, 0, %s34
      %s37 = ssub.s32 %s24, %s36
      %p38 = scmp.eq.s32.totalorder %s37, 0
      %s40 = sadd.s32 %s39, 1
      %s41 = scalar_select %p38, %s39, %s40
      %p44 = pneg %p38
      %p45 = scmp.eq.s32.totalorder %s17, 7
      %p46 = por %p44, %p45
      %p47 = scmp.ne.s32.totalorder %s39, %s42
      %p48 = scmp.eq.s32.totalorder %s17, 0
      %p49 = por %p47, %p48
      %p50 = scmp.ne.s32.totalorder %s39, %s42
      %p51 = scmp.eq.s32.totalorder %s22, 7
      %p52 = por %p50, %p51
      %p53 = scmp.ne.s32.totalorder %s42, %s43
      %p54 = scmp.eq.s32.totalorder %s22, 0
      %p55 = por %p53, %p54
      %p56 = scmp.ne.s32.totalorder %s42, %s43
      %p57 = scmp.eq.s32.totalorder %s23, 7
      %p58 = por %p56, %p57
      %p60 = scmp.ne.s32.totalorder %s43, %s59
      %p61 = scmp.eq.s32.totalorder %s23, 0
      %p62 = por %p60, %p61
      %s63 = ssub.s32 %s24, %s36
      %s64 = ssub.s32 %s25, %s32
      %s65 = sor.u32 %s63, %s64
      %p66 = scmp.eq.s32.totalorder %s65, 0
      %s68 = sadd.s32 %s67, 1
      %s69 = scalar_select %p66, %s67, %s68
      %p72 = pneg %p66
      %p73 = scmp.eq.s32.totalorder %s17, 7
      %p74 = por %p72, %p73
      %p75 = scmp.ne.s32.totalorder %s67, %s70
      %p76 = scmp.eq.s32.totalorder %s17, 0
      %p77 = por %p75, %p76
      %p78 = scmp.ne.s32.totalorder %s67, %s70
      %p79 = scmp.eq.s32.totalorder %s22, 7
      %p80 = por %p78, %p79
      %p81 = scmp.ne.s32.totalorder %s70, %s71
      %p82 = scmp.eq.s32.totalorder %s22, 0
      %p83 = por %p81, %p82
      %p84 = scmp.ne.s32.totalorder %s70, %s71
      %p85 = scmp.eq.s32.totalorder %s23, 7
      %p86 = por %p84, %p85
      %p88 = scmp.ne.s32.totalorder %s71, %s87
      %p89 = scmp.eq.s32.totalorder %s23, 0
      %p90 = por %p88, %p89
      %s91 = ssub.s32 %s24, %s36
      %s92 = ssub.s32 %s25, %s32
      %s93 = sor.u32 %s91, %s92
      %p94 = scmp.eq.s32.totalorder %s93, 0
      %s96 = sadd.s32 %s95, 1
      %s97 = scalar_select %p94, %s95, %s96
      %p100 = pneg %p94
      %p101 = scmp.eq.s32.totalorder %s17, 7
      %p102 = por %p100, %p101
      %p103 = scmp.ne.s32.totalorder %s95, %s98
      %p104 = scmp.eq.s32.totalorder %s17, 0
      %p105 = por %p103, %p104
      %p106 = scmp.ne.s32.totalorder %s95, %s98
      %p107 = scmp.eq.s32.totalorder %s22, 7
      %p108 = por %p106, %p107
      %p109 = scmp.ne.s32.totalorder %s98, %s99
      %p110 = scmp.eq.s32.totalorder %s22, 0
      %p111 = por %p109, %p110
      %p112 = scmp.ne.s32.totalorder %s98, %s99
      %p113 = scmp.eq.s32.totalorder %s23, 7
      %p114 = por %p112, %p113
      %p116 = scmp.ne.s32.totalorder %s99, %s115
      %p117 = scmp.eq.s32.totalorder %s23, 0
      %p118 = por %p116, %p117
      %s119 = ssub.s32 %s24, %s36
      %s120 = ssub.s32 %s25, %s32
      %s121 = sor.u32 %s119, %s120
      %p122 = scmp.eq.s32.totalorder %s121, 0
      %s124 = sadd.s32 %s123, 1
      %s125 = scalar_select %p122, %s123, %s124
      %p128 = pneg %p122
      %p129 = scmp.eq.s32.totalorder %s17, 7
      %p130 = por %p128, %p129
      %p131 = scmp.ne.s32.totalorder %s123, %s126
      %p132 = scmp.eq.s32.totalorder %s17, 0
      %p133 = por %p131, %p132
      %p134 = scmp.ne.s32.totalorder %s123, %s126
      %p135 = scmp.eq.s32.totalorder %s22, 7
      %p136 = por %p134, %p135
      %p137 = scmp.ne.s32.totalorder %s126, %s127
      %p138 = scmp.eq.s32.totalorder %s22, 0
      %p139 = por %p137, %p138
      %p140 = scmp.ne.s32.totalorder %s126, %s127
      %p141 = scmp.eq.s32.totalorder %s23, 7
      %p142 = por %p140, %p141
      %p144 = scmp.ne.s32.totalorder %s127, %s143
      %p145 = scmp.eq.s32.totalorder %s23, 0
      %p146 = por %p144, %p145
      %s147 = ssub.s32 %s24, %s36
      %p148 = scmp.eq.s32.totalorder %s147, 0
      %s150 = sadd.s32 %s149, 1
      %s151 = scalar_select %p148, %s149, %s150
      %p154 = pneg %p148
      %p155 = scmp.eq.s32.totalorder %s17, 7
      %p156 = por %p154, %p155
      %p157 = scmp.ne.s32.totalorder %s149, %s152
      %p158 = scmp.eq.s32.totalorder %s17, 0
      %p159 = por %p157, %p158
      %p160 = scmp.ne.s32.totalorder %s149, %s152
      %p161 = scmp.eq.s32.totalorder %s22, 7
      %p162 = por %p160, %p161
      %p163 = scmp.ne.s32.totalorder %s152, %s153
      %p164 = scmp.eq.s32.totalorder %s22, 0
      %p165 = por %p163, %p164
      %p166 = scmp.ne.s32.totalorder %s152, %s153
      %p167 = scmp.eq.s32.totalorder %s23, 7
      %p168 = por %p166, %p167
      %p170 = scmp.ne.s32.totalorder %s153, %s169
      %p171 = scmp.eq.s32.totalorder %s23, 0
      %p172 = por %p170, %p171
      %s173 = ssub.s32 %s24, %s36
      %p174 = scmp.eq.s32.totalorder %s173, 0
      %s176 = sadd.s32 %s175, 1
      %s177 = scalar_select %p174, %s175, %s176
      %p180 = pneg %p174
      %p181 = scmp.eq.s32.totalorder %s17, 7
      %p182 = por %p180, %p181
      %p183 = scmp.ne.s32.totalorder %s175, %s178
      %p184 = scmp.eq.s32.totalorder %s17, 0
      %p185 = por %p183, %p184
      %p186 = scmp.ne.s32.totalorder %s175, %s178
      %p187 = scmp.eq.s32.totalorder %s22, 7
      %p188 = por %p186, %p187
      %p189 = scmp.ne.s32.totalorder %s178, %s179
      %p190 = scmp.eq.s32.totalorder %s22, 0
      %p191 = por %p189, %p190
      %p192 = scmp.ne.s32.totalorder %s178, %s179
      %p193 = scmp.eq.s32.totalorder %s23, 7
      %p194 = por %p192, %p193
      %p196 = scmp.ne.s32.totalorder %s179, %s195
      %p197 = scmp.eq.s32.totalorder %s23, 0
      %p198 = por %p196, %p197
      %p199 = scmp.le.s32.totalorder 1, %s17
      %p200 = scmp.lt.s32.totalorder %s17, 9
      %p201 = pnand %p199, %p200
      %p202 = pneg %p201
      // Predicated region
      $region9: #{expert_choice_moe_forward.1} parent=5 // pred_check
        _
      $region10: #{expert_choice_moe_forward.1} parent=5 // pred_check_branch
        %204 = sbr.rel (%p201) target = $region12
      $region11: #{expert_choice_moe_forward.1} parent=5 // pred_region
        %s205 = ssub.s32 %s17, 1
      $region12: #{expert_choice_moe_forward.1} parent=5 // pred_fallthru
        _
      %p206 = scmp.lt.s32.totalorder %s17, 8
      // Predicated region
      $region13: #{expert_choice_moe_forward.1} parent=5 // pred_check
        %p207 = pneg %p206
      $region14: #{expert_choice_moe_forward.1} parent=5 // pred_check_branch
        %209 = sbr.rel (%p207) target = $region16
      $region15: #{expert_choice_moe_forward.1} parent=5 // pred_region
        // Predicated region
        $region17: #{expert_choice_moe_forward.1} parent=15 // pred_check
          %p210 = pneg %p49
        $region18: #{expert_choice_moe_forward.1} parent=15 // pred_check_branch
          %212 = sbr.rel (%p210) target = $region20
        $region19: #{expert_choice_moe_forward.1} parent=15 // pred_region
          %p213 = scmp.lt.s32.totalorder %s24, 7
          %s214 = scalar_select %p213, %s24, 7
          %s215 = smul.addr %s214, 4
          %s216 = smul.addr %s215, 4
          %s217 = scalar_lea.vmem %s0, %s216
        $region20: #{expert_choice_moe_forward.1} parent=15 // pred_fallthru
          _
        // Predicated region
        $region21: #{expert_choice_moe_forward.1} parent=15 // pred_check
          %p218 = pneg %p77
        $region22: #{expert_choice_moe_forward.1} parent=15 // pred_check_branch
          %220 = sbr.rel (%p218) target = $region24
        $region23: #{expert_choice_moe_forward.1} parent=15 // pred_region
          %s221 = sand.u32 %s67, 1
          %s222 = scalar_lea.sflag [#allocation4], %s221
          %s223 = sand.u32 %s67, 1
          %s224 = smul.addr %s223, 1024
          %s225 = scalar_lea.vmem [#allocation3], %s224
          %s226 = smul.u32 8, %s25
          %228 = vsyncadd %s222, 0
          %s229 = smul.addr %s24, 256
          %s230 = sadd.s32 %s226, %s229
          %s231 = smul.addr %s230, 4
          %s232 = scalar_lea.hbm %s1, %s231
          %s233 = sshll.u32 %s232, 4
          %s234 = int_to_ptr.hbm [resolvable:$true] %s233
          %s235 = sshll.u32 %s225, 4
          %s236 = int_to_ptr.vmem [resolvable:$true] %s235
          %241 = dma.hbm_to_vmem [thread:$0]  %s234, 16384, %s236, %s222, 512, 512, 32
        $region24: #{expert_choice_moe_forward.1} parent=15 // pred_fallthru
          _
        // Predicated region
        $region25: #{expert_choice_moe_forward.1} parent=15 // pred_check
          %p242 = pneg %p105
        $region26: #{expert_choice_moe_forward.1} parent=15 // pred_check_branch
          %244 = sbr.rel (%p242) target = $region28
        $region27: #{expert_choice_moe_forward.1} parent=15 // pred_region
          %s245 = sand.u32 %s17, 1
          %s246 = scalar_lea.sflag [#allocation6], %s245
          %s247 = sand.u32 %s95, 1
          %s248 = smul.addr %s247, 1024
          %s249 = scalar_lea.vmem [#allocation5], %s248
          %s250 = smul.u32 8, %s25
          %252 = vsyncadd %s246, 0
          %s253 = smul.addr %s24, 256
          %s254 = sadd.s32 %s250, %s253
          %s255 = smul.addr %s254, 4
          %s256 = scalar_lea.hbm %s2, %s255
          %s257 = sshll.u32 %s256, 4
          %s258 = int_to_ptr.hbm [resolvable:$true] %s257
          %s259 = sshll.u32 %s249, 4
          %s260 = int_to_ptr.vmem [resolvable:$true] %s259
          %265 = dma.hbm_to_vmem [thread:$0]  %s258, 16384, %s260, %s246, 512, 512, 32
        $region28: #{expert_choice_moe_forward.1} parent=15 // pred_fallthru
          _
        // Predicated region
        $region29: #{expert_choice_moe_forward.1} parent=15 // pred_check
          %p266 = pneg %p133
        $region30: #{expert_choice_moe_forward.1} parent=15 // pred_check_branch
          %268 = sbr.rel (%p266) target = $region32
        $region31: #{expert_choice_moe_forward.1} parent=15 // pred_region
          %s269 = sand.u32 %s17, 1
          %s270 = scalar_lea.sflag [#allocation6], %s269
          %s271 = sand.u32 %s123, 1
          %s272 = smul.addr %s271, 1024
          %s273 = scalar_lea.vmem [#allocation7], %s272
          %s274 = smul.u32 128, %s25
          %276 = vsyncadd %s270, 0
          %s277 = smul.addr %s274, 2
          %s278 = smul.addr %s24, 256
          %s279 = sadd.s32 %s277, %s278
          %s280 = smul.addr %s279, 4
          %s281 = scalar_lea.hbm %s3, %s280
          %s282 = sshll.u32 %s281, 4
          %s283 = int_to_ptr.hbm [resolvable:$true] %s282
          %s284 = sshll.u32 %s273, 4
          %s285 = int_to_ptr.vmem [resolvable:$true] %s284
          %290 = dma.hbm_to_vmem [thread:$0]  %s283, 16384, %s285, %s270, 128, 128, 8
        $region32: #{expert_choice_moe_forward.1} parent=15 // pred_fallthru
          _
        // Predicated region
        $region33: #{expert_choice_moe_forward.1} parent=15 // pred_check
          %p291 = pneg %p159
        $region34: #{expert_choice_moe_forward.1} parent=15 // pred_check_branch
          %293 = sbr.rel (%p291) target = $region36
        $region35: #{expert_choice_moe_forward.1} parent=15 // pred_region
          %p294 = scmp.lt.s32.totalorder %s24, 7
          %s295 = scalar_select %p294, %s24, 7
          %s296 = smul.addr %s295, 2
          %s297 = smul.addr %s296, 8
          %s298 = scalar_lea.vmem %s4, %s297
        $region36: #{expert_choice_moe_forward.1} parent=15 // pred_fallthru
          _
      $region16: #{expert_choice_moe_forward.1} parent=5 // pred_fallthru
        _
      %p299 = scmp.le.s32.totalorder 1, %s17
      %p300 = scmp.lt.s32.totalorder %s17, 9
      %p301 = pnand %p299, %p300
      %p302 = pneg %p301
      // Predicated region
      $region37: #{expert_choice_moe_forward.1} parent=5 // pred_check
        _
      $region38: #{expert_choice_moe_forward.1} parent=5 // pred_check_branch
        %304 = sbr.rel (%p301) target = $region40
      $region39: #{expert_choice_moe_forward.1} parent=5 // pred_region
        %s305 = ssub.s32 %s17, 1
        %s306 = sand.u32 %s70, 1
        %s307 = scalar_lea.sflag [#allocation4], %s306
        %s308 = sand.u32 %s70, 1
        %s309 = smul.addr %s308, 1024
        %s310 = scalar_lea.vmem [#allocation3], %s309
        // Predicated region
        $region41: #{expert_choice_moe_forward.1} parent=39 // pred_check
          %p311 = pneg %p83
        $region42: #{expert_choice_moe_forward.1} parent=39 // pred_check_branch
          %313 = sbr.rel (%p311) target = $region44
        $region43: #{expert_choice_moe_forward.1} parent=39 // pred_region
          %315 = dma.done %s307, 16384
        $region44: #{expert_choice_moe_forward.1} parent=39 // pred_fallthru
          _
        %s316 = sand.u32 %s22, 1
        %s317 = scalar_lea.sflag [#allocation6], %s316
        %s318 = sand.u32 %s98, 1
        %s319 = smul.addr %s318, 1024
        %s320 = scalar_lea.vmem [#allocation5], %s319
        // Predicated region
        $region45: #{expert_choice_moe_forward.1} parent=39 // pred_check
          %p321 = pneg %p111
        $region46: #{expert_choice_moe_forward.1} parent=39 // pred_check_branch
          %323 = sbr.rel (%p321) target = $region48
        $region47: #{expert_choice_moe_forward.1} parent=39 // pred_region
          %325 = dma.done %s317, 16384
        $region48: #{expert_choice_moe_forward.1} parent=39 // pred_fallthru
          _
        %s326 = sand.u32 %s22, 1
        %s327 = scalar_lea.sflag [#allocation6], %s326
        %s328 = sand.u32 %s126, 1
        %s329 = smul.addr %s328, 1024
        %s330 = scalar_lea.vmem [#allocation7], %s329
        // Predicated region
        $region49: #{expert_choice_moe_forward.1} parent=39 // pred_check
          %p331 = pneg %p139
        $region50: #{expert_choice_moe_forward.1} parent=39 // pred_check_branch
          %333 = sbr.rel (%p331) target = $region52
        $region51: #{expert_choice_moe_forward.1} parent=39 // pred_region
          %335 = dma.done %s327, 16384
        $region52: #{expert_choice_moe_forward.1} parent=39 // pred_fallthru
          _
        %p336 = scmp.lt.s32.totalorder %s26, 7
        %s337 = scalar_select %p336, %s26, 7
        %s338 = smul.addr %s337, 4
        %s339 = smul.addr %s338, 4
        %s340 = scalar_lea.vmem %s0, %s339
        %p341 = pneg %p55
        %p342 = pneg %p52
        %s343 = sand.u32 %s70, 1
        %s344 = scalar_lea.sflag [#allocation4], %s343
        %s345 = sand.u32 %s70, 1
        %s346 = smul.addr %s345, 1024
        %s347 = scalar_lea.vmem [#allocation3], %s346
        %p348 = pneg %p83
        %p349 = pneg %p80
        %s350 = sand.u32 %s22, 1
        %s351 = scalar_lea.sflag [#allocation6], %s350
        %s352 = sand.u32 %s98, 1
        %s353 = smul.addr %s352, 1024
        %s354 = scalar_lea.vmem [#allocation5], %s353
        %p355 = pneg %p111
        %p356 = pneg %p108
        %s357 = sand.u32 %s22, 1
        %s358 = scalar_lea.sflag [#allocation6], %s357
        %s359 = sand.u32 %s126, 1
        %s360 = smul.addr %s359, 1024
        %s361 = scalar_lea.vmem [#allocation7], %s360
        %p362 = pneg %p139
        %p363 = pneg %p136
        %p364 = scmp.lt.s32.totalorder %s26, 7
        %s365 = scalar_select %p364, %s26, 7
        %s366 = smul.addr %s365, 2
        %s367 = smul.addr %s366, 8
        %s368 = scalar_lea.vmem %s4, %s367
        %p369 = pneg %p165
        %p370 = pneg %p162
        %p371 = pneg %p191
        %p372 = pneg %p188
        %p373 = scmp.lt.s32.totalorder %s26, 7
        %s374 = scalar_select %p373, %s26, 7
        %s375 = smul.addr %s374, 4
        %s376 = smul.addr %s375, 4
        %s377 = scalar_lea.vmem %s5, %s376
        %p378 = scmp.lt.s32.totalorder %s26, 7
        %s379 = scalar_select %p378, %s26, 7
        %s380 = smul.addr %s379, 4
        %s381 = smul.addr %s380, 4
        %s382 = scalar_lea.vmem %s0, %s381
        %s383 = smul.u32 8, %s27
        %s384 = smul.u32 8, %s27
        %s385 = smul.u32 128, %s27
        %p386 = scmp.lt.s32.totalorder %s26, 7
        %s387 = scalar_select %p386, %s26, 7
        %s388 = smul.addr %s387, 2
        %s389 = smul.addr %s388, 8
        %s390 = scalar_lea.vmem %s4, %s389
        %p391 = scmp.lt.s32.totalorder %s26, 7
        %s392 = scalar_select %p391, %s26, 7
        %s393 = smul.addr %s392, 4
        %s394 = smul.addr %s393, 4
        %s395 = scalar_lea.vmem %s5, %s394
        %p396 = scmp.eq.s32.totalorder %s27, 0
        // Predicated region
        $region53: #{expert_choice_moe_forward.1} parent=39 // pred_check
          %p397 = pneg %p396
        $region54: #{expert_choice_moe_forward.1} parent=39 // pred_check_branch
          %399 = sbr.rel (%p397) target = $region56
        $region55: #{expert_choice_moe_forward.1} parent=39 // pred_region
          %400 = vst [vmem:[#allocation2] sm:$0xff] 0.0
          %401 = vst [vmem:[#allocation2 + $0x8] sm:$0xff] 0.0
          %402 = vst [vmem:[#allocation2 + $0x10] sm:$0xff] 0.0
          %403 = vst [vmem:[#allocation2 + $0x18] sm:$0xff] 0.0
        $region56: #{expert_choice_moe_forward.1} parent=39 // pred_fallthru
          _
        %v404 = vld [vmem:[%s382] sm:$0xff]
        %v405 = vld [vmem:[%s382 + $0x8] sm:$0xff]
        %v406 = vld [vmem:[%s310] sm:$0xff]
        %v407 = vld [vmem:[%s310 + $0x8] sm:$0xff]
        %v408 = vld [vmem:[%s310 + $0x10] sm:$0xff]
        %v409 = vld [vmem:[%s310 + $0x18] sm:$0xff]
        %v410 = vld [vmem:[%s310 + $0x20] sm:$0xff]
        %v411 = vld [vmem:[%s310 + $0x28] sm:$0xff]
        %v412 = vld [vmem:[%s310 + $0x30] sm:$0xff]
        %v413 = vld [vmem:[%s310 + $0x38] sm:$0xff]
        %v414 = vld [vmem:[%s310 + $0x40] sm:$0xff]
        %v415 = vld [vmem:[%s310 + $0x48] sm:$0xff]
        %v416 = vld [vmem:[%s310 + $0x50] sm:$0xff]
        %v417 = vld [vmem:[%s310 + $0x58] sm:$0xff]
        %v418 = vld [vmem:[%s310 + $0x60] sm:$0xff]
        %v419 = vld [vmem:[%s310 + $0x68] sm:$0xff]
        %v420 = vld [vmem:[%s310 + $0x70] sm:$0xff]
        %v421 = vld [vmem:[%s310 + $0x78] sm:$0xff]
        %v422 = vld [vmem:[%s310 + $0x80] sm:$0xff]
        %v423 = vld [vmem:[%s310 + $0x88] sm:$0xff]
        %v424 = vld [vmem:[%s310 + $0x90] sm:$0xff]
        %v425 = vld [vmem:[%s310 + $0x98] sm:$0xff]
        %v426 = vld [vmem:[%s310 + $0xa0] sm:$0xff]
        %v427 = vld [vmem:[%s310 + $0xa8] sm:$0xff]
        %v428 = vld [vmem:[%s310 + $0xb0] sm:$0xff]
        %v429 = vld [vmem:[%s310 + $0xb8] sm:$0xff]
        %v430 = vld [vmem:[%s310 + $0xc0] sm:$0xff]
        %v431 = vld [vmem:[%s310 + $0xc8] sm:$0xff]
        %v432 = vld [vmem:[%s310 + $0xd0] sm:$0xff]
        %v433 = vld [vmem:[%s310 + $0xd8] sm:$0xff]
        %v434 = vld [vmem:[%s310 + $0xe0] sm:$0xff]
        %v435 = vld [vmem:[%s310 + $0xe8] sm:$0xff]
        %v436 = vld [vmem:[%s310 + $0xf0] sm:$0xff]
        %v437 = vld [vmem:[%s310 + $0xf8] sm:$0xff]
        %v438 = vld [vmem:[%s310 + $0x100] sm:$0xff]
        %v439 = vld [vmem:[%s310 + $0x108] sm:$0xff]
        %v440 = vld [vmem:[%s310 + $0x110] sm:$0xff]
        %v441 = vld [vmem:[%s310 + $0x118] sm:$0xff]
        %v442 = vld [vmem:[%s310 + $0x120] sm:$0xff]
        %v443 = vld [vmem:[%s310 + $0x128] sm:$0xff]
        %v444 = vld [vmem:[%s310 + $0x130] sm:$0xff]
        %v445 = vld [vmem:[%s310 + $0x138] sm:$0xff]
        %v446 = vld [vmem:[%s310 + $0x140] sm:$0xff]
        %v447 = vld [vmem:[%s310 + $0x148] sm:$0xff]
        %v448 = vld [vmem:[%s310 + $0x150] sm:$0xff]
        %v449 = vld [vmem:[%s310 + $0x158] sm:$0xff]
        %v450 = vld [vmem:[%s310 + $0x160] sm:$0xff]
        %v451 = vld [vmem:[%s310 + $0x168] sm:$0xff]
        %v452 = vld [vmem:[%s310 + $0x170] sm:$0xff]
        %v453 = vld [vmem:[%s310 + $0x178] sm:$0xff]
        %v454 = vld [vmem:[%s310 + $0x180] sm:$0xff]
        %v455 = vld [vmem:[%s310 + $0x188] sm:$0xff]
        %v456 = vld [vmem:[%s310 + $0x190] sm:$0xff]
        %v457 = vld [vmem:[%s310 + $0x198] sm:$0xff]
        %v458 = vld [vmem:[%s310 + $0x1a0] sm:$0xff]
        %v459 = vld [vmem:[%s310 + $0x1a8] sm:$0xff]
        %v460 = vld [vmem:[%s310 + $0x1b0] sm:$0xff]
        %v461 = vld [vmem:[%s310 + $0x1b8] sm:$0xff]
        %v462 = vld [vmem:[%s310 + $0x1c0] sm:$0xff]
        %v463 = vld [vmem:[%s310 + $0x1c8] sm:$0xff]
        %v464 = vld [vmem:[%s310 + $0x1d0] sm:$0xff]
        %v465 = vld [vmem:[%s310 + $0x1d8] sm:$0xff]
        %v466 = vld [vmem:[%s310 + $0x1e0] sm:$0xff]
        %v467 = vld [vmem:[%s310 + $0x1e8] sm:$0xff]
        %v468 = vld [vmem:[%s310 + $0x1f0] sm:$0xff]
        %v469 = vld [vmem:[%s310 + $0x1f8] sm:$0xff]
        %v470 = vld [vmem:[%s310 + $0x200] sm:$0xff]
        %v471 = vld [vmem:[%s310 + $0x208] sm:$0xff]
        %v472 = vld [vmem:[%s310 + $0x210] sm:$0xff]
        %v473 = vld [vmem:[%s310 + $0x218] sm:$0xff]
        %v474 = vld [vmem:[%s310 + $0x220] sm:$0xff]
        %v475 = vld [vmem:[%s310 + $0x228] sm:$0xff]
        %v476 = vld [vmem:[%s310 + $0x230] sm:$0xff]
        %v477 = vld [vmem:[%s310 + $0x238] sm:$0xff]
        %v478 = vld [vmem:[%s310 + $0x240] sm:$0xff]
        %v479 = vld [vmem:[%s310 + $0x248] sm:$0xff]
        %v480 = vld [vmem:[%s310 + $0x250] sm:$0xff]
        %v481 = vld [vmem:[%s310 + $0x258] sm:$0xff]
        %v482 = vld [vmem:[%s310 + $0x260] sm:$0xff]
        %v483 = vld [vmem:[%s310 + $0x268] sm:$0xff]
        %v484 = vld [vmem:[%s310 + $0x270] sm:$0xff]
        %v485 = vld [vmem:[%s310 + $0x278] sm:$0xff]
        %v486 = vld [vmem:[%s310 + $0x280] sm:$0xff]
        %v487 = vld [vmem:[%s310 + $0x288] sm:$0xff]
        %v488 = vld [vmem:[%s310 + $0x290] sm:$0xff]
        %v489 = vld [vmem:[%s310 + $0x298] sm:$0xff]
        %v490 = vld [vmem:[%s310 + $0x2a0] sm:$0xff]
        %v491 = vld [vmem:[%s310 + $0x2a8] sm:$0xff]
        %v492 = vld [vmem:[%s310 + $0x2b0] sm:$0xff]
        %v493 = vld [vmem:[%s310 + $0x2b8] sm:$0xff]
        %v494 = vld [vmem:[%s310 + $0x2c0] sm:$0xff]
        %v495 = vld [vmem:[%s310 + $0x2c8] sm:$0xff]
        %v496 = vld [vmem:[%s310 + $0x2d0] sm:$0xff]
        %v497 = vld [vmem:[%s310 + $0x2d8] sm:$0xff]
        %v498 = vld [vmem:[%s310 + $0x2e0] sm:$0xff]
        %v499 = vld [vmem:[%s310 + $0x2e8] sm:$0xff]
        %v500 = vld [vmem:[%s310 + $0x2f0] sm:$0xff]
        %v501 = vld [vmem:[%s310 + $0x2f8] sm:$0xff]
        %v502 = vld [vmem:[%s310 + $0x300] sm:$0xff]
        %v503 = vld [vmem:[%s310 + $0x308] sm:$0xff]
        %v504 = vld [vmem:[%s310 + $0x310] sm:$0xff]
        %v505 = vld [vmem:[%s310 + $0x318] sm:$0xff]
        %v506 = vld [vmem:[%s310 + $0x320] sm:$0xff]
        %v507 = vld [vmem:[%s310 + $0x328] sm:$0xff]
        %v508 = vld [vmem:[%s310 + $0x330] sm:$0xff]
        %v509 = vld [vmem:[%s310 + $0x338] sm:$0xff]
        %v510 = vld [vmem:[%s310 + $0x340] sm:$0xff]
        %v511 = vld [vmem:[%s310 + $0x348] sm:$0xff]
        %v512 = vld [vmem:[%s310 + $0x350] sm:$0xff]
        %v513 = vld [vmem:[%s310 + $0x358] sm:$0xff]
        %v514 = vld [vmem:[%s310 + $0x360] sm:$0xff]
        %v515 = vld [vmem:[%s310 + $0x368] sm:$0xff]
        %v516 = vld [vmem:[%s310 + $0x370] sm:$0xff]
        %v517 = vld [vmem:[%s310 + $0x378] sm:$0xff]
        %v518 = vld [vmem:[%s310 + $0x380] sm:$0xff]
        %v519 = vld [vmem:[%s310 + $0x388] sm:$0xff]
        %v520 = vld [vmem:[%s310 + $0x390] sm:$0xff]
        %v521 = vld [vmem:[%s310 + $0x398] sm:$0xff]
        %v522 = vld [vmem:[%s310 + $0x3a0] sm:$0xff]
        %v523 = vld [vmem:[%s310 + $0x3a8] sm:$0xff]
        %v524 = vld [vmem:[%s310 + $0x3b0] sm:$0xff]
        %v525 = vld [vmem:[%s310 + $0x3b8] sm:$0xff]
        %v526 = vld [vmem:[%s310 + $0x3c0] sm:$0xff]
        %v527 = vld [vmem:[%s310 + $0x3c8] sm:$0xff]
        %v528 = vld [vmem:[%s310 + $0x3d0] sm:$0xff]
        %v529 = vld [vmem:[%s310 + $0x3d8] sm:$0xff]
        %v530 = vld [vmem:[%s310 + $0x3e0] sm:$0xff]
        %v531 = vld [vmem:[%s310 + $0x3e8] sm:$0xff]
        %v532 = vld [vmem:[%s310 + $0x3f0] sm:$0xff]
        %v533 = vld [vmem:[%s310 + $0x3f8] sm:$0xff]
        %v536 = vunpack.c.l.b16 %v404
        %v537 = vunpack.c.h.b16 %v404
        %v538 = vunpack.c.l.b16 %v405
        %v539 = vunpack.c.h.b16 %v405
        %v540 = vpack.c.b16 %v538, %v536
        %v541 = vpack.c.b16 %v539, %v537
        %v672 = vunpack.c.l.b16 %v406
        %v673 = vunpack.c.h.b16 %v406
        %v674 = vunpack.c.l.b16 %v407
        %v675 = vunpack.c.h.b16 %v407
        %v676 = vunpack.c.l.b16 %v408
        %v677 = vunpack.c.h.b16 %v408
        %v678 = vunpack.c.l.b16 %v409
        %v679 = vunpack.c.h.b16 %v409
        %v680 = vunpack.c.l.b16 %v410
        %v681 = vunpack.c.h.b16 %v410
        %v682 = vunpack.c.l.b16 %v411
        %v683 = vunpack.c.h.b16 %v411
        %v684 = vunpack.c.l.b16 %v412
        %v685 = vunpack.c.h.b16 %v412
        %v686 = vunpack.c.l.b16 %v413
        %v687 = vunpack.c.h.b16 %v413
        %v688 = vunpack.c.l.b16 %v414
        %v689 = vunpack.c.h.b16 %v414
        %v690 = vunpack.c.l.b16 %v415
        %v691 = vunpack.c.h.b16 %v415
        %v692 = vunpack.c.l.b16 %v416
        %v693 = vunpack.c.h.b16 %v416
        %v694 = vunpack.c.l.b16 %v417
        %v695 = vunpack.c.h.b16 %v417
        %v696 = vunpack.c.l.b16 %v418
        %v697 = vunpack.c.h.b16 %v418
        %v698 = vunpack.c.l.b16 %v419
        %v699 = vunpack.c.h.b16 %v419
        %v700 = vunpack.c.l.b16 %v420
        %v701 = vunpack.c.h.b16 %v420
        %v702 = vunpack.c.l.b16 %v421
        %v703 = vunpack.c.h.b16 %v421
        %v704 = vunpack.c.l.b16 %v422
        %v705 = vunpack.c.h.b16 %v422
        %v706 = vunpack.c.l.b16 %v423
        %v707 = vunpack.c.h.b16 %v423
        %v708 = vunpack.c.l.b16 %v424
        %v709 = vunpack.c.h.b16 %v424
        %v710 = vunpack.c.l.b16 %v425
        %v711 = vunpack.c.h.b16 %v425
        %v712 = vunpack.c.l.b16 %v426
        %v713 = vunpack.c.h.b16 %v426
        %v714 = vunpack.c.l.b16 %v427
        %v715 = vunpack.c.h.b16 %v427
        %v716 = vunpack.c.l.b16 %v428
        %v717 = vunpack.c.h.b16 %v428
        %v718 = vunpack.c.l.b16 %v429
        %v719 = vunpack.c.h.b16 %v429
        %v720 = vunpack.c.l.b16 %v430
        %v721 = vunpack.c.h.b16 %v430
        %v722 = vunpack.c.l.b16 %v431
        %v723 = vunpack.c.h.b16 %v431
        %v724 = vunpack.c.l.b16 %v432
        %v725 = vunpack.c.h.b16 %v432
        %v726 = vunpack.c.l.b16 %v433
        %v727 = vunpack.c.h.b16 %v433
        %v728 = vunpack.c.l.b16 %v434
        %v729 = vunpack.c.h.b16 %v434
        %v730 = vunpack.c.l.b16 %v435
        %v731 = vunpack.c.h.b16 %v435
        %v732 = vunpack.c.l.b16 %v436
        %v733 = vunpack.c.h.b16 %v436
        %v734 = vunpack.c.l.b16 %v437
        %v735 = vunpack.c.h.b16 %v437
        %v736 = vunpack.c.l.b16 %v438
        %v737 = vunpack.c.h.b16 %v438
        %v738 = vunpack.c.l.b16 %v439
        %v739 = vunpack.c.h.b16 %v439
        %v740 = vunpack.c.l.b16 %v440
        %v741 = vunpack.c.h.b16 %v440
        %v742 = vunpack.c.l.b16 %v441
        %v743 = vunpack.c.h.b16 %v441
        %v744 = vunpack.c.l.b16 %v442
        %v745 = vunpack.c.h.b16 %v442
        %v746 = vunpack.c.l.b16 %v443
        %v747 = vunpack.c.h.b16 %v443
        %v748 = vunpack.c.l.b16 %v444
        %v749 = vunpack.c.h.b16 %v444
        %v750 = vunpack.c.l.b16 %v445
        %v751 = vunpack.c.h.b16 %v445
        %v752 = vunpack.c.l.b16 %v446
        %v753 = vunpack.c.h.b16 %v446
        %v754 = vunpack.c.l.b16 %v447
        %v755 = vunpack.c.h.b16 %v447
        %v756 = vunpack.c.l.b16 %v448
        %v757 = vunpack.c.h.b16 %v448
        %v758 = vunpack.c.l.b16 %v449
        %v759 = vunpack.c.h.b16 %v449
        %v760 = vunpack.c.l.b16 %v450
        %v761 = vunpack.c.h.b16 %v450
        %v762 = vunpack.c.l.b16 %v451
        %v763 = vunpack.c.h.b16 %v451
        %v764 = vunpack.c.l.b16 %v452
        %v765 = vunpack.c.h.b16 %v452
        %v766 = vunpack.c.l.b16 %v453
        %v767 = vunpack.c.h.b16 %v453
        %v768 = vunpack.c.l.b16 %v454
        %v769 = vunpack.c.h.b16 %v454
        %v770 = vunpack.c.l.b16 %v455
        %v771 = vunpack.c.h.b16 %v455
        %v772 = vunpack.c.l.b16 %v456
        %v773 = vunpack.c.h.b16 %v456
        %v774 = vunpack.c.l.b16 %v457
        %v775 = vunpack.c.h.b16 %v457
        %v776 = vunpack.c.l.b16 %v458
        %v777 = vunpack.c.h.b16 %v458
        %v778 = vunpack.c.l.b16 %v459
        %v779 = vunpack.c.h.b16 %v459
        %v780 = vunpack.c.l.b16 %v460
        %v781 = vunpack.c.h.b16 %v460
        %v782 = vunpack.c.l.b16 %v461
        %v783 = vunpack.c.h.b16 %v461
        %v784 = vunpack.c.l.b16 %v462
        %v785 = vunpack.c.h.b16 %v462
        %v786 = vunpack.c.l.b16 %v463
        %v787 = vunpack.c.h.b16 %v463
        %v788 = vunpack.c.l.b16 %v464
        %v789 = vunpack.c.h.b16 %v464
        %v790 = vunpack.c.l.b16 %v465
        %v791 = vunpack.c.h.b16 %v465
        %v792 = vunpack.c.l.b16 %v466
        %v793 = vunpack.c.h.b16 %v466
        %v794 = vunpack.c.l.b16 %v467
        %v795 = vunpack.c.h.b16 %v467
        %v796 = vunpack.c.l.b16 %v468
        %v797 = vunpack.c.h.b16 %v468
        %v798 = vunpack.c.l.b16 %v469
        %v799 = vunpack.c.h.b16 %v469
        %v800 = vunpack.c.l.b16 %v470
        %v801 = vunpack.c.h.b16 %v470
        %v802 = vunpack.c.l.b16 %v471
        %v803 = vunpack.c.h.b16 %v471
        %v804 = vunpack.c.l.b16 %v472
        %v805 = vunpack.c.h.b16 %v472
        %v806 = vunpack.c.l.b16 %v473
        %v807 = vunpack.c.h.b16 %v473
        %v808 = vunpack.c.l.b16 %v474
        %v809 = vunpack.c.h.b16 %v474
        %v810 = vunpack.c.l.b16 %v475
        %v811 = vunpack.c.h.b16 %v475
        %v812 = vunpack.c.l.b16 %v476
        %v813 = vunpack.c.h.b16 %v476
        %v814 = vunpack.c.l.b16 %v477
        %v815 = vunpack.c.h.b16 %v477
        %v816 = vunpack.c.l.b16 %v478
        %v817 = vunpack.c.h.b16 %v478
        %v818 = vunpack.c.l.b16 %v479
        %v819 = vunpack.c.h.b16 %v479
        %v820 = vunpack.c.l.b16 %v480
        %v821 = vunpack.c.h.b16 %v480
        %v822 = vunpack.c.l.b16 %v481
        %v823 = vunpack.c.h.b16 %v481
        %v824 = vunpack.c.l.b16 %v482
        %v825 = vunpack.c.h.b16 %v482
        %v826 = vunpack.c.l.b16 %v483
        %v827 = vunpack.c.h.b16 %v483
        %v828 = vunpack.c.l.b16 %v484
        %v829 = vunpack.c.h.b16 %v484
        %v830 = vunpack.c.l.b16 %v485
        %v831 = vunpack.c.h.b16 %v485
        %v832 = vunpack.c.l.b16 %v486
        %v833 = vunpack.c.h.b16 %v486
        %v834 = vunpack.c.l.b16 %v487
        %v835 = vunpack.c.h.b16 %v487
        %v836 = vunpack.c.l.b16 %v488
        %v837 = vunpack.c.h.b16 %v488
        %v838 = vunpack.c.l.b16 %v489
        %v839 = vunpack.c.h.b16 %v489
        %v840 = vunpack.c.l.b16 %v490
        %v841 = vunpack.c.h.b16 %v490
        %v842 = vunpack.c.l.b16 %v491
        %v843 = vunpack.c.h.b16 %v491
        %v844 = vunpack.c.l.b16 %v492
        %v845 = vunpack.c.h.b16 %v492
        %v846 = vunpack.c.l.b16 %v493
        %v847 = vunpack.c.h.b16 %v493
        %v848 = vunpack.c.l.b16 %v494
        %v849 = vunpack.c.h.b16 %v494
        %v850 = vunpack.c.l.b16 %v495
        %v851 = vunpack.c.h.b16 %v495
        %v852 = vunpack.c.l.b16 %v496
        %v853 = vunpack.c.h.b16 %v496
        %v854 = vunpack.c.l.b16 %v497
        %v855 = vunpack.c.h.b16 %v497
        %v856 = vunpack.c.l.b16 %v498
        %v857 = vunpack.c.h.b16 %v498
        %v858 = vunpack.c.l.b16 %v499
        %v859 = vunpack.c.h.b16 %v499
        %v860 = vunpack.c.l.b16 %v500
        %v861 = vunpack.c.h.b16 %v500
        %v862 = vunpack.c.l.b16 %v501
        %v863 = vunpack.c.h.b16 %v501
        %v864 = vunpack.c.l.b16 %v502
        %v865 = vunpack.c.h.b16 %v502
        %v866 = vunpack.c.l.b16 %v503
        %v867 = vunpack.c.h.b16 %v503
        %v868 = vunpack.c.l.b16 %v504
        %v869 = vunpack.c.h.b16 %v504
        %v870 = vunpack.c.l.b16 %v505
        %v871 = vunpack.c.h.b16 %v505
        %v872 = vunpack.c.l.b16 %v506
        %v873 = vunpack.c.h.b16 %v506
        %v874 = vunpack.c.l.b16 %v507
        %v875 = vunpack.c.h.b16 %v507
        %v876 = vunpack.c.l.b16 %v508
        %v877 = vunpack.c.h.b16 %v508
        %v878 = vunpack.c.l.b16 %v509
        %v879 = vunpack.c.h.b16 %v509
        %v880 = vunpack.c.l.b16 %v510
        %v881 = vunpack.c.h.b16 %v510
        %v882 = vunpack.c.l.b16 %v511
        %v883 = vunpack.c.h.b16 %v511
        %v884 = vunpack.c.l.b16 %v512
        %v885 = vunpack.c.h.b16 %v512
        %v886 = vunpack.c.l.b16 %v513
        %v887 = vunpack.c.h.b16 %v513
        %v888 = vunpack.c.l.b16 %v514
        %v889 = vunpack.c.h.b16 %v514
        %v890 = vunpack.c.l.b16 %v515
        %v891 = vunpack.c.h.b16 %v515
        %v892 = vunpack.c.l.b16 %v516
        %v893 = vunpack.c.h.b16 %v516
        %v894 = vunpack.c.l.b16 %v517
        %v895 = vunpack.c.h.b16 %v517
        %v896 = vunpack.c.l.b16 %v518
        %v897 = vunpack.c.h.b16 %v518
        %v898 = vunpack.c.l.b16 %v519
        %v899 = vunpack.c.h.b16 %v519
        %v900 = vunpack.c.l.b16 %v520
        %v901 = vunpack.c.h.b16 %v520
        %v902 = vunpack.c.l.b16 %v521
        %v903 = vunpack.c.h.b16 %v521
        %v904 = vunpack.c.l.b16 %v522
        %v905 = vunpack.c.h.b16 %v522
        %v906 = vunpack.c.l.b16 %v523
        %v907 = vunpack.c.h.b16 %v523
        %v908 = vunpack.c.l.b16 %v524
        %v909 = vunpack.c.h.b16 %v524
        %v910 = vunpack.c.l.b16 %v525
        %v911 = vunpack.c.h.b16 %v525
        %v912 = vunpack.c.l.b16 %v526
        %v913 = vunpack.c.h.b16 %v526
        %v914 = vunpack.c.l.b16 %v527
        %v915 = vunpack.c.h.b16 %v527
        %v916 = vunpack.c.l.b16 %v528
        %v917 = vunpack.c.h.b16 %v528
        %v918 = vunpack.c.l.b16 %v529
        %v919 = vunpack.c.h.b16 %v529
        %v920 = vunpack.c.l.b16 %v530
        %v921 = vunpack.c.h.b16 %v530
        %v922 = vunpack.c.l.b16 %v531
        %v923 = vunpack.c.h.b16 %v531
        %v924 = vunpack.c.l.b16 %v532
        %v925 = vunpack.c.h.b16 %v532
        %v926 = vunpack.c.l.b16 %v533
        %v927 = vunpack.c.h.b16 %v533
        %v928 = vpack.c.b16 %v680, %v672
        %v929 = vpack.c.b16 %v681, %v673
        %v930 = vpack.c.b16 %v682, %v674
        %v931 = vpack.c.b16 %v683, %v675
        %v932 = vpack.c.b16 %v684, %v676
        %v933 = vpack.c.b16 %v685, %v677
        %v934 = vpack.c.b16 %v686, %v678
        %v935 = vpack.c.b16 %v687, %v679
        %v936 = vpack.c.b16 %v696, %v688
        %v937 = vpack.c.b16 %v697, %v689
        %v938 = vpack.c.b16 %v698, %v690
        %v939 = vpack.c.b16 %v699, %v691
        %v940 = vpack.c.b16 %v700, %v692
        %v941 = vpack.c.b16 %v701, %v693
        %v942 = vpack.c.b16 %v702, %v694
        %v943 = vpack.c.b16 %v703, %v695
        %v944 = vpack.c.b16 %v712, %v704
        %v945 = vpack.c.b16 %v713, %v705
        %v946 = vpack.c.b16 %v714, %v706
        %v947 = vpack.c.b16 %v715, %v707
        %v948 = vpack.c.b16 %v716, %v708
        %v949 = vpack.c.b16 %v717, %v709
        %v950 = vpack.c.b16 %v718, %v710
        %v951 = vpack.c.b16 %v719, %v711
        %v952 = vpack.c.b16 %v728, %v720
        %v953 = vpack.c.b16 %v729, %v721
        %v954 = vpack.c.b16 %v730, %v722
        %v955 = vpack.c.b16 %v731, %v723
        %v956 = vpack.c.b16 %v732, %v724
        %v957 = vpack.c.b16 %v733, %v725
        %v958 = vpack.c.b16 %v734, %v726
        %v959 = vpack.c.b16 %v735, %v727
        %v960 = vpack.c.b16 %v744, %v736
        %v961 = vpack.c.b16 %v745, %v737
        %v962 = vpack.c.b16 %v746, %v738
        %v963 = vpack.c.b16 %v747, %v739
        %v964 = vpack.c.b16 %v748, %v740
        %v965 = vpack.c.b16 %v749, %v741
        %v966 = vpack.c.b16 %v750, %v742
        %v967 = vpack.c.b16 %v751, %v743
        %v968 = vpack.c.b16 %v760, %v752
        %v969 = vpack.c.b16 %v761, %v753
        %v970 = vpack.c.b16 %v762, %v754
        %v971 = vpack.c.b16 %v763, %v755
        %v972 = vpack.c.b16 %v764, %v756
        %v973 = vpack.c.b16 %v765, %v757
        %v974 = vpack.c.b16 %v766, %v758
        %v975 = vpack.c.b16 %v767, %v759
        %v976 = vpack.c.b16 %v776, %v768
        %v977 = vpack.c.b16 %v777, %v769
        %v978 = vpack.c.b16 %v778, %v770
        %v979 = vpack.c.b16 %v779, %v771
        %v980 = vpack.c.b16 %v780, %v772
        %v981 = vpack.c.b16 %v781, %v773
        %v982 = vpack.c.b16 %v782, %v774
        %v983 = vpack.c.b16 %v783, %v775
        %v984 = vpack.c.b16 %v792, %v784
        %v985 = vpack.c.b16 %v793, %v785
        %v986 = vpack.c.b16 %v794, %v786
        %v987 = vpack.c.b16 %v795, %v787
        %v988 = vpack.c.b16 %v796, %v788
        %v989 = vpack.c.b16 %v797, %v789
        %v990 = vpack.c.b16 %v798, %v790
        %v991 = vpack.c.b16 %v799, %v791
        %v992 = vpack.c.b16 %v808, %v800
        %v993 = vpack.c.b16 %v809, %v801
        %v994 = vpack.c.b16 %v810, %v802
        %v995 = vpack.c.b16 %v811, %v803
        %v996 = vpack.c.b16 %v812, %v804
        %v997 = vpack.c.b16 %v813, %v805
        %v998 = vpack.c.b16 %v814, %v806
        %v999 = vpack.c.b16 %v815, %v807
        %v1000 = vpack.c.b16 %v824, %v816
        %v1001 = vpack.c.b16 %v825, %v817
        %v1002 = vpack.c.b16 %v826, %v818
        %v1003 = vpack.c.b16 %v827, %v819
        %v1004 = vpack.c.b16 %v828, %v820
        %v1005 = vpack.c.b16 %v829, %v821
        %v1006 = vpack.c.b16 %v830, %v822
        %v1007 = vpack.c.b16 %v831, %v823
        %v1008 = vpack.c.b16 %v840, %v832
        %v1009 = vpack.c.b16 %v841, %v833
        %v1010 = vpack.c.b16 %v842, %v834
        %v1011 = vpack.c.b16 %v843, %v835
        %v1012 = vpack.c.b16 %v844, %v836
        %v1013 = vpack.c.b16 %v845, %v837
        %v1014 = vpack.c.b16 %v846, %v838
        %v1015 = vpack.c.b16 %v847, %v839
        %v1016 = vpack.c.b16 %v856, %v848
        %v1017 = vpack.c.b16 %v857, %v849
        %v1018 = vpack.c.b16 %v858, %v850
        %v1019 = vpack.c.b16 %v859, %v851
        %v1020 = vpack.c.b16 %v860, %v852
        %v1021 = vpack.c.b16 %v861, %v853
        %v1022 = vpack.c.b16 %v862, %v854
        %v1023 = vpack.c.b16 %v863, %v855
        %v1024 = vpack.c.b16 %v872, %v864
        %v1025 = vpack.c.b16 %v873, %v865
        %v1026 = vpack.c.b16 %v874, %v866
        %v1027 = vpack.c.b16 %v875, %v867
        %v1028 = vpack.c.b16 %v876, %v868
        %v1029 = vpack.c.b16 %v877, %v869
        %v1030 = vpack.c.b16 %v878, %v870
        %v1031 = vpack.c.b16 %v879, %v871
        %v1032 = vpack.c.b16 %v888, %v880
        %v1033 = vpack.c.b16 %v889, %v881
        %v1034 = vpack.c.b16 %v890, %v882
        %v1035 = vpack.c.b16 %v891, %v883
        %v1036 = vpack.c.b16 %v892, %v884
        %v1037 = vpack.c.b16 %v893, %v885
        %v1038 = vpack.c.b16 %v894, %v886
        %v1039 = vpack.c.b16 %v895, %v887
        %v1040 = vpack.c.b16 %v904, %v896
        %v1041 = vpack.c.b16 %v905, %v897
        %v1042 = vpack.c.b16 %v906, %v898
        %v1043 = vpack.c.b16 %v907, %v899
        %v1044 = vpack.c.b16 %v908, %v900
        %v1045 = vpack.c.b16 %v909, %v901
        %v1046 = vpack.c.b16 %v910, %v902
        %v1047 = vpack.c.b16 %v911, %v903
        %v1048 = vpack.c.b16 %v920, %v912
        %v1049 = vpack.c.b16 %v921, %v913
        %v1050 = vpack.c.b16 %v922, %v914
        %v1051 = vpack.c.b16 %v923, %v915
        %v1052 = vpack.c.b16 %v924, %v916
        %v1053 = vpack.c.b16 %v925, %v917
        %v1054 = vpack.c.b16 %v926, %v918
        %v1055 = vpack.c.b16 %v927, %v919
        %1184 = vmatpush.bf16.msra.mxu0 %v984
        %1185 = vmatpush.bf16.msra.mxu0 %v976
        %1186 = vmatpush.bf16.msra.mxu0 %v968
        %1187 = vmatpush.bf16.msra.mxu0 %v960
        %1188 = vmatpush.bf16.msra.mxu0 %v952
        %1189 = vmatpush.bf16.msra.mxu0 %v944
        %1190 = vmatpush.bf16.msra.mxu0 %v936
        %1191 = vmatpush.bf16.msra.mxu0 %v928
        %1192 = vmatmul.bf16.gmra.mxu0 %v540
        %v1193 = vpop.f32.mrf.mxu0
        %v1194 = vadd.f32 0.0, %v1193
        %v1195 = vpop.f32.mrf.mxu0
        %v1196 = vadd.f32 0.0, %v1195
        %1197 = vdwg.mxu0
        %1198 = vmatpush.bf16.msra.mxu0 %v1048
        %1199 = vmatpush.bf16.msra.mxu0 %v1040
        %1200 = vmatpush.bf16.msra.mxu0 %v1032
        %1201 = vmatpush.bf16.msra.mxu0 %v1024
        %1202 = vmatpush.bf16.msra.mxu0 %v1016
        %1203 = vmatpush.bf16.msra.mxu0 %v1008
        %1204 = vmatpush.bf16.msra.mxu0 %v1000
        %1205 = vmatpush.bf16.msra.mxu0 %v992
        %1206 = vmatmul.bf16.gmra.mxu0 %v541
        %v1207 = vpop.f32.mrf.mxu0
        %v1208 = vadd.f32 %v1194, %v1207
        %v1209 = vpop.f32.mrf.mxu0
        %v1210 = vadd.f32 %v1196, %v1209
        %1211 = vdwg.mxu0
        %1212 = vmatpush.bf16.msra.mxu0 %v985
        %1213 = vmatpush.bf16.msra.mxu0 %v977
        %1214 = vmatpush.bf16.msra.mxu0 %v969
        %1215 = vmatpush.bf16.msra.mxu0 %v961
        %1216 = vmatpush.bf16.msra.mxu0 %v953
        %1217 = vmatpush.bf16.msra.mxu0 %v945
        %1218 = vmatpush.bf16.msra.mxu0 %v937
        %1219 = vmatpush.bf16.msra.mxu0 %v929
        %1220 = vmatmul.bf16.gmra.mxu0 %v540
        %v1221 = vpop.f32.mrf.mxu0
        %v1222 = vadd.f32 0.0, %v1221
        %v1223 = vpop.f32.mrf.mxu0
        %v1224 = vadd.f32 0.0, %v1223
        %1225 = vdwg.mxu0
        %1226 = vmatpush.bf16.msra.mxu0 %v1049
        %1227 = vmatpush.bf16.msra.mxu0 %v1041
        %1228 = vmatpush.bf16.msra.mxu0 %v1033
        %1229 = vmatpush.bf16.msra.mxu0 %v1025
        %1230 = vmatpush.bf16.msra.mxu0 %v1017
        %1231 = vmatpush.bf16.msra.mxu0 %v1009
        %1232 = vmatpush.bf16.msra.mxu0 %v1001
        %1233 = vmatpush.bf16.msra.mxu0 %v993
        %1234 = vmatmul.bf16.gmra.mxu0 %v541
        %v1235 = vpop.f32.mrf.mxu0
        %v1236 = vadd.f32 %v1222, %v1235
        %v1237 = vpop.f32.mrf.mxu0
        %v1238 = vadd.f32 %v1224, %v1237
        %1239 = vdwg.mxu0
        %1240 = vmatpush.bf16.msra.mxu0 %v986
        %1241 = vmatpush.bf16.msra.mxu0 %v978
        %1242 = vmatpush.bf16.msra.mxu0 %v970
        %1243 = vmatpush.bf16.msra.mxu0 %v962
        %1244 = vmatpush.bf16.msra.mxu0 %v954
        %1245 = vmatpush.bf16.msra.mxu0 %v946
        %1246 = vmatpush.bf16.msra.mxu0 %v938
        %1247 = vmatpush.bf16.msra.mxu0 %v930
        %1248 = vmatmul.bf16.gmra.mxu0 %v540
        %v1249 = vpop.f32.mrf.mxu0
        %v1250 = vadd.f32 0.0, %v1249
        %v1251 = vpop.f32.mrf.mxu0
        %v1252 = vadd.f32 0.0, %v1251
        %1253 = vdwg.mxu0
        %1254 = vmatpush.bf16.msra.mxu0 %v1050
        %1255 = vmatpush.bf16.msra.mxu0 %v1042
        %1256 = vmatpush.bf16.msra.mxu0 %v1034
        %1257 = vmatpush.bf16.msra.mxu0 %v1026
        %1258 = vmatpush.bf16.msra.mxu0 %v1018
        %1259 = vmatpush.bf16.msra.mxu0 %v1010
        %1260 = vmatpush.bf16.msra.mxu0 %v1002
        %1261 = vmatpush.bf16.msra.mxu0 %v994
        %1262 = vmatmul.bf16.gmra.mxu0 %v541
        %v1263 = vpop.f32.mrf.mxu0
        %v1264 = vadd.f32 %v1250, %v1263
        %v1265 = vpop.f32.mrf.mxu0
        %v1266 = vadd.f32 %v1252, %v1265
        %1267 = vdwg.mxu0
        %1268 = vmatpush.bf16.msra.mxu0 %v987
        %1269 = vmatpush.bf16.msra.mxu0 %v979
        %1270 = vmatpush.bf16.msra.mxu0 %v971
        %1271 = vmatpush.bf16.msra.mxu0 %v963
        %1272 = vmatpush.bf16.msra.mxu0 %v955
        %1273 = vmatpush.bf16.msra.mxu0 %v947
        %1274 = vmatpush.bf16.msra.mxu0 %v939
        %1275 = vmatpush.bf16.msra.mxu0 %v931
        %1276 = vmatmul.bf16.gmra.mxu0 %v540
        %v1277 = vpop.f32.mrf.mxu0
        %v1278 = vadd.f32 0.0, %v1277
        %v1279 = vpop.f32.mrf.mxu0
        %v1280 = vadd.f32 0.0, %v1279
        %1281 = vdwg.mxu0
        %1282 = vmatpush.bf16.msra.mxu0 %v1051
        %1283 = vmatpush.bf16.msra.mxu0 %v1043
        %1284 = vmatpush.bf16.msra.mxu0 %v1035
        %1285 = vmatpush.bf16.msra.mxu0 %v1027
        %1286 = vmatpush.bf16.msra.mxu0 %v1019
        %1287 = vmatpush.bf16.msra.mxu0 %v1011
        %1288 = vmatpush.bf16.msra.mxu0 %v1003
        %1289 = vmatpush.bf16.msra.mxu0 %v995
        %1290 = vmatmul.bf16.gmra.mxu0 %v541
        %v1291 = vpop.f32.mrf.mxu0
        %v1292 = vadd.f32 %v1278, %v1291
        %v1293 = vpop.f32.mrf.mxu0
        %v1294 = vadd.f32 %v1280, %v1293
        %1295 = vdwg.mxu0
        %1296 = vmatpush.bf16.msra.mxu0 %v988
        %1297 = vmatpush.bf16.msra.mxu0 %v980
        %1298 = vmatpush.bf16.msra.mxu0 %v972
        %1299 = vmatpush.bf16.msra.mxu0 %v964
        %1300 = vmatpush.bf16.msra.mxu0 %v956
        %1301 = vmatpush.bf16.msra.mxu0 %v948
        %1302 = vmatpush.bf16.msra.mxu0 %v940
        %1303 = vmatpush.bf16.msra.mxu0 %v932
        %1304 = vmatmul.bf16.gmra.mxu0 %v540
        %v1305 = vpop.f32.mrf.mxu0
        %v1306 = vadd.f32 0.0, %v1305
        %v1307 = vpop.f32.mrf.mxu0
        %v1308 = vadd.f32 0.0, %v1307
        %1309 = vdwg.mxu0
        %1310 = vmatpush.bf16.msra.mxu0 %v1052
        %1311 = vmatpush.bf16.msra.mxu0 %v1044
        %1312 = vmatpush.bf16.msra.mxu0 %v1036
        %1313 = vmatpush.bf16.msra.mxu0 %v1028
        %1314 = vmatpush.bf16.msra.mxu0 %v1020
        %1315 = vmatpush.bf16.msra.mxu0 %v1012
        %1316 = vmatpush.bf16.msra.mxu0 %v1004
        %1317 = vmatpush.bf16.msra.mxu0 %v996
        %1318 = vmatmul.bf16.gmra.mxu0 %v541
        %v1319 = vpop.f32.mrf.mxu0
        %v1320 = vadd.f32 %v1306, %v1319
        %v1321 = vpop.f32.mrf.mxu0
        %v1322 = vadd.f32 %v1308, %v1321
        %1323 = vdwg.mxu0
        %1324 = vmatpush.bf16.msra.mxu0 %v989
        %1325 = vmatpush.bf16.msra.mxu0 %v981
        %1326 = vmatpush.bf16.msra.mxu0 %v973
        %1327 = vmatpush.bf16.msra.mxu0 %v965
        %1328 = vmatpush.bf16.msra.mxu0 %v957
        %1329 = vmatpush.bf16.msra.mxu0 %v949
        %1330 = vmatpush.bf16.msra.mxu0 %v941
        %1331 = vmatpush.bf16.msra.mxu0 %v933
        %1332 = vmatmul.bf16.gmra.mxu0 %v540
        %v1333 = vpop.f32.mrf.mxu0
        %v1334 = vadd.f32 0.0, %v1333
        %v1335 = vpop.f32.mrf.mxu0
        %v1336 = vadd.f32 0.0, %v1335
        %1337 = vdwg.mxu0
        %1338 = vmatpush.bf16.msra.mxu0 %v1053
        %1339 = vmatpush.bf16.msra.mxu0 %v1045
        %1340 = vmatpush.bf16.msra.mxu0 %v1037
        %1341 = vmatpush.bf16.msra.mxu0 %v1029
        %1342 = vmatpush.bf16.msra.mxu0 %v1021
        %1343 = vmatpush.bf16.msra.mxu0 %v1013
        %1344 = vmatpush.bf16.msra.mxu0 %v1005
        %1345 = vmatpush.bf16.msra.mxu0 %v997
        %1346 = vmatmul.bf16.gmra.mxu0 %v541
        %v1347 = vpop.f32.mrf.mxu0
        %v1348 = vadd.f32 %v1334, %v1347
        %v1349 = vpop.f32.mrf.mxu0
        %v1350 = vadd.f32 %v1336, %v1349
        %1351 = vdwg.mxu0
        %1352 = vmatpush.bf16.msra.mxu0 %v990
        %1353 = vmatpush.bf16.msra.mxu0 %v982
        %1354 = vmatpush.bf16.msra.mxu0 %v974
        %1355 = vmatpush.bf16.msra.mxu0 %v966
        %1356 = vmatpush.bf16.msra.mxu0 %v958
        %1357 = vmatpush.bf16.msra.mxu0 %v950
        %1358 = vmatpush.bf16.msra.mxu0 %v942
        %1359 = vmatpush.bf16.msra.mxu0 %v934
        %1360 = vmatmul.bf16.gmra.mxu0 %v540
        %v1361 = vpop.f32.mrf.mxu0
        %v1362 = vadd.f32 0.0, %v1361
        %v1363 = vpop.f32.mrf.mxu0
        %v1364 = vadd.f32 0.0, %v1363
        %1365 = vdwg.mxu0
        %1366 = vmatpush.bf16.msra.mxu0 %v1054
        %1367 = vmatpush.bf16.msra.mxu0 %v1046
        %1368 = vmatpush.bf16.msra.mxu0 %v1038
        %1369 = vmatpush.bf16.msra.mxu0 %v1030
        %1370 = vmatpush.bf16.msra.mxu0 %v1022
        %1371 = vmatpush.bf16.msra.mxu0 %v1014
        %1372 = vmatpush.bf16.msra.mxu0 %v1006
        %1373 = vmatpush.bf16.msra.mxu0 %v998
        %1374 = vmatmul.bf16.gmra.mxu0 %v541
        %v1375 = vpop.f32.mrf.mxu0
        %v1376 = vadd.f32 %v1362, %v1375
        %v1377 = vpop.f32.mrf.mxu0
        %v1378 = vadd.f32 %v1364, %v1377
        %1379 = vdwg.mxu0
        %1380 = vmatpush.bf16.msra.mxu0 %v991
        %1381 = vmatpush.bf16.msra.mxu0 %v983
        %1382 = vmatpush.bf16.msra.mxu0 %v975
        %1383 = vmatpush.bf16.msra.mxu0 %v967
        %1384 = vmatpush.bf16.msra.mxu0 %v959
        %1385 = vmatpush.bf16.msra.mxu0 %v951
        %1386 = vmatpush.bf16.msra.mxu0 %v943
        %1387 = vmatpush.bf16.msra.mxu0 %v935
        %1388 = vmatmul.bf16.gmra.mxu0 %v540
        %v1389 = vpop.f32.mrf.mxu0
        %v1390 = vadd.f32 0.0, %v1389
        %v1391 = vpop.f32.mrf.mxu0
        %v1392 = vadd.f32 0.0, %v1391
        %1393 = vdwg.mxu0
        %1394 = vmatpush.bf16.msra.mxu0 %v1055
        %1395 = vmatpush.bf16.msra.mxu0 %v1047
        %1396 = vmatpush.bf16.msra.mxu0 %v1039
        %1397 = vmatpush.bf16.msra.mxu0 %v1031
        %1398 = vmatpush.bf16.msra.mxu0 %v1023
        %1399 = vmatpush.bf16.msra.mxu0 %v1015
        %1400 = vmatpush.bf16.msra.mxu0 %v1007
        %1401 = vmatpush.bf16.msra.mxu0 %v999
        %1402 = vmatmul.bf16.gmra.mxu0 %v541
        %v1403 = vpop.f32.mrf.mxu0
        %v1404 = vadd.f32 %v1390, %v1403
        %v1405 = vpop.f32.mrf.mxu0
        %v1406 = vadd.f32 %v1392, %v1405
        %1407 = vdwg.mxu0
        %v1408 = vld [vmem:[%s320] sm:$0xff]
        %v1409 = vld [vmem:[%s320 + $0x8] sm:$0xff]
        %v1410 = vld [vmem:[%s320 + $0x10] sm:$0xff]
        %v1411 = vld [vmem:[%s320 + $0x18] sm:$0xff]
        %v1412 = vld [vmem:[%s320 + $0x20] sm:$0xff]
        %v1413 = vld [vmem:[%s320 + $0x28] sm:$0xff]
        %v1414 = vld [vmem:[%s320 + $0x30] sm:$0xff]
        %v1415 = vld [vmem:[%s320 + $0x38] sm:$0xff]
        %v1416 = vld [vmem:[%s320 + $0x40] sm:$0xff]
        %v1417 = vld [vmem:[%s320 + $0x48] sm:$0xff]
        %v1418 = vld [vmem:[%s320 + $0x50] sm:$0xff]
        %v1419 = vld [vmem:[%s320 + $0x58] sm:$0xff]
        %v1420 = vld [vmem:[%s320 + $0x60] sm:$0xff]
        %v1421 = vld [vmem:[%s320 + $0x68] sm:$0xff]
        %v1422 = vld [vmem:[%s320 + $0x70] sm:$0xff]
        %v1423 = vld [vmem:[%s320 + $0x78] sm:$0xff]
        %v1424 = vld [vmem:[%s320 + $0x80] sm:$0xff]
        %v1425 = vld [vmem:[%s320 + $0x88] sm:$0xff]
        %v1426 = vld [vmem:[%s320 + $0x90] sm:$0xff]
        %v1427 = vld [vmem:[%s320 + $0x98] sm:$0xff]
        %v1428 = vld [vmem:[%s320 + $0xa0] sm:$0xff]
        %v1429 = vld [vmem:[%s320 + $0xa8] sm:$0xff]
        %v1430 = vld [vmem:[%s320 + $0xb0] sm:$0xff]
        %v1431 = vld [vmem:[%s320 + $0xb8] sm:$0xff]
        %v1432 = vld [vmem:[%s320 + $0xc0] sm:$0xff]
        %v1433 = vld [vmem:[%s320 + $0xc8] sm:$0xff]
        %v1434 = vld [vmem:[%s320 + $0xd0] sm:$0xff]
        %v1435 = vld [vmem:[%s320 + $0xd8] sm:$0xff]
        %v1436 = vld [vmem:[%s320 + $0xe0] sm:$0xff]
        %v1437 = vld [vmem:[%s320 + $0xe8] sm:$0xff]
        %v1438 = vld [vmem:[%s320 + $0xf0] sm:$0xff]
        %v1439 = vld [vmem:[%s320 + $0xf8] sm:$0xff]
        %v1440 = vld [vmem:[%s320 + $0x100] sm:$0xff]
        %v1441 = vld [vmem:[%s320 + $0x108] sm:$0xff]
        %v1442 = vld [vmem:[%s320 + $0x110] sm:$0xff]
        %v1443 = vld [vmem:[%s320 + $0x118] sm:$0xff]
        %v1444 = vld [vmem:[%s320 + $0x120] sm:$0xff]
        %v1445 = vld [vmem:[%s320 + $0x128] sm:$0xff]
        %v1446 = vld [vmem:[%s320 + $0x130] sm:$0xff]
        %v1447 = vld [vmem:[%s320 + $0x138] sm:$0xff]
        %v1448 = vld [vmem:[%s320 + $0x140] sm:$0xff]
        %v1449 = vld [vmem:[%s320 + $0x148] sm:$0xff]
        %v1450 = vld [vmem:[%s320 + $0x150] sm:$0xff]
        %v1451 = vld [vmem:[%s320 + $0x158] sm:$0xff]
        %v1452 = vld [vmem:[%s320 + $0x160] sm:$0xff]
        %v1453 = vld [vmem:[%s320 + $0x168] sm:$0xff]
        %v1454 = vld [vmem:[%s320 + $0x170] sm:$0xff]
        %v1455 = vld [vmem:[%s320 + $0x178] sm:$0xff]
        %v1456 = vld [vmem:[%s320 + $0x180] sm:$0xff]
        %v1457 = vld [vmem:[%s320 + $0x188] sm:$0xff]
        %v1458 = vld [vmem:[%s320 + $0x190] sm:$0xff]
        %v1459 = vld [vmem:[%s320 + $0x198] sm:$0xff]
        %v1460 = vld [vmem:[%s320 + $0x1a0] sm:$0xff]
        %v1461 = vld [vmem:[%s320 + $0x1a8] sm:$0xff]
        %v1462 = vld [vmem:[%s320 + $0x1b0] sm:$0xff]
        %v1463 = vld [vmem:[%s320 + $0x1b8] sm:$0xff]
        %v1464 = vld [vmem:[%s320 + $0x1c0] sm:$0xff]
        %v1465 = vld [vmem:[%s320 + $0x1c8] sm:$0xff]
        %v1466 = vld [vmem:[%s320 + $0x1d0] sm:$0xff]
        %v1467 = vld [vmem:[%s320 + $0x1d8] sm:$0xff]
        %v1468 = vld [vmem:[%s320 + $0x1e0] sm:$0xff]
        %v1469 = vld [vmem:[%s320 + $0x1e8] sm:$0xff]
        %v1470 = vld [vmem:[%s320 + $0x1f0] sm:$0xff]
        %v1471 = vld [vmem:[%s320 + $0x1f8] sm:$0xff]
        %v1472 = vld [vmem:[%s320 + $0x200] sm:$0xff]
        %v1473 = vld [vmem:[%s320 + $0x208] sm:$0xff]
        %v1474 = vld [vmem:[%s320 + $0x210] sm:$0xff]
        %v1475 = vld [vmem:[%s320 + $0x218] sm:$0xff]
        %v1476 = vld [vmem:[%s320 + $0x220] sm:$0xff]
        %v1477 = vld [vmem:[%s320 + $0x228] sm:$0xff]
        %v1478 = vld [vmem:[%s320 + $0x230] sm:$0xff]
        %v1479 = vld [vmem:[%s320 + $0x238] sm:$0xff]
        %v1480 = vld [vmem:[%s320 + $0x240] sm:$0xff]
        %v1481 = vld [vmem:[%s320 + $0x248] sm:$0xff]
        %v1482 = vld [vmem:[%s320 + $0x250] sm:$0xff]
        %v1483 = vld [vmem:[%s320 + $0x258] sm:$0xff]
        %v1484 = vld [vmem:[%s320 + $0x260] sm:$0xff]
        %v1485 = vld [vmem:[%s320 + $0x268] sm:$0xff]
        %v1486 = vld [vmem:[%s320 + $0x270] sm:$0xff]
        %v1487 = vld [vmem:[%s320 + $0x278] sm:$0xff]
        %v1488 = vld [vmem:[%s320 + $0x280] sm:$0xff]
        %v1489 = vld [vmem:[%s320 + $0x288] sm:$0xff]
        %v1490 = vld [vmem:[%s320 + $0x290] sm:$0xff]
        %v1491 = vld [vmem:[%s320 + $0x298] sm:$0xff]
        %v1492 = vld [vmem:[%s320 + $0x2a0] sm:$0xff]
        %v1493 = vld [vmem:[%s320 + $0x2a8] sm:$0xff]
        %v1494 = vld [vmem:[%s320 + $0x2b0] sm:$0xff]
        %v1495 = vld [vmem:[%s320 + $0x2b8] sm:$0xff]
        %v1496 = vld [vmem:[%s320 + $0x2c0] sm:$0xff]
        %v1497 = vld [vmem:[%s320 + $0x2c8] sm:$0xff]
        %v1498 = vld [vmem:[%s320 + $0x2d0] sm:$0xff]
        %v1499 = vld [vmem:[%s320 + $0x2d8] sm:$0xff]
        %v1500 = vld [vmem:[%s320 + $0x2e0] sm:$0xff]
        %v1501 = vld [vmem:[%s320 + $0x2e8] sm:$0xff]
        %v1502 = vld [vmem:[%s320 + $0x2f0] sm:$0xff]
        %v1503 = vld [vmem:[%s320 + $0x2f8] sm:$0xff]
        %v1504 = vld [vmem:[%s320 + $0x300] sm:$0xff]
        %v1505 = vld [vmem:[%s320 + $0x308] sm:$0xff]
        %v1506 = vld [vmem:[%s320 + $0x310] sm:$0xff]
        %v1507 = vld [vmem:[%s320 + $0x318] sm:$0xff]
        %v1508 = vld [vmem:[%s320 + $0x320] sm:$0xff]
        %v1509 = vld [vmem:[%s320 + $0x328] sm:$0xff]
        %v1510 = vld [vmem:[%s320 + $0x330] sm:$0xff]
        %v1511 = vld [vmem:[%s320 + $0x338] sm:$0xff]
        %v1512 = vld [vmem:[%s320 + $0x340] sm:$0xff]
        %v1513 = vld [vmem:[%s320 + $0x348] sm:$0xff]
        %v1514 = vld [vmem:[%s320 + $0x350] sm:$0xff]
        %v1515 = vld [vmem:[%s320 + $0x358] sm:$0xff]
        %v1516 = vld [vmem:[%s320 + $0x360] sm:$0xff]
        %v1517 = vld [vmem:[%s320 + $0x368] sm:$0xff]
        %v1518 = vld [vmem:[%s320 + $0x370] sm:$0xff]
        %v1519 = vld [vmem:[%s320 + $0x378] sm:$0xff]
        %v1520 = vld [vmem:[%s320 + $0x380] sm:$0xff]
        %v1521 = vld [vmem:[%s320 + $0x388] sm:$0xff]
        %v1522 = vld [vmem:[%s320 + $0x390] sm:$0xff]
        %v1523 = vld [vmem:[%s320 + $0x398] sm:$0xff]
        %v1524 = vld [vmem:[%s320 + $0x3a0] sm:$0xff]
        %v1525 = vld [vmem:[%s320 + $0x3a8] sm:$0xff]
        %v1526 = vld [vmem:[%s320 + $0x3b0] sm:$0xff]
        %v1527 = vld [vmem:[%s320 + $0x3b8] sm:$0xff]
        %v1528 = vld [vmem:[%s320 + $0x3c0] sm:$0xff]
        %v1529 = vld [vmem:[%s320 + $0x3c8] sm:$0xff]
        %v1530 = vld [vmem:[%s320 + $0x3d0] sm:$0xff]
        %v1531 = vld [vmem:[%s320 + $0x3d8] sm:$0xff]
        %v1532 = vld [vmem:[%s320 + $0x3e0] sm:$0xff]
        %v1533 = vld [vmem:[%s320 + $0x3e8] sm:$0xff]
        %v1534 = vld [vmem:[%s320 + $0x3f0] sm:$0xff]
        %v1535 = vld [vmem:[%s320 + $0x3f8] sm:$0xff]
        %v1664 = vunpack.c.l.b16 %v1408
        %v1665 = vunpack.c.h.b16 %v1408
        %v1666 = vunpack.c.l.b16 %v1409
        %v1667 = vunpack.c.h.b16 %v1409
        %v1668 = vunpack.c.l.b16 %v1410
        %v1669 = vunpack.c.h.b16 %v1410
        %v1670 = vunpack.c.l.b16 %v1411
        %v1671 = vunpack.c.h.b16 %v1411
        %v1672 = vunpack.c.l.b16 %v1412
        %v1673 = vunpack.c.h.b16 %v1412
        %v1674 = vunpack.c.l.b16 %v1413
        %v1675 = vunpack.c.h.b16 %v1413
        %v1676 = vunpack.c.l.b16 %v1414
        %v1677 = vunpack.c.h.b16 %v1414
        %v1678 = vunpack.c.l.b16 %v1415
        %v1679 = vunpack.c.h.b16 %v1415
        %v1680 = vunpack.c.l.b16 %v1416
        %v1681 = vunpack.c.h.b16 %v1416
        %v1682 = vunpack.c.l.b16 %v1417
        %v1683 = vunpack.c.h.b16 %v1417
        %v1684 = vunpack.c.l.b16 %v1418
        %v1685 = vunpack.c.h.b16 %v1418
        %v1686 = vunpack.c.l.b16 %v1419
        %v1687 = vunpack.c.h.b16 %v1419
        %v1688 = vunpack.c.l.b16 %v1420
        %v1689 = vunpack.c.h.b16 %v1420
        %v1690 = vunpack.c.l.b16 %v1421
        %v1691 = vunpack.c.h.b16 %v1421
        %v1692 = vunpack.c.l.b16 %v1422
        %v1693 = vunpack.c.h.b16 %v1422
        %v1694 = vunpack.c.l.b16 %v1423
        %v1695 = vunpack.c.h.b16 %v1423
        %v1696 = vunpack.c.l.b16 %v1424
        %v1697 = vunpack.c.h.b16 %v1424
        %v1698 = vunpack.c.l.b16 %v1425
        %v1699 = vunpack.c.h.b16 %v1425
        %v1700 = vunpack.c.l.b16 %v1426
        %v1701 = vunpack.c.h.b16 %v1426
        %v1702 = vunpack.c.l.b16 %v1427
        %v1703 = vunpack.c.h.b16 %v1427
        %v1704 = vunpack.c.l.b16 %v1428
        %v1705 = vunpack.c.h.b16 %v1428
        %v1706 = vunpack.c.l.b16 %v1429
        %v1707 = vunpack.c.h.b16 %v1429
        %v1708 = vunpack.c.l.b16 %v1430
        %v1709 = vunpack.c.h.b16 %v1430
        %v1710 = vunpack.c.l.b16 %v1431
        %v1711 = vunpack.c.h.b16 %v1431
        %v1712 = vunpack.c.l.b16 %v1432
        %v1713 = vunpack.c.h.b16 %v1432
        %v1714 = vunpack.c.l.b16 %v1433
        %v1715 = vunpack.c.h.b16 %v1433
        %v1716 = vunpack.c.l.b16 %v1434
        %v1717 = vunpack.c.h.b16 %v1434
        %v1718 = vunpack.c.l.b16 %v1435
        %v1719 = vunpack.c.h.b16 %v1435
        %v1720 = vunpack.c.l.b16 %v1436
        %v1721 = vunpack.c.h.b16 %v1436
        %v1722 = vunpack.c.l.b16 %v1437
        %v1723 = vunpack.c.h.b16 %v1437
        %v1724 = vunpack.c.l.b16 %v1438
        %v1725 = vunpack.c.h.b16 %v1438
        %v1726 = vunpack.c.l.b16 %v1439
        %v1727 = vunpack.c.h.b16 %v1439
        %v1728 = vunpack.c.l.b16 %v1440
        %v1729 = vunpack.c.h.b16 %v1440
        %v1730 = vunpack.c.l.b16 %v1441
        %v1731 = vunpack.c.h.b16 %v1441
        %v1732 = vunpack.c.l.b16 %v1442
        %v1733 = vunpack.c.h.b16 %v1442
        %v1734 = vunpack.c.l.b16 %v1443
        %v1735 = vunpack.c.h.b16 %v1443
        %v1736 = vunpack.c.l.b16 %v1444
        %v1737 = vunpack.c.h.b16 %v1444
        %v1738 = vunpack.c.l.b16 %v1445
        %v1739 = vunpack.c.h.b16 %v1445
        %v1740 = vunpack.c.l.b16 %v1446
        %v1741 = vunpack.c.h.b16 %v1446
        %v1742 = vunpack.c.l.b16 %v1447
        %v1743 = vunpack.c.h.b16 %v1447
        %v1744 = vunpack.c.l.b16 %v1448
        %v1745 = vunpack.c.h.b16 %v1448
        %v1746 = vunpack.c.l.b16 %v1449
        %v1747 = vunpack.c.h.b16 %v1449
        %v1748 = vunpack.c.l.b16 %v1450
        %v1749 = vunpack.c.h.b16 %v1450
        %v1750 = vunpack.c.l.b16 %v1451
        %v1751 = vunpack.c.h.b16 %v1451
        %v1752 = vunpack.c.l.b16 %v1452
        %v1753 = vunpack.c.h.b16 %v1452
        %v1754 = vunpack.c.l.b16 %v1453
        %v1755 = vunpack.c.h.b16 %v1453
        %v1756 = vunpack.c.l.b16 %v1454
        %v1757 = vunpack.c.h.b16 %v1454
        %v1758 = vunpack.c.l.b16 %v1455
        %v1759 = vunpack.c.h.b16 %v1455
        %v1760 = vunpack.c.l.b16 %v1456
        %v1761 = vunpack.c.h.b16 %v1456
        %v1762 = vunpack.c.l.b16 %v1457
        %v1763 = vunpack.c.h.b16 %v1457
        %v1764 = vunpack.c.l.b16 %v1458
        %v1765 = vunpack.c.h.b16 %v1458
        %v1766 = vunpack.c.l.b16 %v1459
        %v1767 = vunpack.c.h.b16 %v1459
        %v1768 = vunpack.c.l.b16 %v1460
        %v1769 = vunpack.c.h.b16 %v1460
        %v1770 = vunpack.c.l.b16 %v1461
        %v1771 = vunpack.c.h.b16 %v1461
        %v1772 = vunpack.c.l.b16 %v1462
        %v1773 = vunpack.c.h.b16 %v1462
        %v1774 = vunpack.c.l.b16 %v1463
        %v1775 = vunpack.c.h.b16 %v1463
        %v1776 = vunpack.c.l.b16 %v1464
        %v1777 = vunpack.c.h.b16 %v1464
        %v1778 = vunpack.c.l.b16 %v1465
        %v1779 = vunpack.c.h.b16 %v1465
        %v1780 = vunpack.c.l.b16 %v1466
        %v1781 = vunpack.c.h.b16 %v1466
        %v1782 = vunpack.c.l.b16 %v1467
        %v1783 = vunpack.c.h.b16 %v1467
        %v1784 = vunpack.c.l.b16 %v1468
        %v1785 = vunpack.c.h.b16 %v1468
        %v1786 = vunpack.c.l.b16 %v1469
        %v1787 = vunpack.c.h.b16 %v1469
        %v1788 = vunpack.c.l.b16 %v1470
        %v1789 = vunpack.c.h.b16 %v1470
        %v1790 = vunpack.c.l.b16 %v1471
        %v1791 = vunpack.c.h.b16 %v1471
        %v1792 = vunpack.c.l.b16 %v1472
        %v1793 = vunpack.c.h.b16 %v1472
        %v1794 = vunpack.c.l.b16 %v1473
        %v1795 = vunpack.c.h.b16 %v1473
        %v1796 = vunpack.c.l.b16 %v1474
        %v1797 = vunpack.c.h.b16 %v1474
        %v1798 = vunpack.c.l.b16 %v1475
        %v1799 = vunpack.c.h.b16 %v1475
        %v1800 = vunpack.c.l.b16 %v1476
        %v1801 = vunpack.c.h.b16 %v1476
        %v1802 = vunpack.c.l.b16 %v1477
        %v1803 = vunpack.c.h.b16 %v1477
        %v1804 = vunpack.c.l.b16 %v1478
        %v1805 = vunpack.c.h.b16 %v1478
        %v1806 = vunpack.c.l.b16 %v1479
        %v1807 = vunpack.c.h.b16 %v1479
        %v1808 = vunpack.c.l.b16 %v1480
        %v1809 = vunpack.c.h.b16 %v1480
        %v1810 = vunpack.c.l.b16 %v1481
        %v1811 = vunpack.c.h.b16 %v1481
        %v1812 = vunpack.c.l.b16 %v1482
        %v1813 = vunpack.c.h.b16 %v1482
        %v1814 = vunpack.c.l.b16 %v1483
        %v1815 = vunpack.c.h.b16 %v1483
        %v1816 = vunpack.c.l.b16 %v1484
        %v1817 = vunpack.c.h.b16 %v1484
        %v1818 = vunpack.c.l.b16 %v1485
        %v1819 = vunpack.c.h.b16 %v1485
        %v1820 = vunpack.c.l.b16 %v1486
        %v1821 = vunpack.c.h.b16 %v1486
        %v1822 = vunpack.c.l.b16 %v1487
        %v1823 = vunpack.c.h.b16 %v1487
        %v1824 = vunpack.c.l.b16 %v1488
        %v1825 = vunpack.c.h.b16 %v1488
        %v1826 = vunpack.c.l.b16 %v1489
        %v1827 = vunpack.c.h.b16 %v1489
        %v1828 = vunpack.c.l.b16 %v1490
        %v1829 = vunpack.c.h.b16 %v1490
        %v1830 = vunpack.c.l.b16 %v1491
        %v1831 = vunpack.c.h.b16 %v1491
        %v1832 = vunpack.c.l.b16 %v1492
        %v1833 = vunpack.c.h.b16 %v1492
        %v1834 = vunpack.c.l.b16 %v1493
        %v1835 = vunpack.c.h.b16 %v1493
        %v1836 = vunpack.c.l.b16 %v1494
        %v1837 = vunpack.c.h.b16 %v1494
        %v1838 = vunpack.c.l.b16 %v1495
        %v1839 = vunpack.c.h.b16 %v1495
        %v1840 = vunpack.c.l.b16 %v1496
        %v1841 = vunpack.c.h.b16 %v1496
        %v1842 = vunpack.c.l.b16 %v1497
        %v1843 = vunpack.c.h.b16 %v1497
        %v1844 = vunpack.c.l.b16 %v1498
        %v1845 = vunpack.c.h.b16 %v1498
        %v1846 = vunpack.c.l.b16 %v1499
        %v1847 = vunpack.c.h.b16 %v1499
        %v1848 = vunpack.c.l.b16 %v1500
        %v1849 = vunpack.c.h.b16 %v1500
        %v1850 = vunpack.c.l.b16 %v1501
        %v1851 = vunpack.c.h.b16 %v1501
        %v1852 = vunpack.c.l.b16 %v1502
        %v1853 = vunpack.c.h.b16 %v1502
        %v1854 = vunpack.c.l.b16 %v1503
        %v1855 = vunpack.c.h.b16 %v1503
        %v1856 = vunpack.c.l.b16 %v1504
        %v1857 = vunpack.c.h.b16 %v1504
        %v1858 = vunpack.c.l.b16 %v1505
        %v1859 = vunpack.c.h.b16 %v1505
        %v1860 = vunpack.c.l.b16 %v1506
        %v1861 = vunpack.c.h.b16 %v1506
        %v1862 = vunpack.c.l.b16 %v1507
        %v1863 = vunpack.c.h.b16 %v1507
        %v1864 = vunpack.c.l.b16 %v1508
        %v1865 = vunpack.c.h.b16 %v1508
        %v1866 = vunpack.c.l.b16 %v1509
        %v1867 = vunpack.c.h.b16 %v1509
        %v1868 = vunpack.c.l.b16 %v1510
        %v1869 = vunpack.c.h.b16 %v1510
        %v1870 = vunpack.c.l.b16 %v1511
        %v1871 = vunpack.c.h.b16 %v1511
        %v1872 = vunpack.c.l.b16 %v1512
        %v1873 = vunpack.c.h.b16 %v1512
        %v1874 = vunpack.c.l.b16 %v1513
        %v1875 = vunpack.c.h.b16 %v1513
        %v1876 = vunpack.c.l.b16 %v1514
        %v1877 = vunpack.c.h.b16 %v1514
        %v1878 = vunpack.c.l.b16 %v1515
        %v1879 = vunpack.c.h.b16 %v1515
        %v1880 = vunpack.c.l.b16 %v1516
        %v1881 = vunpack.c.h.b16 %v1516
        %v1882 = vunpack.c.l.b16 %v1517
        %v1883 = vunpack.c.h.b16 %v1517
        %v1884 = vunpack.c.l.b16 %v1518
        %v1885 = vunpack.c.h.b16 %v1518
        %v1886 = vunpack.c.l.b16 %v1519
        %v1887 = vunpack.c.h.b16 %v1519
        %v1888 = vunpack.c.l.b16 %v1520
        %v1889 = vunpack.c.h.b16 %v1520
        %v1890 = vunpack.c.l.b16 %v1521
        %v1891 = vunpack.c.h.b16 %v1521
        %v1892 = vunpack.c.l.b16 %v1522
        %v1893 = vunpack.c.h.b16 %v1522
        %v1894 = vunpack.c.l.b16 %v1523
        %v1895 = vunpack.c.h.b16 %v1523
        %v1896 = vunpack.c.l.b16 %v1524
        %v1897 = vunpack.c.h.b16 %v1524
        %v1898 = vunpack.c.l.b16 %v1525
        %v1899 = vunpack.c.h.b16 %v1525
        %v1900 = vunpack.c.l.b16 %v1526
        %v1901 = vunpack.c.h.b16 %v1526
        %v1902 = vunpack.c.l.b16 %v1527
        %v1903 = vunpack.c.h.b16 %v1527
        %v1904 = vunpack.c.l.b16 %v1528
        %v1905 = vunpack.c.h.b16 %v1528
        %v1906 = vunpack.c.l.b16 %v1529
        %v1907 = vunpack.c.h.b16 %v1529
        %v1908 = vunpack.c.l.b16 %v1530
        %v1909 = vunpack.c.h.b16 %v1530
        %v1910 = vunpack.c.l.b16 %v1531
        %v1911 = vunpack.c.h.b16 %v1531
        %v1912 = vunpack.c.l.b16 %v1532
        %v1913 = vunpack.c.h.b16 %v1532
        %v1914 = vunpack.c.l.b16 %v1533
        %v1915 = vunpack.c.h.b16 %v1533
        %v1916 = vunpack.c.l.b16 %v1534
        %v1917 = vunpack.c.h.b16 %v1534
        %v1918 = vunpack.c.l.b16 %v1535
        %v1919 = vunpack.c.h.b16 %v1535
        %v1920 = vpack.c.b16 %v1672, %v1664
        %v1921 = vpack.c.b16 %v1673, %v1665
        %v1922 = vpack.c.b16 %v1674, %v1666
        %v1923 = vpack.c.b16 %v1675, %v1667
        %v1924 = vpack.c.b16 %v1676, %v1668
        %v1925 = vpack.c.b16 %v1677, %v1669
        %v1926 = vpack.c.b16 %v1678, %v1670
        %v1927 = vpack.c.b16 %v1679, %v1671
        %v1928 = vpack.c.b16 %v1688, %v1680
        %v1929 = vpack.c.b16 %v1689, %v1681
        %v1930 = vpack.c.b16 %v1690, %v1682
        %v1931 = vpack.c.b16 %v1691, %v1683
        %v1932 = vpack.c.b16 %v1692, %v1684
        %v1933 = vpack.c.b16 %v1693, %v1685
        %v1934 = vpack.c.b16 %v1694, %v1686
        %v1935 = vpack.c.b16 %v1695, %v1687
        %v1936 = vpack.c.b16 %v1704, %v1696
        %v1937 = vpack.c.b16 %v1705, %v1697
        %v1938 = vpack.c.b16 %v1706, %v1698
        %v1939 = vpack.c.b16 %v1707, %v1699
        %v1940 = vpack.c.b16 %v1708, %v1700
        %v1941 = vpack.c.b16 %v1709, %v1701
        %v1942 = vpack.c.b16 %v1710, %v1702
        %v1943 = vpack.c.b16 %v1711, %v1703
        %v1944 = vpack.c.b16 %v1720, %v1712
        %v1945 = vpack.c.b16 %v1721, %v1713
        %v1946 = vpack.c.b16 %v1722, %v1714
        %v1947 = vpack.c.b16 %v1723, %v1715
        %v1948 = vpack.c.b16 %v1724, %v1716
        %v1949 = vpack.c.b16 %v1725, %v1717
        %v1950 = vpack.c.b16 %v1726, %v1718
        %v1951 = vpack.c.b16 %v1727, %v1719
        %v1952 = vpack.c.b16 %v1736, %v1728
        %v1953 = vpack.c.b16 %v1737, %v1729
        %v1954 = vpack.c.b16 %v1738, %v1730
        %v1955 = vpack.c.b16 %v1739, %v1731
        %v1956 = vpack.c.b16 %v1740, %v1732
        %v1957 = vpack.c.b16 %v1741, %v1733
        %v1958 = vpack.c.b16 %v1742, %v1734
        %v1959 = vpack.c.b16 %v1743, %v1735
        %v1960 = vpack.c.b16 %v1752, %v1744
        %v1961 = vpack.c.b16 %v1753, %v1745
        %v1962 = vpack.c.b16 %v1754, %v1746
        %v1963 = vpack.c.b16 %v1755, %v1747
        %v1964 = vpack.c.b16 %v1756, %v1748
        %v1965 = vpack.c.b16 %v1757, %v1749
        %v1966 = vpack.c.b16 %v1758, %v1750
        %v1967 = vpack.c.b16 %v1759, %v1751
        %v1968 = vpack.c.b16 %v1768, %v1760
        %v1969 = vpack.c.b16 %v1769, %v1761
        %v1970 = vpack.c.b16 %v1770, %v1762
        %v1971 = vpack.c.b16 %v1771, %v1763
        %v1972 = vpack.c.b16 %v1772, %v1764
        %v1973 = vpack.c.b16 %v1773, %v1765
        %v1974 = vpack.c.b16 %v1774, %v1766
        %v1975 = vpack.c.b16 %v1775, %v1767
        %v1976 = vpack.c.b16 %v1784, %v1776
        %v1977 = vpack.c.b16 %v1785, %v1777
        %v1978 = vpack.c.b16 %v1786, %v1778
        %v1979 = vpack.c.b16 %v1787, %v1779
        %v1980 = vpack.c.b16 %v1788, %v1780
        %v1981 = vpack.c.b16 %v1789, %v1781
        %v1982 = vpack.c.b16 %v1790, %v1782
        %v1983 = vpack.c.b16 %v1791, %v1783
        %v1984 = vpack.c.b16 %v1800, %v1792
        %v1985 = vpack.c.b16 %v1801, %v1793
        %v1986 = vpack.c.b16 %v1802, %v1794
        %v1987 = vpack.c.b16 %v1803, %v1795
        %v1988 = vpack.c.b16 %v1804, %v1796
        %v1989 = vpack.c.b16 %v1805, %v1797
        %v1990 = vpack.c.b16 %v1806, %v1798
        %v1991 = vpack.c.b16 %v1807, %v1799
        %v1992 = vpack.c.b16 %v1816, %v1808
        %v1993 = vpack.c.b16 %v1817, %v1809
        %v1994 = vpack.c.b16 %v1818, %v1810
        %v1995 = vpack.c.b16 %v1819, %v1811
        %v1996 = vpack.c.b16 %v1820, %v1812
        %v1997 = vpack.c.b16 %v1821, %v1813
        %v1998 = vpack.c.b16 %v1822, %v1814
        %v1999 = vpack.c.b16 %v1823, %v1815
        %v2000 = vpack.c.b16 %v1832, %v1824
        %v2001 = vpack.c.b16 %v1833, %v1825
        %v2002 = vpack.c.b16 %v1834, %v1826
        %v2003 = vpack.c.b16 %v1835, %v1827
        %v2004 = vpack.c.b16 %v1836, %v1828
        %v2005 = vpack.c.b16 %v1837, %v1829
        %v2006 = vpack.c.b16 %v1838, %v1830
        %v2007 = vpack.c.b16 %v1839, %v1831
        %v2008 = vpack.c.b16 %v1848, %v1840
        %v2009 = vpack.c.b16 %v1849, %v1841
        %v2010 = vpack.c.b16 %v1850, %v1842
        %v2011 = vpack.c.b16 %v1851, %v1843
        %v2012 = vpack.c.b16 %v1852, %v1844
        %v2013 = vpack.c.b16 %v1853, %v1845
        %v2014 = vpack.c.b16 %v1854, %v1846
        %v2015 = vpack.c.b16 %v1855, %v1847
        %v2016 = vpack.c.b16 %v1864, %v1856
        %v2017 = vpack.c.b16 %v1865, %v1857
        %v2018 = vpack.c.b16 %v1866, %v1858
        %v2019 = vpack.c.b16 %v1867, %v1859
        %v2020 = vpack.c.b16 %v1868, %v1860
        %v2021 = vpack.c.b16 %v1869, %v1861
        %v2022 = vpack.c.b16 %v1870, %v1862
        %v2023 = vpack.c.b16 %v1871, %v1863
        %v2024 = vpack.c.b16 %v1880, %v1872
        %v2025 = vpack.c.b16 %v1881, %v1873
        %v2026 = vpack.c.b16 %v1882, %v1874
        %v2027 = vpack.c.b16 %v1883, %v1875
        %v2028 = vpack.c.b16 %v1884, %v1876
        %v2029 = vpack.c.b16 %v1885, %v1877
        %v2030 = vpack.c.b16 %v1886, %v1878
        %v2031 = vpack.c.b16 %v1887, %v1879
        %v2032 = vpack.c.b16 %v1896, %v1888
        %v2033 = vpack.c.b16 %v1897, %v1889
        %v2034 = vpack.c.b16 %v1898, %v1890
        %v2035 = vpack.c.b16 %v1899, %v1891
        %v2036 = vpack.c.b16 %v1900, %v1892
        %v2037 = vpack.c.b16 %v1901, %v1893
        %v2038 = vpack.c.b16 %v1902, %v1894
        %v2039 = vpack.c.b16 %v1903, %v1895
        %v2040 = vpack.c.b16 %v1912, %v1904
        %v2041 = vpack.c.b16 %v1913, %v1905
        %v2042 = vpack.c.b16 %v1914, %v1906
        %v2043 = vpack.c.b16 %v1915, %v1907
        %v2044 = vpack.c.b16 %v1916, %v1908
        %v2045 = vpack.c.b16 %v1917, %v1909
        %v2046 = vpack.c.b16 %v1918, %v1910
        %v2047 = vpack.c.b16 %v1919, %v1911
        %2176 = vmatpush.bf16.msra.mxu0 %v1976
        %2177 = vmatpush.bf16.msra.mxu0 %v1968
        %2178 = vmatpush.bf16.msra.mxu0 %v1960
        %2179 = vmatpush.bf16.msra.mxu0 %v1952
        %2180 = vmatpush.bf16.msra.mxu0 %v1944
        %2181 = vmatpush.bf16.msra.mxu0 %v1936
        %2182 = vmatpush.bf16.msra.mxu0 %v1928
        %2183 = vmatpush.bf16.msra.mxu0 %v1920
        %2184 = vmatmul.bf16.gmra.mxu0 %v540
        %v2185 = vpop.f32.mrf.mxu0
        %v2186 = vadd.f32 0.0, %v2185
        %v2187 = vpop.f32.mrf.mxu0
        %v2188 = vadd.f32 0.0, %v2187
        %2189 = vdwg.mxu0
        %2190 = vmatpush.bf16.msra.mxu0 %v2040
        %2191 = vmatpush.bf16.msra.mxu0 %v2032
        %2192 = vmatpush.bf16.msra.mxu0 %v2024
        %2193 = vmatpush.bf16.msra.mxu0 %v2016
        %2194 = vmatpush.bf16.msra.mxu0 %v2008
        %2195 = vmatpush.bf16.msra.mxu0 %v2000
        %2196 = vmatpush.bf16.msra.mxu0 %v1992
        %2197 = vmatpush.bf16.msra.mxu0 %v1984
        %2198 = vmatmul.bf16.gmra.mxu0 %v541
        %v2199 = vpop.f32.mrf.mxu0
        %v2200 = vadd.f32 %v2186, %v2199
        %v2201 = vpop.f32.mrf.mxu0
        %v2202 = vadd.f32 %v2188, %v2201
        %2203 = vdwg.mxu0
        %2204 = vmatpush.bf16.msra.mxu0 %v1977
        %2205 = vmatpush.bf16.msra.mxu0 %v1969
        %2206 = vmatpush.bf16.msra.mxu0 %v1961
        %2207 = vmatpush.bf16.msra.mxu0 %v1953
        %2208 = vmatpush.bf16.msra.mxu0 %v1945
        %2209 = vmatpush.bf16.msra.mxu0 %v1937
        %2210 = vmatpush.bf16.msra.mxu0 %v1929
        %2211 = vmatpush.bf16.msra.mxu0 %v1921
        %2212 = vmatmul.bf16.gmra.mxu0 %v540
        %v2213 = vpop.f32.mrf.mxu0
        %v2214 = vadd.f32 0.0, %v2213
        %v2215 = vpop.f32.mrf.mxu0
        %v2216 = vadd.f32 0.0, %v2215
        %2217 = vdwg.mxu0
        %2218 = vmatpush.bf16.msra.mxu0 %v2041
        %2219 = vmatpush.bf16.msra.mxu0 %v2033
        %2220 = vmatpush.bf16.msra.mxu0 %v2025
        %2221 = vmatpush.bf16.msra.mxu0 %v2017
        %2222 = vmatpush.bf16.msra.mxu0 %v2009
        %2223 = vmatpush.bf16.msra.mxu0 %v2001
        %2224 = vmatpush.bf16.msra.mxu0 %v1993
        %2225 = vmatpush.bf16.msra.mxu0 %v1985
        %2226 = vmatmul.bf16.gmra.mxu0 %v541
        %v2227 = vpop.f32.mrf.mxu0
        %v2228 = vadd.f32 %v2214, %v2227
        %v2229 = vpop.f32.mrf.mxu0
        %v2230 = vadd.f32 %v2216, %v2229
        %2231 = vdwg.mxu0
        %2232 = vmatpush.bf16.msra.mxu0 %v1978
        %2233 = vmatpush.bf16.msra.mxu0 %v1970
        %2234 = vmatpush.bf16.msra.mxu0 %v1962
        %2235 = vmatpush.bf16.msra.mxu0 %v1954
        %2236 = vmatpush.bf16.msra.mxu0 %v1946
        %2237 = vmatpush.bf16.msra.mxu0 %v1938
        %2238 = vmatpush.bf16.msra.mxu0 %v1930
        %2239 = vmatpush.bf16.msra.mxu0 %v1922
        %2240 = vmatmul.bf16.gmra.mxu0 %v540
        %v2241 = vpop.f32.mrf.mxu0
        %v2242 = vadd.f32 0.0, %v2241
        %v2243 = vpop.f32.mrf.mxu0
        %v2244 = vadd.f32 0.0, %v2243
        %2245 = vdwg.mxu0
        %2246 = vmatpush.bf16.msra.mxu0 %v2042
        %2247 = vmatpush.bf16.msra.mxu0 %v2034
        %2248 = vmatpush.bf16.msra.mxu0 %v2026
        %2249 = vmatpush.bf16.msra.mxu0 %v2018
        %2250 = vmatpush.bf16.msra.mxu0 %v2010
        %2251 = vmatpush.bf16.msra.mxu0 %v2002
        %2252 = vmatpush.bf16.msra.mxu0 %v1994
        %2253 = vmatpush.bf16.msra.mxu0 %v1986
        %2254 = vmatmul.bf16.gmra.mxu0 %v541
        %v2255 = vpop.f32.mrf.mxu0
        %v2256 = vadd.f32 %v2242, %v2255
        %v2257 = vpop.f32.mrf.mxu0
        %v2258 = vadd.f32 %v2244, %v2257
        %2259 = vdwg.mxu0
        %2260 = vmatpush.bf16.msra.mxu0 %v1979
        %2261 = vmatpush.bf16.msra.mxu0 %v1971
        %2262 = vmatpush.bf16.msra.mxu0 %v1963
        %2263 = vmatpush.bf16.msra.mxu0 %v1955
        %2264 = vmatpush.bf16.msra.mxu0 %v1947
        %2265 = vmatpush.bf16.msra.mxu0 %v1939
        %2266 = vmatpush.bf16.msra.mxu0 %v1931
        %2267 = vmatpush.bf16.msra.mxu0 %v1923
        %2268 = vmatmul.bf16.gmra.mxu0 %v540
        %v2269 = vpop.f32.mrf.mxu0
        %v2270 = vadd.f32 0.0, %v2269
        %v2271 = vpop.f32.mrf.mxu0
        %v2272 = vadd.f32 0.0, %v2271
        %2273 = vdwg.mxu0
        %2274 = vmatpush.bf16.msra.mxu0 %v2043
        %2275 = vmatpush.bf16.msra.mxu0 %v2035
        %2276 = vmatpush.bf16.msra.mxu0 %v2027
        %2277 = vmatpush.bf16.msra.mxu0 %v2019
        %2278 = vmatpush.bf16.msra.mxu0 %v2011
        %2279 = vmatpush.bf16.msra.mxu0 %v2003
        %2280 = vmatpush.bf16.msra.mxu0 %v1995
        %2281 = vmatpush.bf16.msra.mxu0 %v1987
        %2282 = vmatmul.bf16.gmra.mxu0 %v541
        %v2283 = vpop.f32.mrf.mxu0
        %v2284 = vadd.f32 %v2270, %v2283
        %v2285 = vpop.f32.mrf.mxu0
        %v2286 = vadd.f32 %v2272, %v2285
        %2287 = vdwg.mxu0
        %2288 = vmatpush.bf16.msra.mxu0 %v1980
        %2289 = vmatpush.bf16.msra.mxu0 %v1972
        %2290 = vmatpush.bf16.msra.mxu0 %v1964
        %2291 = vmatpush.bf16.msra.mxu0 %v1956
        %2292 = vmatpush.bf16.msra.mxu0 %v1948
        %2293 = vmatpush.bf16.msra.mxu0 %v1940
        %2294 = vmatpush.bf16.msra.mxu0 %v1932
        %2295 = vmatpush.bf16.msra.mxu0 %v1924
        %2296 = vmatmul.bf16.gmra.mxu0 %v540
        %v2297 = vpop.f32.mrf.mxu0
        %v2298 = vadd.f32 0.0, %v2297
        %v2299 = vpop.f32.mrf.mxu0
        %v2300 = vadd.f32 0.0, %v2299
        %2301 = vdwg.mxu0
        %2302 = vmatpush.bf16.msra.mxu0 %v2044
        %2303 = vmatpush.bf16.msra.mxu0 %v2036
        %2304 = vmatpush.bf16.msra.mxu0 %v2028
        %2305 = vmatpush.bf16.msra.mxu0 %v2020
        %2306 = vmatpush.bf16.msra.mxu0 %v2012
        %2307 = vmatpush.bf16.msra.mxu0 %v2004
        %2308 = vmatpush.bf16.msra.mxu0 %v1996
        %2309 = vmatpush.bf16.msra.mxu0 %v1988
        %2310 = vmatmul.bf16.gmra.mxu0 %v541
        %v2311 = vpop.f32.mrf.mxu0
        %v2312 = vadd.f32 %v2298, %v2311
        %v2313 = vpop.f32.mrf.mxu0
        %v2314 = vadd.f32 %v2300, %v2313
        %2315 = vdwg.mxu0
        %2316 = vmatpush.bf16.msra.mxu0 %v1981
        %2317 = vmatpush.bf16.msra.mxu0 %v1973
        %2318 = vmatpush.bf16.msra.mxu0 %v1965
        %2319 = vmatpush.bf16.msra.mxu0 %v1957
        %2320 = vmatpush.bf16.msra.mxu0 %v1949
        %2321 = vmatpush.bf16.msra.mxu0 %v1941
        %2322 = vmatpush.bf16.msra.mxu0 %v1933
        %2323 = vmatpush.bf16.msra.mxu0 %v1925
        %2324 = vmatmul.bf16.gmra.mxu0 %v540
        %v2325 = vpop.f32.mrf.mxu0
        %v2326 = vadd.f32 0.0, %v2325
        %v2327 = vpop.f32.mrf.mxu0
        %v2328 = vadd.f32 0.0, %v2327
        %2329 = vdwg.mxu0
        %2330 = vmatpush.bf16.msra.mxu0 %v2045
        %2331 = vmatpush.bf16.msra.mxu0 %v2037
        %2332 = vmatpush.bf16.msra.mxu0 %v2029
        %2333 = vmatpush.bf16.msra.mxu0 %v2021
        %2334 = vmatpush.bf16.msra.mxu0 %v2013
        %2335 = vmatpush.bf16.msra.mxu0 %v2005
        %2336 = vmatpush.bf16.msra.mxu0 %v1997
        %2337 = vmatpush.bf16.msra.mxu0 %v1989
        %2338 = vmatmul.bf16.gmra.mxu0 %v541
        %v2339 = vpop.f32.mrf.mxu0
        %v2340 = vadd.f32 %v2326, %v2339
        %v2341 = vpop.f32.mrf.mxu0
        %v2342 = vadd.f32 %v2328, %v2341
        %2343 = vdwg.mxu0
        %2344 = vmatpush.bf16.msra.mxu0 %v1982
        %2345 = vmatpush.bf16.msra.mxu0 %v1974
        %2346 = vmatpush.bf16.msra.mxu0 %v1966
        %2347 = vmatpush.bf16.msra.mxu0 %v1958
        %2348 = vmatpush.bf16.msra.mxu0 %v1950
        %2349 = vmatpush.bf16.msra.mxu0 %v1942
        %2350 = vmatpush.bf16.msra.mxu0 %v1934
        %2351 = vmatpush.bf16.msra.mxu0 %v1926
        %2352 = vmatmul.bf16.gmra.mxu0 %v540
        %v2353 = vpop.f32.mrf.mxu0
        %v2354 = vadd.f32 0.0, %v2353
        %v2355 = vpop.f32.mrf.mxu0
        %v2356 = vadd.f32 0.0, %v2355
        %2357 = vdwg.mxu0
        %2358 = vmatpush.bf16.msra.mxu0 %v2046
        %2359 = vmatpush.bf16.msra.mxu0 %v2038
        %2360 = vmatpush.bf16.msra.mxu0 %v2030
        %2361 = vmatpush.bf16.msra.mxu0 %v2022
        %2362 = vmatpush.bf16.msra.mxu0 %v2014
        %2363 = vmatpush.bf16.msra.mxu0 %v2006
        %2364 = vmatpush.bf16.msra.mxu0 %v1998
        %2365 = vmatpush.bf16.msra.mxu0 %v1990
        %2366 = vmatmul.bf16.gmra.mxu0 %v541
        %v2367 = vpop.f32.mrf.mxu0
        %v2368 = vadd.f32 %v2354, %v2367
        %v2369 = vpop.f32.mrf.mxu0
        %v2370 = vadd.f32 %v2356, %v2369
        %2371 = vdwg.mxu0
        %2372 = vmatpush.bf16.msra.mxu0 %v1983
        %2373 = vmatpush.bf16.msra.mxu0 %v1975
        %2374 = vmatpush.bf16.msra.mxu0 %v1967
        %2375 = vmatpush.bf16.msra.mxu0 %v1959
        %2376 = vmatpush.bf16.msra.mxu0 %v1951
        %2377 = vmatpush.bf16.msra.mxu0 %v1943
        %2378 = vmatpush.bf16.msra.mxu0 %v1935
        %2379 = vmatpush.bf16.msra.mxu0 %v1927
        %2380 = vmatmul.bf16.gmra.mxu0 %v540
        %v2381 = vpop.f32.mrf.mxu0
        %v2382 = vadd.f32 0.0, %v2381
        %v2383 = vpop.f32.mrf.mxu0
        %v2384 = vadd.f32 0.0, %v2383
        %2385 = vdwg.mxu0
        %2386 = vmatpush.bf16.msra.mxu0 %v2047
        %2387 = vmatpush.bf16.msra.mxu0 %v2039
        %2388 = vmatpush.bf16.msra.mxu0 %v2031
        %2389 = vmatpush.bf16.msra.mxu0 %v2023
        %2390 = vmatpush.bf16.msra.mxu0 %v2015
        %2391 = vmatpush.bf16.msra.mxu0 %v2007
        %2392 = vmatpush.bf16.msra.mxu0 %v1999
        %2393 = vmatpush.bf16.msra.mxu0 %v1991
        %2394 = vmatmul.bf16.gmra.mxu0 %v541
        %v2395 = vpop.f32.mrf.mxu0
        %v2396 = vadd.f32 %v2382, %v2395
        %v2397 = vpop.f32.mrf.mxu0
        %v2398 = vadd.f32 %v2384, %v2397
        %2399 = vdwg.mxu0
        %v2400 = vxor.u32 %v1208, 2147483648
        %v2401 = vxor.u32 %v1236, 2147483648
        %v2402 = vxor.u32 %v1264, 2147483648
        %v2403 = vxor.u32 %v1292, 2147483648
        %v2404 = vxor.u32 %v1320, 2147483648
        %v2405 = vxor.u32 %v1348, 2147483648
        %v2406 = vxor.u32 %v1376, 2147483648
        %v2407 = vxor.u32 %v1404, 2147483648
        %v2408 = vxor.u32 %v1210, 2147483648
        %v2409 = vxor.u32 %v1238, 2147483648
        %v2410 = vxor.u32 %v1266, 2147483648
        %v2411 = vxor.u32 %v1294, 2147483648
        %v2412 = vxor.u32 %v1322, 2147483648
        %v2413 = vxor.u32 %v1350, 2147483648
        %v2414 = vxor.u32 %v1378, 2147483648
        %v2415 = vxor.u32 %v1406, 2147483648
        %v2416 = vmul.f32 %v2400, 1.442695
        %v2417 = vpow.pop %v2416
        %v2418 = vmul.f32 %v2401, 1.442695
        %v2419 = vpow.pop %v2418
        %v2420 = vmul.f32 %v2402, 1.442695
        %v2421 = vpow.pop %v2420
        %v2422 = vmul.f32 %v2403, 1.442695
        %v2423 = vpow.pop %v2422
        %v2424 = vmul.f32 %v2404, 1.442695
        %v2425 = vpow.pop %v2424
        %v2426 = vmul.f32 %v2405, 1.442695
        %v2427 = vpow.pop %v2426
        %v2428 = vmul.f32 %v2406, 1.442695
        %v2429 = vpow.pop %v2428
        %v2430 = vmul.f32 %v2407, 1.442695
        %v2431 = vpow.pop %v2430
        %v2432 = vmul.f32 %v2408, 1.442695
        %v2433 = vpow.pop %v2432
        %v2434 = vmul.f32 %v2409, 1.442695
        %v2435 = vpow.pop %v2434
        %v2436 = vmul.f32 %v2410, 1.442695
        %v2437 = vpow.pop %v2436
        %v2438 = vmul.f32 %v2411, 1.442695
        %v2439 = vpow.pop %v2438
        %v2440 = vmul.f32 %v2412, 1.442695
        %v2441 = vpow.pop %v2440
        %v2442 = vmul.f32 %v2413, 1.442695
        %v2443 = vpow.pop %v2442
        %v2444 = vmul.f32 %v2414, 1.442695
        %v2445 = vpow.pop %v2444
        %v2446 = vmul.f32 %v2415, 1.442695
        %v2447 = vpow.pop %v2446
        %v2448 = vadd.f32 %v2417, 1.0
        %v2449 = vadd.f32 %v2419, 1.0
        %v2450 = vadd.f32 %v2421, 1.0
        %v2451 = vadd.f32 %v2423, 1.0
        %v2452 = vadd.f32 %v2425, 1.0
        %v2453 = vadd.f32 %v2427, 1.0
        %v2454 = vadd.f32 %v2429, 1.0
        %v2455 = vadd.f32 %v2431, 1.0
        %v2456 = vadd.f32 %v2433, 1.0
        %v2457 = vadd.f32 %v2435, 1.0
        %v2458 = vadd.f32 %v2437, 1.0
        %v2459 = vadd.f32 %v2439, 1.0
        %v2460 = vadd.f32 %v2441, 1.0
        %v2461 = vadd.f32 %v2443, 1.0
        %v2462 = vadd.f32 %v2445, 1.0
        %v2463 = vadd.f32 %v2447, 1.0
        %v2464 = vrcp.pop %v2448
        %v2465 = vmul.f32 %v2448, %v2464
        %v2466 = vsub.f32 1.0, %v2465
        %v2467 = vmul.f32 %v2464, %v2466
        %v2468 = vadd.f32 %v2464, %v2467
        %vm2469 = vweird.f32 %v2448
        %vm2470 = vweird.f32 %v2464
        %vm2471 = vmor %vm2469, %vm2470
        %v2472 = vsel %vm2471, %v2464, %v2468
        %v2473 = vand.u32 2147483647, %v2448
        %vm2474 = vcmp.eq.f32.partialorder %v2473, 8.507059e+37
        %v2475 = vand.u32 %v2448, 2147483648
        %v2476 = vor.u32 1.1754944e-38, %v2475
        %v2477 = vsel %vm2474, %v2476, %v2472
        %v2478 = vmul.f32 1.0, %v2477
        %v2479 = vrcp.pop %v2449
        %v2480 = vmul.f32 %v2449, %v2479
        %v2481 = vsub.f32 1.0, %v2480
        %v2482 = vmul.f32 %v2479, %v2481
        %v2483 = vadd.f32 %v2479, %v2482
        %vm2484 = vweird.f32 %v2449
        %vm2485 = vweird.f32 %v2479
        %vm2486 = vmor %vm2484, %vm2485
        %v2487 = vsel %vm2486, %v2479, %v2483
        %v2488 = vand.u32 2147483647, %v2449
        %vm2489 = vcmp.eq.f32.partialorder %v2488, 8.507059e+37
        %v2490 = vand.u32 %v2449, 2147483648
        %v2491 = vor.u32 1.1754944e-38, %v2490
        %v2492 = vsel %vm2489, %v2491, %v2487
        %v2493 = vmul.f32 1.0, %v2492
        %v2494 = vrcp.pop %v2450
        %v2495 = vmul.f32 %v2450, %v2494
        %v2496 = vsub.f32 1.0, %v2495
        %v2497 = vmul.f32 %v2494, %v2496
        %v2498 = vadd.f32 %v2494, %v2497
        %vm2499 = vweird.f32 %v2450
        %vm2500 = vweird.f32 %v2494
        %vm2501 = vmor %vm2499, %vm2500
        %v2502 = vsel %vm2501, %v2494, %v2498
        %v2503 = vand.u32 2147483647, %v2450
        %vm2504 = vcmp.eq.f32.partialorder %v2503, 8.507059e+37
        %v2505 = vand.u32 %v2450, 2147483648
        %v2506 = vor.u32 1.1754944e-38, %v2505
        %v2507 = vsel %vm2504, %v2506, %v2502
        %v2508 = vmul.f32 1.0, %v2507
        %v2509 = vrcp.pop %v2451
        %v2510 = vmul.f32 %v2451, %v2509
        %v2511 = vsub.f32 1.0, %v2510
        %v2512 = vmul.f32 %v2509, %v2511
        %v2513 = vadd.f32 %v2509, %v2512
        %vm2514 = vweird.f32 %v2451
        %vm2515 = vweird.f32 %v2509
        %vm2516 = vmor %vm2514, %vm2515
        %v2517 = vsel %vm2516, %v2509, %v2513
        %v2518 = vand.u32 2147483647, %v2451
        %vm2519 = vcmp.eq.f32.partialorder %v2518, 8.507059e+37
        %v2520 = vand.u32 %v2451, 2147483648
        %v2521 = vor.u32 1.1754944e-38, %v2520
        %v2522 = vsel %vm2519, %v2521, %v2517
        %v2523 = vmul.f32 1.0, %v2522
        %v2524 = vrcp.pop %v2452
        %v2525 = vmul.f32 %v2452, %v2524
        %v2526 = vsub.f32 1.0, %v2525
        %v2527 = vmul.f32 %v2524, %v2526
        %v2528 = vadd.f32 %v2524, %v2527
        %vm2529 = vweird.f32 %v2452
        %vm2530 = vweird.f32 %v2524
        %vm2531 = vmor %vm2529, %vm2530
        %v2532 = vsel %vm2531, %v2524, %v2528
        %v2533 = vand.u32 2147483647, %v2452
        %vm2534 = vcmp.eq.f32.partialorder %v2533, 8.507059e+37
        %v2535 = vand.u32 %v2452, 2147483648
        %v2536 = vor.u32 1.1754944e-38, %v2535
        %v2537 = vsel %vm2534, %v2536, %v2532
        %v2538 = vmul.f32 1.0, %v2537
        %v2539 = vrcp.pop %v2453
        %v2540 = vmul.f32 %v2453, %v2539
        %v2541 = vsub.f32 1.0, %v2540
        %v2542 = vmul.f32 %v2539, %v2541
        %v2543 = vadd.f32 %v2539, %v2542
        %vm2544 = vweird.f32 %v2453
        %vm2545 = vweird.f32 %v2539
        %vm2546 = vmor %vm2544, %vm2545
        %v2547 = vsel %vm2546, %v2539, %v2543
        %v2548 = vand.u32 2147483647, %v2453
        %vm2549 = vcmp.eq.f32.partialorder %v2548, 8.507059e+37
        %v2550 = vand.u32 %v2453, 2147483648
        %v2551 = vor.u32 1.1754944e-38, %v2550
        %v2552 = vsel %vm2549, %v2551, %v2547
        %v2553 = vmul.f32 1.0, %v2552
        %v2554 = vrcp.pop %v2454
        %v2555 = vmul.f32 %v2454, %v2554
        %v2556 = vsub.f32 1.0, %v2555
        %v2557 = vmul.f32 %v2554, %v2556
        %v2558 = vadd.f32 %v2554, %v2557
        %vm2559 = vweird.f32 %v2454
        %vm2560 = vweird.f32 %v2554
        %vm2561 = vmor %vm2559, %vm2560
        %v2562 = vsel %vm2561, %v2554, %v2558
        %v2563 = vand.u32 2147483647, %v2454
        %vm2564 = vcmp.eq.f32.partialorder %v2563, 8.507059e+37
        %v2565 = vand.u32 %v2454, 2147483648
        %v2566 = vor.u32 1.1754944e-38, %v2565
        %v2567 = vsel %vm2564, %v2566, %v2562
        %v2568 = vmul.f32 1.0, %v2567
        %v2569 = vrcp.pop %v2455
        %v2570 = vmul.f32 %v2455, %v2569
        %v2571 = vsub.f32 1.0, %v2570
        %v2572 = vmul.f32 %v2569, %v2571
        %v2573 = vadd.f32 %v2569, %v2572
        %vm2574 = vweird.f32 %v2455
        %vm2575 = vweird.f32 %v2569
        %vm2576 = vmor %vm2574, %vm2575
        %v2577 = vsel %vm2576, %v2569, %v2573
        %v2578 = vand.u32 2147483647, %v2455
        %vm2579 = vcmp.eq.f32.partialorder %v2578, 8.507059e+37
        %v2580 = vand.u32 %v2455, 2147483648
        %v2581 = vor.u32 1.1754944e-38, %v2580
        %v2582 = vsel %vm2579, %v2581, %v2577
        %v2583 = vmul.f32 1.0, %v2582
        %v2584 = vrcp.pop %v2456
        %v2585 = vmul.f32 %v2456, %v2584
        %v2586 = vsub.f32 1.0, %v2585
        %v2587 = vmul.f32 %v2584, %v2586
        %v2588 = vadd.f32 %v2584, %v2587
        %vm2589 = vweird.f32 %v2456
        %vm2590 = vweird.f32 %v2584
        %vm2591 = vmor %vm2589, %vm2590
        %v2592 = vsel %vm2591, %v2584, %v2588
        %v2593 = vand.u32 2147483647, %v2456
        %vm2594 = vcmp.eq.f32.partialorder %v2593, 8.507059e+37
        %v2595 = vand.u32 %v2456, 2147483648
        %v2596 = vor.u32 1.1754944e-38, %v2595
        %v2597 = vsel %vm2594, %v2596, %v2592
        %v2598 = vmul.f32 1.0, %v2597
        %v2599 = vrcp.pop %v2457
        %v2600 = vmul.f32 %v2457, %v2599
        %v2601 = vsub.f32 1.0, %v2600
        %v2602 = vmul.f32 %v2599, %v2601
        %v2603 = vadd.f32 %v2599, %v2602
        %vm2604 = vweird.f32 %v2457
        %vm2605 = vweird.f32 %v2599
        %vm2606 = vmor %vm2604, %vm2605
        %v2607 = vsel %vm2606, %v2599, %v2603
        %v2608 = vand.u32 2147483647, %v2457
        %vm2609 = vcmp.eq.f32.partialorder %v2608, 8.507059e+37
        %v2610 = vand.u32 %v2457, 2147483648
        %v2611 = vor.u32 1.1754944e-38, %v2610
        %v2612 = vsel %vm2609, %v2611, %v2607
        %v2613 = vmul.f32 1.0, %v2612
        %v2614 = vrcp.pop %v2458
        %v2615 = vmul.f32 %v2458, %v2614
        %v2616 = vsub.f32 1.0, %v2615
        %v2617 = vmul.f32 %v2614, %v2616
        %v2618 = vadd.f32 %v2614, %v2617
        %vm2619 = vweird.f32 %v2458
        %vm2620 = vweird.f32 %v2614
        %vm2621 = vmor %vm2619, %vm2620
        %v2622 = vsel %vm2621, %v2614, %v2618
        %v2623 = vand.u32 2147483647, %v2458
        %vm2624 = vcmp.eq.f32.partialorder %v2623, 8.507059e+37
        %v2625 = vand.u32 %v2458, 2147483648
        %v2626 = vor.u32 1.1754944e-38, %v2625
        %v2627 = vsel %vm2624, %v2626, %v2622
        %v2628 = vmul.f32 1.0, %v2627
        %v2629 = vrcp.pop %v2459
        %v2630 = vmul.f32 %v2459, %v2629
        %v2631 = vsub.f32 1.0, %v2630
        %v2632 = vmul.f32 %v2629, %v2631
        %v2633 = vadd.f32 %v2629, %v2632
        %vm2634 = vweird.f32 %v2459
        %vm2635 = vweird.f32 %v2629
        %vm2636 = vmor %vm2634, %vm2635
        %v2637 = vsel %vm2636, %v2629, %v2633
        %v2638 = vand.u32 2147483647, %v2459
        %vm2639 = vcmp.eq.f32.partialorder %v2638, 8.507059e+37
        %v2640 = vand.u32 %v2459, 2147483648
        %v2641 = vor.u32 1.1754944e-38, %v2640
        %v2642 = vsel %vm2639, %v2641, %v2637
        %v2643 = vmul.f32 1.0, %v2642
        %v2644 = vrcp.pop %v2460
        %v2645 = vmul.f32 %v2460, %v2644
        %v2646 = vsub.f32 1.0, %v2645
        %v2647 = vmul.f32 %v2644, %v2646
        %v2648 = vadd.f32 %v2644, %v2647
        %vm2649 = vweird.f32 %v2460
        %vm2650 = vweird.f32 %v2644
        %vm2651 = vmor %vm2649, %vm2650
        %v2652 = vsel %vm2651, %v2644, %v2648
        %v2653 = vand.u32 2147483647, %v2460
        %vm2654 = vcmp.eq.f32.partialorder %v2653, 8.507059e+37
        %v2655 = vand.u32 %v2460, 2147483648
        %v2656 = vor.u32 1.1754944e-38, %v2655
        %v2657 = vsel %vm2654, %v2656, %v2652
        %v2658 = vmul.f32 1.0, %v2657
        %v2659 = vrcp.pop %v2461
        %v2660 = vmul.f32 %v2461, %v2659
        %v2661 = vsub.f32 1.0, %v2660
        %v2662 = vmul.f32 %v2659, %v2661
        %v2663 = vadd.f32 %v2659, %v2662
        %vm2664 = vweird.f32 %v2461
        %vm2665 = vweird.f32 %v2659
        %vm2666 = vmor %vm2664, %vm2665
        %v2667 = vsel %vm2666, %v2659, %v2663
        %v2668 = vand.u32 2147483647, %v2461
        %vm2669 = vcmp.eq.f32.partialorder %v2668, 8.507059e+37
        %v2670 = vand.u32 %v2461, 2147483648
        %v2671 = vor.u32 1.1754944e-38, %v2670
        %v2672 = vsel %vm2669, %v2671, %v2667
        %v2673 = vmul.f32 1.0, %v2672
        %v2674 = vrcp.pop %v2462
        %v2675 = vmul.f32 %v2462, %v2674
        %v2676 = vsub.f32 1.0, %v2675
        %v2677 = vmul.f32 %v2674, %v2676
        %v2678 = vadd.f32 %v2674, %v2677
        %vm2679 = vweird.f32 %v2462
        %vm2680 = vweird.f32 %v2674
        %vm2681 = vmor %vm2679, %vm2680
        %v2682 = vsel %vm2681, %v2674, %v2678
        %v2683 = vand.u32 2147483647, %v2462
        %vm2684 = vcmp.eq.f32.partialorder %v2683, 8.507059e+37
        %v2685 = vand.u32 %v2462, 2147483648
        %v2686 = vor.u32 1.1754944e-38, %v2685
        %v2687 = vsel %vm2684, %v2686, %v2682
        %v2688 = vmul.f32 1.0, %v2687
        %v2689 = vrcp.pop %v2463
        %v2690 = vmul.f32 %v2463, %v2689
        %v2691 = vsub.f32 1.0, %v2690
        %v2692 = vmul.f32 %v2689, %v2691
        %v2693 = vadd.f32 %v2689, %v2692
        %vm2694 = vweird.f32 %v2463
        %vm2695 = vweird.f32 %v2689
        %vm2696 = vmor %vm2694, %vm2695
        %v2697 = vsel %vm2696, %v2689, %v2693
        %v2698 = vand.u32 2147483647, %v2463
        %vm2699 = vcmp.eq.f32.partialorder %v2698, 8.507059e+37
        %v2700 = vand.u32 %v2463, 2147483648
        %v2701 = vor.u32 1.1754944e-38, %v2700
        %v2702 = vsel %vm2699, %v2701, %v2697
        %v2703 = vmul.f32 1.0, %v2702
        %v2704 = vmul.f32 %v1208, %v2478
        %v2705 = vmul.f32 %v1236, %v2493
        %v2706 = vmul.f32 %v1264, %v2508
        %v2707 = vmul.f32 %v1292, %v2523
        %v2708 = vmul.f32 %v1320, %v2538
        %v2709 = vmul.f32 %v1348, %v2553
        %v2710 = vmul.f32 %v1376, %v2568
        %v2711 = vmul.f32 %v1404, %v2583
        %v2712 = vmul.f32 %v1210, %v2598
        %v2713 = vmul.f32 %v1238, %v2613
        %v2714 = vmul.f32 %v1266, %v2628
        %v2715 = vmul.f32 %v1294, %v2643
        %v2716 = vmul.f32 %v1322, %v2658
        %v2717 = vmul.f32 %v1350, %v2673
        %v2718 = vmul.f32 %v1378, %v2688
        %v2719 = vmul.f32 %v1406, %v2703
        %v2720 = vmul.f32 %v2704, %v2200
        %v2721 = vmul.f32 %v2705, %v2228
        %v2722 = vmul.f32 %v2706, %v2256
        %v2723 = vmul.f32 %v2707, %v2284
        %v2724 = vmul.f32 %v2708, %v2312
        %v2725 = vmul.f32 %v2709, %v2340
        %v2726 = vmul.f32 %v2710, %v2368
        %v2727 = vmul.f32 %v2711, %v2396
        %v2728 = vmul.f32 %v2712, %v2202
        %v2729 = vmul.f32 %v2713, %v2230
        %v2730 = vmul.f32 %v2714, %v2258
        %v2731 = vmul.f32 %v2715, %v2286
        %v2732 = vmul.f32 %v2716, %v2314
        %v2733 = vmul.f32 %v2717, %v2342
        %v2734 = vmul.f32 %v2718, %v2370
        %v2735 = vmul.f32 %v2719, %v2398
        %v2736 = vpack.c.bf16 %v2728, %v2720
        %v2737 = vpack.c.bf16 %v2729, %v2721
        %v2738 = vpack.c.bf16 %v2730, %v2722
        %v2739 = vpack.c.bf16 %v2731, %v2723
        %v2740 = vpack.c.bf16 %v2732, %v2724
        %v2741 = vpack.c.bf16 %v2733, %v2725
        %v2742 = vpack.c.bf16 %v2734, %v2726
        %v2743 = vpack.c.bf16 %v2735, %v2727
        %v2744 = vld [vmem:[#allocation2] sm:$0xff]
        %v2745 = vld [vmem:[#allocation2 + $0x8] sm:$0xff]
        %v2746 = vld [vmem:[#allocation2 + $0x10] sm:$0xff]
        %v2747 = vld [vmem:[#allocation2 + $0x18] sm:$0xff]
        %v2748 = vld [vmem:[%s330] sm:$0xff]
        %v2749 = vld [vmem:[%s330 + $0x8] sm:$0xff]
        %v2750 = vld [vmem:[%s330 + $0x10] sm:$0xff]
        %v2751 = vld [vmem:[%s330 + $0x18] sm:$0xff]
        %v2752 = vld [vmem:[%s330 + $0x20] sm:$0xff]
        %v2753 = vld [vmem:[%s330 + $0x28] sm:$0xff]
        %v2754 = vld [vmem:[%s330 + $0x30] sm:$0xff]
        %v2755 = vld [vmem:[%s330 + $0x38] sm:$0xff]
        %v2756 = vld [vmem:[%s330 + $0x40] sm:$0xff]
        %v2757 = vld [vmem:[%s330 + $0x48] sm:$0xff]
        %v2758 = vld [vmem:[%s330 + $0x50] sm:$0xff]
        %v2759 = vld [vmem:[%s330 + $0x58] sm:$0xff]
        %v2760 = vld [vmem:[%s330 + $0x60] sm:$0xff]
        %v2761 = vld [vmem:[%s330 + $0x68] sm:$0xff]
        %v2762 = vld [vmem:[%s330 + $0x70] sm:$0xff]
        %v2763 = vld [vmem:[%s330 + $0x78] sm:$0xff]
        %v2764 = vld [vmem:[%s330 + $0x80] sm:$0xff]
        %v2765 = vld [vmem:[%s330 + $0x88] sm:$0xff]
        %v2766 = vld [vmem:[%s330 + $0x90] sm:$0xff]
        %v2767 = vld [vmem:[%s330 + $0x98] sm:$0xff]
        %v2768 = vld [vmem:[%s330 + $0xa0] sm:$0xff]
        %v2769 = vld [vmem:[%s330 + $0xa8] sm:$0xff]
        %v2770 = vld [vmem:[%s330 + $0xb0] sm:$0xff]
        %v2771 = vld [vmem:[%s330 + $0xb8] sm:$0xff]
        %v2772 = vld [vmem:[%s330 + $0xc0] sm:$0xff]
        %v2773 = vld [vmem:[%s330 + $0xc8] sm:$0xff]
        %v2774 = vld [vmem:[%s330 + $0xd0] sm:$0xff]
        %v2775 = vld [vmem:[%s330 + $0xd8] sm:$0xff]
        %v2776 = vld [vmem:[%s330 + $0xe0] sm:$0xff]
        %v2777 = vld [vmem:[%s330 + $0xe8] sm:$0xff]
        %v2778 = vld [vmem:[%s330 + $0xf0] sm:$0xff]
        %v2779 = vld [vmem:[%s330 + $0xf8] sm:$0xff]
        %v2780 = vld [vmem:[%s330 + $0x100] sm:$0xff]
        %v2781 = vld [vmem:[%s330 + $0x108] sm:$0xff]
        %v2782 = vld [vmem:[%s330 + $0x110] sm:$0xff]
        %v2783 = vld [vmem:[%s330 + $0x118] sm:$0xff]
        %v2784 = vld [vmem:[%s330 + $0x120] sm:$0xff]
        %v2785 = vld [vmem:[%s330 + $0x128] sm:$0xff]
        %v2786 = vld [vmem:[%s330 + $0x130] sm:$0xff]
        %v2787 = vld [vmem:[%s330 + $0x138] sm:$0xff]
        %v2788 = vld [vmem:[%s330 + $0x140] sm:$0xff]
        %v2789 = vld [vmem:[%s330 + $0x148] sm:$0xff]
        %v2790 = vld [vmem:[%s330 + $0x150] sm:$0xff]
        %v2791 = vld [vmem:[%s330 + $0x158] sm:$0xff]
        %v2792 = vld [vmem:[%s330 + $0x160] sm:$0xff]
        %v2793 = vld [vmem:[%s330 + $0x168] sm:$0xff]
        %v2794 = vld [vmem:[%s330 + $0x170] sm:$0xff]
        %v2795 = vld [vmem:[%s330 + $0x178] sm:$0xff]
        %v2796 = vld [vmem:[%s330 + $0x180] sm:$0xff]
        %v2797 = vld [vmem:[%s330 + $0x188] sm:$0xff]
        %v2798 = vld [vmem:[%s330 + $0x190] sm:$0xff]
        %v2799 = vld [vmem:[%s330 + $0x198] sm:$0xff]
        %v2800 = vld [vmem:[%s330 + $0x1a0] sm:$0xff]
        %v2801 = vld [vmem:[%s330 + $0x1a8] sm:$0xff]
        %v2802 = vld [vmem:[%s330 + $0x1b0] sm:$0xff]
        %v2803 = vld [vmem:[%s330 + $0x1b8] sm:$0xff]
        %v2804 = vld [vmem:[%s330 + $0x1c0] sm:$0xff]
        %v2805 = vld [vmem:[%s330 + $0x1c8] sm:$0xff]
        %v2806 = vld [vmem:[%s330 + $0x1d0] sm:$0xff]
        %v2807 = vld [vmem:[%s330 + $0x1d8] sm:$0xff]
        %v2808 = vld [vmem:[%s330 + $0x1e0] sm:$0xff]
        %v2809 = vld [vmem:[%s330 + $0x1e8] sm:$0xff]
        %v2810 = vld [vmem:[%s330 + $0x1f0] sm:$0xff]
        %v2811 = vld [vmem:[%s330 + $0x1f8] sm:$0xff]
        %v2812 = vld [vmem:[%s330 + $0x200] sm:$0xff]
        %v2813 = vld [vmem:[%s330 + $0x208] sm:$0xff]
        %v2814 = vld [vmem:[%s330 + $0x210] sm:$0xff]
        %v2815 = vld [vmem:[%s330 + $0x218] sm:$0xff]
        %v2816 = vld [vmem:[%s330 + $0x220] sm:$0xff]
        %v2817 = vld [vmem:[%s330 + $0x228] sm:$0xff]
        %v2818 = vld [vmem:[%s330 + $0x230] sm:$0xff]
        %v2819 = vld [vmem:[%s330 + $0x238] sm:$0xff]
        %v2820 = vld [vmem:[%s330 + $0x240] sm:$0xff]
        %v2821 = vld [vmem:[%s330 + $0x248] sm:$0xff]
        %v2822 = vld [vmem:[%s330 + $0x250] sm:$0xff]
        %v2823 = vld [vmem:[%s330 + $0x258] sm:$0xff]
        %v2824 = vld [vmem:[%s330 + $0x260] sm:$0xff]
        %v2825 = vld [vmem:[%s330 + $0x268] sm:$0xff]
        %v2826 = vld [vmem:[%s330 + $0x270] sm:$0xff]
        %v2827 = vld [vmem:[%s330 + $0x278] sm:$0xff]
        %v2828 = vld [vmem:[%s330 + $0x280] sm:$0xff]
        %v2829 = vld [vmem:[%s330 + $0x288] sm:$0xff]
        %v2830 = vld [vmem:[%s330 + $0x290] sm:$0xff]
        %v2831 = vld [vmem:[%s330 + $0x298] sm:$0xff]
        %v2832 = vld [vmem:[%s330 + $0x2a0] sm:$0xff]
        %v2833 = vld [vmem:[%s330 + $0x2a8] sm:$0xff]
        %v2834 = vld [vmem:[%s330 + $0x2b0] sm:$0xff]
        %v2835 = vld [vmem:[%s330 + $0x2b8] sm:$0xff]
        %v2836 = vld [vmem:[%s330 + $0x2c0] sm:$0xff]
        %v2837 = vld [vmem:[%s330 + $0x2c8] sm:$0xff]
        %v2838 = vld [vmem:[%s330 + $0x2d0] sm:$0xff]
        %v2839 = vld [vmem:[%s330 + $0x2d8] sm:$0xff]
        %v2840 = vld [vmem:[%s330 + $0x2e0] sm:$0xff]
        %v2841 = vld [vmem:[%s330 + $0x2e8] sm:$0xff]
        %v2842 = vld [vmem:[%s330 + $0x2f0] sm:$0xff]
        %v2843 = vld [vmem:[%s330 + $0x2f8] sm:$0xff]
        %v2844 = vld [vmem:[%s330 + $0x300] sm:$0xff]
        %v2845 = vld [vmem:[%s330 + $0x308] sm:$0xff]
        %v2846 = vld [vmem:[%s330 + $0x310] sm:$0xff]
        %v2847 = vld [vmem:[%s330 + $0x318] sm:$0xff]
        %v2848 = vld [vmem:[%s330 + $0x320] sm:$0xff]
        %v2849 = vld [vmem:[%s330 + $0x328] sm:$0xff]
        %v2850 = vld [vmem:[%s330 + $0x330] sm:$0xff]
        %v2851 = vld [vmem:[%s330 + $0x338] sm:$0xff]
        %v2852 = vld [vmem:[%s330 + $0x340] sm:$0xff]
        %v2853 = vld [vmem:[%s330 + $0x348] sm:$0xff]
        %v2854 = vld [vmem:[%s330 + $0x350] sm:$0xff]
        %v2855 = vld [vmem:[%s330 + $0x358] sm:$0xff]
        %v2856 = vld [vmem:[%s330 + $0x360] sm:$0xff]
        %v2857 = vld [vmem:[%s330 + $0x368] sm:$0xff]
        %v2858 = vld [vmem:[%s330 + $0x370] sm:$0xff]
        %v2859 = vld [vmem:[%s330 + $0x378] sm:$0xff]
        %v2860 = vld [vmem:[%s330 + $0x380] sm:$0xff]
        %v2861 = vld [vmem:[%s330 + $0x388] sm:$0xff]
        %v2862 = vld [vmem:[%s330 + $0x390] sm:$0xff]
        %v2863 = vld [vmem:[%s330 + $0x398] sm:$0xff]
        %v2864 = vld [vmem:[%s330 + $0x3a0] sm:$0xff]
        %v2865 = vld [vmem:[%s330 + $0x3a8] sm:$0xff]
        %v2866 = vld [vmem:[%s330 + $0x3b0] sm:$0xff]
        %v2867 = vld [vmem:[%s330 + $0x3b8] sm:$0xff]
        %v2868 = vld [vmem:[%s330 + $0x3c0] sm:$0xff]
        %v2869 = vld [vmem:[%s330 + $0x3c8] sm:$0xff]
        %v2870 = vld [vmem:[%s330 + $0x3d0] sm:$0xff]
        %v2871 = vld [vmem:[%s330 + $0x3d8] sm:$0xff]
        %v2872 = vld [vmem:[%s330 + $0x3e0] sm:$0xff]
        %v2873 = vld [vmem:[%s330 + $0x3e8] sm:$0xff]
        %v2874 = vld [vmem:[%s330 + $0x3f0] sm:$0xff]
        %v2875 = vld [vmem:[%s330 + $0x3f8] sm:$0xff]
        %v3004 = vunpack.c.l.b16 %v2748
        %v3005 = vunpack.c.h.b16 %v2748
        %v3006 = vunpack.c.l.b16 %v2749
        %v3007 = vunpack.c.h.b16 %v2749
        %v3008 = vunpack.c.l.b16 %v2750
        %v3009 = vunpack.c.h.b16 %v2750
        %v3010 = vunpack.c.l.b16 %v2751
        %v3011 = vunpack.c.h.b16 %v2751
        %v3012 = vunpack.c.l.b16 %v2752
        %v3013 = vunpack.c.h.b16 %v2752
        %v3014 = vunpack.c.l.b16 %v2753
        %v3015 = vunpack.c.h.b16 %v2753
        %v3016 = vunpack.c.l.b16 %v2754
        %v3017 = vunpack.c.h.b16 %v2754
        %v3018 = vunpack.c.l.b16 %v2755
        %v3019 = vunpack.c.h.b16 %v2755
        %v3020 = vunpack.c.l.b16 %v2756
        %v3021 = vunpack.c.h.b16 %v2756
        %v3022 = vunpack.c.l.b16 %v2757
        %v3023 = vunpack.c.h.b16 %v2757
        %v3024 = vunpack.c.l.b16 %v2758
        %v3025 = vunpack.c.h.b16 %v2758
        %v3026 = vunpack.c.l.b16 %v2759
        %v3027 = vunpack.c.h.b16 %v2759
        %v3028 = vunpack.c.l.b16 %v2760
        %v3029 = vunpack.c.h.b16 %v2760
        %v3030 = vunpack.c.l.b16 %v2761
        %v3031 = vunpack.c.h.b16 %v2761
        %v3032 = vunpack.c.l.b16 %v2762
        %v3033 = vunpack.c.h.b16 %v2762
        %v3034 = vunpack.c.l.b16 %v2763
        %v3035 = vunpack.c.h.b16 %v2763
        %v3036 = vunpack.c.l.b16 %v2764
        %v3037 = vunpack.c.h.b16 %v2764
        %v3038 = vunpack.c.l.b16 %v2765
        %v3039 = vunpack.c.h.b16 %v2765
        %v3040 = vunpack.c.l.b16 %v2766
        %v3041 = vunpack.c.h.b16 %v2766
        %v3042 = vunpack.c.l.b16 %v2767
        %v3043 = vunpack.c.h.b16 %v2767
        %v3044 = vunpack.c.l.b16 %v2768
        %v3045 = vunpack.c.h.b16 %v2768
        %v3046 = vunpack.c.l.b16 %v2769
        %v3047 = vunpack.c.h.b16 %v2769
        %v3048 = vunpack.c.l.b16 %v2770
        %v3049 = vunpack.c.h.b16 %v2770
        %v3050 = vunpack.c.l.b16 %v2771
        %v3051 = vunpack.c.h.b16 %v2771
        %v3052 = vunpack.c.l.b16 %v2772
        %v3053 = vunpack.c.h.b16 %v2772
        %v3054 = vunpack.c.l.b16 %v2773
        %v3055 = vunpack.c.h.b16 %v2773
        %v3056 = vunpack.c.l.b16 %v2774
        %v3057 = vunpack.c.h.b16 %v2774
        %v3058 = vunpack.c.l.b16 %v2775
        %v3059 = vunpack.c.h.b16 %v2775
        %v3060 = vunpack.c.l.b16 %v2776
        %v3061 = vunpack.c.h.b16 %v2776
        %v3062 = vunpack.c.l.b16 %v2777
        %v3063 = vunpack.c.h.b16 %v2777
        %v3064 = vunpack.c.l.b16 %v2778
        %v3065 = vunpack.c.h.b16 %v2778
        %v3066 = vunpack.c.l.b16 %v2779
        %v3067 = vunpack.c.h.b16 %v2779
        %v3068 = vunpack.c.l.b16 %v2780
        %v3069 = vunpack.c.h.b16 %v2780
        %v3070 = vunpack.c.l.b16 %v2781
        %v3071 = vunpack.c.h.b16 %v2781
        %v3072 = vunpack.c.l.b16 %v2782
        %v3073 = vunpack.c.h.b16 %v2782
        %v3074 = vunpack.c.l.b16 %v2783
        %v3075 = vunpack.c.h.b16 %v2783
        %v3076 = vunpack.c.l.b16 %v2784
        %v3077 = vunpack.c.h.b16 %v2784
        %v3078 = vunpack.c.l.b16 %v2785
        %v3079 = vunpack.c.h.b16 %v2785
        %v3080 = vunpack.c.l.b16 %v2786
        %v3081 = vunpack.c.h.b16 %v2786
        %v3082 = vunpack.c.l.b16 %v2787
        %v3083 = vunpack.c.h.b16 %v2787
        %v3084 = vunpack.c.l.b16 %v2788
        %v3085 = vunpack.c.h.b16 %v2788
        %v3086 = vunpack.c.l.b16 %v2789
        %v3087 = vunpack.c.h.b16 %v2789
        %v3088 = vunpack.c.l.b16 %v2790
        %v3089 = vunpack.c.h.b16 %v2790
        %v3090 = vunpack.c.l.b16 %v2791
        %v3091 = vunpack.c.h.b16 %v2791
        %v3092 = vunpack.c.l.b16 %v2792
        %v3093 = vunpack.c.h.b16 %v2792
        %v3094 = vunpack.c.l.b16 %v2793
        %v3095 = vunpack.c.h.b16 %v2793
        %v3096 = vunpack.c.l.b16 %v2794
        %v3097 = vunpack.c.h.b16 %v2794
        %v3098 = vunpack.c.l.b16 %v2795
        %v3099 = vunpack.c.h.b16 %v2795
        %v3100 = vunpack.c.l.b16 %v2796
        %v3101 = vunpack.c.h.b16 %v2796
        %v3102 = vunpack.c.l.b16 %v2797
        %v3103 = vunpack.c.h.b16 %v2797
        %v3104 = vunpack.c.l.b16 %v2798
        %v3105 = vunpack.c.h.b16 %v2798
        %v3106 = vunpack.c.l.b16 %v2799
        %v3107 = vunpack.c.h.b16 %v2799
        %v3108 = vunpack.c.l.b16 %v2800
        %v3109 = vunpack.c.h.b16 %v2800
        %v3110 = vunpack.c.l.b16 %v2801
        %v3111 = vunpack.c.h.b16 %v2801
        %v3112 = vunpack.c.l.b16 %v2802
        %v3113 = vunpack.c.h.b16 %v2802
        %v3114 = vunpack.c.l.b16 %v2803
        %v3115 = vunpack.c.h.b16 %v2803
        %v3116 = vunpack.c.l.b16 %v2804
        %v3117 = vunpack.c.h.b16 %v2804
        %v3118 = vunpack.c.l.b16 %v2805
        %v3119 = vunpack.c.h.b16 %v2805
        %v3120 = vunpack.c.l.b16 %v2806
        %v3121 = vunpack.c.h.b16 %v2806
        %v3122 = vunpack.c.l.b16 %v2807
        %v3123 = vunpack.c.h.b16 %v2807
        %v3124 = vunpack.c.l.b16 %v2808
        %v3125 = vunpack.c.h.b16 %v2808
        %v3126 = vunpack.c.l.b16 %v2809
        %v3127 = vunpack.c.h.b16 %v2809
        %v3128 = vunpack.c.l.b16 %v2810
        %v3129 = vunpack.c.h.b16 %v2810
        %v3130 = vunpack.c.l.b16 %v2811
        %v3131 = vunpack.c.h.b16 %v2811
        %v3132 = vunpack.c.l.b16 %v2812
        %v3133 = vunpack.c.h.b16 %v2812
        %v3134 = vunpack.c.l.b16 %v2813
        %v3135 = vunpack.c.h.b16 %v2813
        %v3136 = vunpack.c.l.b16 %v2814
        %v3137 = vunpack.c.h.b16 %v2814
        %v3138 = vunpack.c.l.b16 %v2815
        %v3139 = vunpack.c.h.b16 %v2815
        %v3140 = vunpack.c.l.b16 %v2816
        %v3141 = vunpack.c.h.b16 %v2816
        %v3142 = vunpack.c.l.b16 %v2817
        %v3143 = vunpack.c.h.b16 %v2817
        %v3144 = vunpack.c.l.b16 %v2818
        %v3145 = vunpack.c.h.b16 %v2818
        %v3146 = vunpack.c.l.b16 %v2819
        %v3147 = vunpack.c.h.b16 %v2819
        %v3148 = vunpack.c.l.b16 %v2820
        %v3149 = vunpack.c.h.b16 %v2820
        %v3150 = vunpack.c.l.b16 %v2821
        %v3151 = vunpack.c.h.b16 %v2821
        %v3152 = vunpack.c.l.b16 %v2822
        %v3153 = vunpack.c.h.b16 %v2822
        %v3154 = vunpack.c.l.b16 %v2823
        %v3155 = vunpack.c.h.b16 %v2823
        %v3156 = vunpack.c.l.b16 %v2824
        %v3157 = vunpack.c.h.b16 %v2824
        %v3158 = vunpack.c.l.b16 %v2825
        %v3159 = vunpack.c.h.b16 %v2825
        %v3160 = vunpack.c.l.b16 %v2826
        %v3161 = vunpack.c.h.b16 %v2826
        %v3162 = vunpack.c.l.b16 %v2827
        %v3163 = vunpack.c.h.b16 %v2827
        %v3164 = vunpack.c.l.b16 %v2828
        %v3165 = vunpack.c.h.b16 %v2828
        %v3166 = vunpack.c.l.b16 %v2829
        %v3167 = vunpack.c.h.b16 %v2829
        %v3168 = vunpack.c.l.b16 %v2830
        %v3169 = vunpack.c.h.b16 %v2830
        %v3170 = vunpack.c.l.b16 %v2831
        %v3171 = vunpack.c.h.b16 %v2831
        %v3172 = vunpack.c.l.b16 %v2832
        %v3173 = vunpack.c.h.b16 %v2832
        %v3174 = vunpack.c.l.b16 %v2833
        %v3175 = vunpack.c.h.b16 %v2833
        %v3176 = vunpack.c.l.b16 %v2834
        %v3177 = vunpack.c.h.b16 %v2834
        %v3178 = vunpack.c.l.b16 %v2835
        %v3179 = vunpack.c.h.b16 %v2835
        %v3180 = vunpack.c.l.b16 %v2836
        %v3181 = vunpack.c.h.b16 %v2836
        %v3182 = vunpack.c.l.b16 %v2837
        %v3183 = vunpack.c.h.b16 %v2837
        %v3184 = vunpack.c.l.b16 %v2838
        %v3185 = vunpack.c.h.b16 %v2838
        %v3186 = vunpack.c.l.b16 %v2839
        %v3187 = vunpack.c.h.b16 %v2839
        %v3188 = vunpack.c.l.b16 %v2840
        %v3189 = vunpack.c.h.b16 %v2840
        %v3190 = vunpack.c.l.b16 %v2841
        %v3191 = vunpack.c.h.b16 %v2841
        %v3192 = vunpack.c.l.b16 %v2842
        %v3193 = vunpack.c.h.b16 %v2842
        %v3194 = vunpack.c.l.b16 %v2843
        %v3195 = vunpack.c.h.b16 %v2843
        %v3196 = vunpack.c.l.b16 %v2844
        %v3197 = vunpack.c.h.b16 %v2844
        %v3198 = vunpack.c.l.b16 %v2845
        %v3199 = vunpack.c.h.b16 %v2845
        %v3200 = vunpack.c.l.b16 %v2846
        %v3201 = vunpack.c.h.b16 %v2846
        %v3202 = vunpack.c.l.b16 %v2847
        %v3203 = vunpack.c.h.b16 %v2847
        %v3204 = vunpack.c.l.b16 %v2848
        %v3205 = vunpack.c.h.b16 %v2848
        %v3206 = vunpack.c.l.b16 %v2849
        %v3207 = vunpack.c.h.b16 %v2849
        %v3208 = vunpack.c.l.b16 %v2850
        %v3209 = vunpack.c.h.b16 %v2850
        %v3210 = vunpack.c.l.b16 %v2851
        %v3211 = vunpack.c.h.b16 %v2851
        %v3212 = vunpack.c.l.b16 %v2852
        %v3213 = vunpack.c.h.b16 %v2852
        %v3214 = vunpack.c.l.b16 %v2853
        %v3215 = vunpack.c.h.b16 %v2853
        %v3216 = vunpack.c.l.b16 %v2854
        %v3217 = vunpack.c.h.b16 %v2854
        %v3218 = vunpack.c.l.b16 %v2855
        %v3219 = vunpack.c.h.b16 %v2855
        %v3220 = vunpack.c.l.b16 %v2856
        %v3221 = vunpack.c.h.b16 %v2856
        %v3222 = vunpack.c.l.b16 %v2857
        %v3223 = vunpack.c.h.b16 %v2857
        %v3224 = vunpack.c.l.b16 %v2858
        %v3225 = vunpack.c.h.b16 %v2858
        %v3226 = vunpack.c.l.b16 %v2859
        %v3227 = vunpack.c.h.b16 %v2859
        %v3228 = vunpack.c.l.b16 %v2860
        %v3229 = vunpack.c.h.b16 %v2860
        %v3230 = vunpack.c.l.b16 %v2861
        %v3231 = vunpack.c.h.b16 %v2861
        %v3232 = vunpack.c.l.b16 %v2862
        %v3233 = vunpack.c.h.b16 %v2862
        %v3234 = vunpack.c.l.b16 %v2863
        %v3235 = vunpack.c.h.b16 %v2863
        %v3236 = vunpack.c.l.b16 %v2864
        %v3237 = vunpack.c.h.b16 %v2864
        %v3238 = vunpack.c.l.b16 %v2865
        %v3239 = vunpack.c.h.b16 %v2865
        %v3240 = vunpack.c.l.b16 %v2866
        %v3241 = vunpack.c.h.b16 %v2866
        %v3242 = vunpack.c.l.b16 %v2867
        %v3243 = vunpack.c.h.b16 %v2867
        %v3244 = vunpack.c.l.b16 %v2868
        %v3245 = vunpack.c.h.b16 %v2868
        %v3246 = vunpack.c.l.b16 %v2869
        %v3247 = vunpack.c.h.b16 %v2869
        %v3248 = vunpack.c.l.b16 %v2870
        %v3249 = vunpack.c.h.b16 %v2870
        %v3250 = vunpack.c.l.b16 %v2871
        %v3251 = vunpack.c.h.b16 %v2871
        %v3252 = vunpack.c.l.b16 %v2872
        %v3253 = vunpack.c.h.b16 %v2872
        %v3254 = vunpack.c.l.b16 %v2873
        %v3255 = vunpack.c.h.b16 %v2873
        %v3256 = vunpack.c.l.b16 %v2874
        %v3257 = vunpack.c.h.b16 %v2874
        %v3258 = vunpack.c.l.b16 %v2875
        %v3259 = vunpack.c.h.b16 %v2875
        %v3260 = vpack.c.b16 %v3006, %v3004
        %v3261 = vpack.c.b16 %v3007, %v3005
        %v3262 = vpack.c.b16 %v3010, %v3008
        %v3263 = vpack.c.b16 %v3011, %v3009
        %v3264 = vpack.c.b16 %v3014, %v3012
        %v3265 = vpack.c.b16 %v3015, %v3013
        %v3266 = vpack.c.b16 %v3018, %v3016
        %v3267 = vpack.c.b16 %v3019, %v3017
        %v3268 = vpack.c.b16 %v3022, %v3020
        %v3269 = vpack.c.b16 %v3023, %v3021
        %v3270 = vpack.c.b16 %v3026, %v3024
        %v3271 = vpack.c.b16 %v3027, %v3025
        %v3272 = vpack.c.b16 %v3030, %v3028
        %v3273 = vpack.c.b16 %v3031, %v3029
        %v3274 = vpack.c.b16 %v3034, %v3032
        %v3275 = vpack.c.b16 %v3035, %v3033
        %v3276 = vpack.c.b16 %v3038, %v3036
        %v3277 = vpack.c.b16 %v3039, %v3037
        %v3278 = vpack.c.b16 %v3042, %v3040
        %v3279 = vpack.c.b16 %v3043, %v3041
        %v3280 = vpack.c.b16 %v3046, %v3044
        %v3281 = vpack.c.b16 %v3047, %v3045
        %v3282 = vpack.c.b16 %v3050, %v3048
        %v3283 = vpack.c.b16 %v3051, %v3049
        %v3284 = vpack.c.b16 %v3054, %v3052
        %v3285 = vpack.c.b16 %v3055, %v3053
        %v3286 = vpack.c.b16 %v3058, %v3056
        %v3287 = vpack.c.b16 %v3059, %v3057
        %v3288 = vpack.c.b16 %v3062, %v3060
        %v3289 = vpack.c.b16 %v3063, %v3061
        %v3290 = vpack.c.b16 %v3066, %v3064
        %v3291 = vpack.c.b16 %v3067, %v3065
        %v3292 = vpack.c.b16 %v3070, %v3068
        %v3293 = vpack.c.b16 %v3071, %v3069
        %v3294 = vpack.c.b16 %v3074, %v3072
        %v3295 = vpack.c.b16 %v3075, %v3073
        %v3296 = vpack.c.b16 %v3078, %v3076
        %v3297 = vpack.c.b16 %v3079, %v3077
        %v3298 = vpack.c.b16 %v3082, %v3080
        %v3299 = vpack.c.b16 %v3083, %v3081
        %v3300 = vpack.c.b16 %v3086, %v3084
        %v3301 = vpack.c.b16 %v3087, %v3085
        %v3302 = vpack.c.b16 %v3090, %v3088
        %v3303 = vpack.c.b16 %v3091, %v3089
        %v3304 = vpack.c.b16 %v3094, %v3092
        %v3305 = vpack.c.b16 %v3095, %v3093
        %v3306 = vpack.c.b16 %v3098, %v3096
        %v3307 = vpack.c.b16 %v3099, %v3097
        %v3308 = vpack.c.b16 %v3102, %v3100
        %v3309 = vpack.c.b16 %v3103, %v3101
        %v3310 = vpack.c.b16 %v3106, %v3104
        %v3311 = vpack.c.b16 %v3107, %v3105
        %v3312 = vpack.c.b16 %v3110, %v3108
        %v3313 = vpack.c.b16 %v3111, %v3109
        %v3314 = vpack.c.b16 %v3114, %v3112
        %v3315 = vpack.c.b16 %v3115, %v3113
        %v3316 = vpack.c.b16 %v3118, %v3116
        %v3317 = vpack.c.b16 %v3119, %v3117
        %v3318 = vpack.c.b16 %v3122, %v3120
        %v3319 = vpack.c.b16 %v3123, %v3121
        %v3320 = vpack.c.b16 %v3126, %v3124
        %v3321 = vpack.c.b16 %v3127, %v3125
        %v3322 = vpack.c.b16 %v3130, %v3128
        %v3323 = vpack.c.b16 %v3131, %v3129
        %v3324 = vpack.c.b16 %v3134, %v3132
        %v3325 = vpack.c.b16 %v3135, %v3133
        %v3326 = vpack.c.b16 %v3138, %v3136
        %v3327 = vpack.c.b16 %v3139, %v3137
        %v3328 = vpack.c.b16 %v3142, %v3140
        %v3329 = vpack.c.b16 %v3143, %v3141
        %v3330 = vpack.c.b16 %v3146, %v3144
        %v3331 = vpack.c.b16 %v3147, %v3145
        %v3332 = vpack.c.b16 %v3150, %v3148
        %v3333 = vpack.c.b16 %v3151, %v3149
        %v3334 = vpack.c.b16 %v3154, %v3152
        %v3335 = vpack.c.b16 %v3155, %v3153
        %v3336 = vpack.c.b16 %v3158, %v3156
        %v3337 = vpack.c.b16 %v3159, %v3157
        %v3338 = vpack.c.b16 %v3162, %v3160
        %v3339 = vpack.c.b16 %v3163, %v3161
        %v3340 = vpack.c.b16 %v3166, %v3164
        %v3341 = vpack.c.b16 %v3167, %v3165
        %v3342 = vpack.c.b16 %v3170, %v3168
        %v3343 = vpack.c.b16 %v3171, %v3169
        %v3344 = vpack.c.b16 %v3174, %v3172
        %v3345 = vpack.c.b16 %v3175, %v3173
        %v3346 = vpack.c.b16 %v3178, %v3176
        %v3347 = vpack.c.b16 %v3179, %v3177
        %v3348 = vpack.c.b16 %v3182, %v3180
        %v3349 = vpack.c.b16 %v3183, %v3181
        %v3350 = vpack.c.b16 %v3186, %v3184
        %v3351 = vpack.c.b16 %v3187, %v3185
        %v3352 = vpack.c.b16 %v3190, %v3188
        %v3353 = vpack.c.b16 %v3191, %v3189
        %v3354 = vpack.c.b16 %v3194, %v3192
        %v3355 = vpack.c.b16 %v3195, %v3193
        %v3356 = vpack.c.b16 %v3198, %v3196
        %v3357 = vpack.c.b16 %v3199, %v3197
        %v3358 = vpack.c.b16 %v3202, %v3200
        %v3359 = vpack.c.b16 %v3203, %v3201
        %v3360 = vpack.c.b16 %v3206, %v3204
        %v3361 = vpack.c.b16 %v3207, %v3205
        %v3362 = vpack.c.b16 %v3210, %v3208
        %v3363 = vpack.c.b16 %v3211, %v3209
        %v3364 = vpack.c.b16 %v3214, %v3212
        %v3365 = vpack.c.b16 %v3215, %v3213
        %v3366 = vpack.c.b16 %v3218, %v3216
        %v3367 = vpack.c.b16 %v3219, %v3217
        %v3368 = vpack.c.b16 %v3222, %v3220
        %v3369 = vpack.c.b16 %v3223, %v3221
        %v3370 = vpack.c.b16 %v3226, %v3224
        %v3371 = vpack.c.b16 %v3227, %v3225
        %v3372 = vpack.c.b16 %v3230, %v3228
        %v3373 = vpack.c.b16 %v3231, %v3229
        %v3374 = vpack.c.b16 %v3234, %v3232
        %v3375 = vpack.c.b16 %v3235, %v3233
        %v3376 = vpack.c.b16 %v3238, %v3236
        %v3377 = vpack.c.b16 %v3239, %v3237
        %v3378 = vpack.c.b16 %v3242, %v3240
        %v3379 = vpack.c.b16 %v3243, %v3241
        %v3380 = vpack.c.b16 %v3246, %v3244
        %v3381 = vpack.c.b16 %v3247, %v3245
        %v3382 = vpack.c.b16 %v3250, %v3248
        %v3383 = vpack.c.b16 %v3251, %v3249
        %v3384 = vpack.c.b16 %v3254, %v3252
        %v3385 = vpack.c.b16 %v3255, %v3253
        %v3386 = vpack.c.b16 %v3258, %v3256
        %v3387 = vpack.c.b16 %v3259, %v3257
        %3516 = vmatpush.bf16.msra.mxu0 %v3274
        %3517 = vmatpush.bf16.msra.mxu0 %v3272
        %3518 = vmatpush.bf16.msra.mxu0 %v3270
        %3519 = vmatpush.bf16.msra.mxu0 %v3268
        %3520 = vmatpush.bf16.msra.mxu0 %v3266
        %3521 = vmatpush.bf16.msra.mxu0 %v3264
        %3522 = vmatpush.bf16.msra.mxu0 %v3262
        %3523 = vmatpush.bf16.msra.mxu0 %v3260
        %3524 = vmatmul.bf16.gmra.mxu0 %v2736
        %v3525 = vpop.f32.mrf.mxu0
        %v3526 = vadd.f32 0.0, %v3525
        %v3527 = vpop.f32.mrf.mxu0
        %v3528 = vadd.f32 0.0, %v3527
        %3529 = vdwg.mxu0
        %3530 = vmatpush.bf16.msra.mxu0 %v3290
        %3531 = vmatpush.bf16.msra.mxu0 %v3288
        %3532 = vmatpush.bf16.msra.mxu0 %v3286
        %3533 = vmatpush.bf16.msra.mxu0 %v3284
        %3534 = vmatpush.bf16.msra.mxu0 %v3282
        %3535 = vmatpush.bf16.msra.mxu0 %v3280
        %3536 = vmatpush.bf16.msra.mxu0 %v3278
        %3537 = vmatpush.bf16.msra.mxu0 %v3276
        %3538 = vmatmul.bf16.gmra.mxu0 %v2737
        %v3539 = vpop.f32.mrf.mxu0
        %v3540 = vadd.f32 %v3526, %v3539
        %v3541 = vpop.f32.mrf.mxu0
        %v3542 = vadd.f32 %v3528, %v3541
        %3543 = vdwg.mxu0
        %3544 = vmatpush.bf16.msra.mxu0 %v3306
        %3545 = vmatpush.bf16.msra.mxu0 %v3304
        %3546 = vmatpush.bf16.msra.mxu0 %v3302
        %3547 = vmatpush.bf16.msra.mxu0 %v3300
        %3548 = vmatpush.bf16.msra.mxu0 %v3298
        %3549 = vmatpush.bf16.msra.mxu0 %v3296
        %3550 = vmatpush.bf16.msra.mxu0 %v3294
        %3551 = vmatpush.bf16.msra.mxu0 %v3292
        %3552 = vmatmul.bf16.gmra.mxu0 %v2738
        %v3553 = vpop.f32.mrf.mxu0
        %v3554 = vadd.f32 %v3540, %v3553
        %v3555 = vpop.f32.mrf.mxu0
        %v3556 = vadd.f32 %v3542, %v3555
        %3557 = vdwg.mxu0
        %3558 = vmatpush.bf16.msra.mxu0 %v3322
        %3559 = vmatpush.bf16.msra.mxu0 %v3320
        %3560 = vmatpush.bf16.msra.mxu0 %v3318
        %3561 = vmatpush.bf16.msra.mxu0 %v3316
        %3562 = vmatpush.bf16.msra.mxu0 %v3314
        %3563 = vmatpush.bf16.msra.mxu0 %v3312
        %3564 = vmatpush.bf16.msra.mxu0 %v3310
        %3565 = vmatpush.bf16.msra.mxu0 %v3308
        %3566 = vmatmul.bf16.gmra.mxu0 %v2739
        %v3567 = vpop.f32.mrf.mxu0
        %v3568 = vadd.f32 %v3554, %v3567
        %v3569 = vpop.f32.mrf.mxu0
        %v3570 = vadd.f32 %v3556, %v3569
        %3571 = vdwg.mxu0
        %3572 = vmatpush.bf16.msra.mxu0 %v3338
        %3573 = vmatpush.bf16.msra.mxu0 %v3336
        %3574 = vmatpush.bf16.msra.mxu0 %v3334
        %3575 = vmatpush.bf16.msra.mxu0 %v3332
        %3576 = vmatpush.bf16.msra.mxu0 %v3330
        %3577 = vmatpush.bf16.msra.mxu0 %v3328
        %3578 = vmatpush.bf16.msra.mxu0 %v3326
        %3579 = vmatpush.bf16.msra.mxu0 %v3324
        %3580 = vmatmul.bf16.gmra.mxu0 %v2740
        %v3581 = vpop.f32.mrf.mxu0
        %v3582 = vadd.f32 %v3568, %v3581
        %v3583 = vpop.f32.mrf.mxu0
        %v3584 = vadd.f32 %v3570, %v3583
        %3585 = vdwg.mxu0
        %3586 = vmatpush.bf16.msra.mxu0 %v3354
        %3587 = vmatpush.bf16.msra.mxu0 %v3352
        %3588 = vmatpush.bf16.msra.mxu0 %v3350
        %3589 = vmatpush.bf16.msra.mxu0 %v3348
        %3590 = vmatpush.bf16.msra.mxu0 %v3346
        %3591 = vmatpush.bf16.msra.mxu0 %v3344
        %3592 = vmatpush.bf16.msra.mxu0 %v3342
        %3593 = vmatpush.bf16.msra.mxu0 %v3340
        %3594 = vmatmul.bf16.gmra.mxu0 %v2741
        %v3595 = vpop.f32.mrf.mxu0
        %v3596 = vadd.f32 %v3582, %v3595
        %v3597 = vpop.f32.mrf.mxu0
        %v3598 = vadd.f32 %v3584, %v3597
        %3599 = vdwg.mxu0
        %3600 = vmatpush.bf16.msra.mxu0 %v3370
        %3601 = vmatpush.bf16.msra.mxu0 %v3368
        %3602 = vmatpush.bf16.msra.mxu0 %v3366
        %3603 = vmatpush.bf16.msra.mxu0 %v3364
        %3604 = vmatpush.bf16.msra.mxu0 %v3362
        %3605 = vmatpush.bf16.msra.mxu0 %v3360
        %3606 = vmatpush.bf16.msra.mxu0 %v3358
        %3607 = vmatpush.bf16.msra.mxu0 %v3356
        %3608 = vmatmul.bf16.gmra.mxu0 %v2742
        %v3609 = vpop.f32.mrf.mxu0
        %v3610 = vadd.f32 %v3596, %v3609
        %v3611 = vpop.f32.mrf.mxu0
        %v3612 = vadd.f32 %v3598, %v3611
        %3613 = vdwg.mxu0
        %3614 = vmatpush.bf16.msra.mxu0 %v3386
        %3615 = vmatpush.bf16.msra.mxu0 %v3384
        %3616 = vmatpush.bf16.msra.mxu0 %v3382
        %3617 = vmatpush.bf16.msra.mxu0 %v3380
        %3618 = vmatpush.bf16.msra.mxu0 %v3378
        %3619 = vmatpush.bf16.msra.mxu0 %v3376
        %3620 = vmatpush.bf16.msra.mxu0 %v3374
        %3621 = vmatpush.bf16.msra.mxu0 %v3372
        %3622 = vmatmul.bf16.gmra.mxu0 %v2743
        %v3623 = vpop.f32.mrf.mxu0
        %v3624 = vadd.f32 %v3610, %v3623
        %v3625 = vpop.f32.mrf.mxu0
        %v3626 = vadd.f32 %v3612, %v3625
        %3627 = vdwg.mxu0
        %3628 = vmatpush.bf16.msra.mxu0 %v3275
        %3629 = vmatpush.bf16.msra.mxu0 %v3273
        %3630 = vmatpush.bf16.msra.mxu0 %v3271
        %3631 = vmatpush.bf16.msra.mxu0 %v3269
        %3632 = vmatpush.bf16.msra.mxu0 %v3267
        %3633 = vmatpush.bf16.msra.mxu0 %v3265
        %3634 = vmatpush.bf16.msra.mxu0 %v3263
        %3635 = vmatpush.bf16.msra.mxu0 %v3261
        %3636 = vmatmul.bf16.gmra.mxu0 %v2736
        %v3637 = vpop.f32.mrf.mxu0
        %v3638 = vadd.f32 0.0, %v3637
        %v3639 = vpop.f32.mrf.mxu0
        %v3640 = vadd.f32 0.0, %v3639
        %3641 = vdwg.mxu0
        %3642 = vmatpush.bf16.msra.mxu0 %v3291
        %3643 = vmatpush.bf16.msra.mxu0 %v3289
        %3644 = vmatpush.bf16.msra.mxu0 %v3287
        %3645 = vmatpush.bf16.msra.mxu0 %v3285
        %3646 = vmatpush.bf16.msra.mxu0 %v3283
        %3647 = vmatpush.bf16.msra.mxu0 %v3281
        %3648 = vmatpush.bf16.msra.mxu0 %v3279
        %3649 = vmatpush.bf16.msra.mxu0 %v3277
        %3650 = vmatmul.bf16.gmra.mxu0 %v2737
        %v3651 = vpop.f32.mrf.mxu0
        %v3652 = vadd.f32 %v3638, %v3651
        %v3653 = vpop.f32.mrf.mxu0
        %v3654 = vadd.f32 %v3640, %v3653
        %3655 = vdwg.mxu0
        %3656 = vmatpush.bf16.msra.mxu0 %v3307
        %3657 = vmatpush.bf16.msra.mxu0 %v3305
        %3658 = vmatpush.bf16.msra.mxu0 %v3303
        %3659 = vmatpush.bf16.msra.mxu0 %v3301
        %3660 = vmatpush.bf16.msra.mxu0 %v3299
        %3661 = vmatpush.bf16.msra.mxu0 %v3297
        %3662 = vmatpush.bf16.msra.mxu0 %v3295
        %3663 = vmatpush.bf16.msra.mxu0 %v3293
        %3664 = vmatmul.bf16.gmra.mxu0 %v2738
        %v3665 = vpop.f32.mrf.mxu0
        %v3666 = vadd.f32 %v3652, %v3665
        %v3667 = vpop.f32.mrf.mxu0
        %v3668 = vadd.f32 %v3654, %v3667
        %3669 = vdwg.mxu0
        %3670 = vmatpush.bf16.msra.mxu0 %v3323
        %3671 = vmatpush.bf16.msra.mxu0 %v3321
        %3672 = vmatpush.bf16.msra.mxu0 %v3319
        %3673 = vmatpush.bf16.msra.mxu0 %v3317
        %3674 = vmatpush.bf16.msra.mxu0 %v3315
        %3675 = vmatpush.bf16.msra.mxu0 %v3313
        %3676 = vmatpush.bf16.msra.mxu0 %v3311
        %3677 = vmatpush.bf16.msra.mxu0 %v3309
        %3678 = vmatmul.bf16.gmra.mxu0 %v2739
        %v3679 = vpop.f32.mrf.mxu0
        %v3680 = vadd.f32 %v3666, %v3679
        %v3681 = vpop.f32.mrf.mxu0
        %v3682 = vadd.f32 %v3668, %v3681
        %3683 = vdwg.mxu0
        %3684 = vmatpush.bf16.msra.mxu0 %v3339
        %3685 = vmatpush.bf16.msra.mxu0 %v3337
        %3686 = vmatpush.bf16.msra.mxu0 %v3335
        %3687 = vmatpush.bf16.msra.mxu0 %v3333
        %3688 = vmatpush.bf16.msra.mxu0 %v3331
        %3689 = vmatpush.bf16.msra.mxu0 %v3329
        %3690 = vmatpush.bf16.msra.mxu0 %v3327
        %3691 = vmatpush.bf16.msra.mxu0 %v3325
        %3692 = vmatmul.bf16.gmra.mxu0 %v2740
        %v3693 = vpop.f32.mrf.mxu0
        %v3694 = vadd.f32 %v3680, %v3693
        %v3695 = vpop.f32.mrf.mxu0
        %v3696 = vadd.f32 %v3682, %v3695
        %3697 = vdwg.mxu0
        %3698 = vmatpush.bf16.msra.mxu0 %v3355
        %3699 = vmatpush.bf16.msra.mxu0 %v3353
        %3700 = vmatpush.bf16.msra.mxu0 %v3351
        %3701 = vmatpush.bf16.msra.mxu0 %v3349
        %3702 = vmatpush.bf16.msra.mxu0 %v3347
        %3703 = vmatpush.bf16.msra.mxu0 %v3345
        %3704 = vmatpush.bf16.msra.mxu0 %v3343
        %3705 = vmatpush.bf16.msra.mxu0 %v3341
        %3706 = vmatmul.bf16.gmra.mxu0 %v2741
        %v3707 = vpop.f32.mrf.mxu0
        %v3708 = vadd.f32 %v3694, %v3707
        %v3709 = vpop.f32.mrf.mxu0
        %v3710 = vadd.f32 %v3696, %v3709
        %3711 = vdwg.mxu0
        %3712 = vmatpush.bf16.msra.mxu0 %v3371
        %3713 = vmatpush.bf16.msra.mxu0 %v3369
        %3714 = vmatpush.bf16.msra.mxu0 %v3367
        %3715 = vmatpush.bf16.msra.mxu0 %v3365
        %3716 = vmatpush.bf16.msra.mxu0 %v3363
        %3717 = vmatpush.bf16.msra.mxu0 %v3361
        %3718 = vmatpush.bf16.msra.mxu0 %v3359
        %3719 = vmatpush.bf16.msra.mxu0 %v3357
        %3720 = vmatmul.bf16.gmra.mxu0 %v2742
        %v3721 = vpop.f32.mrf.mxu0
        %v3722 = vadd.f32 %v3708, %v3721
        %v3723 = vpop.f32.mrf.mxu0
        %v3724 = vadd.f32 %v3710, %v3723
        %3725 = vdwg.mxu0
        %3726 = vmatpush.bf16.msra.mxu0 %v3387
        %3727 = vmatpush.bf16.msra.mxu0 %v3385
        %3728 = vmatpush.bf16.msra.mxu0 %v3383
        %3729 = vmatpush.bf16.msra.mxu0 %v3381
        %3730 = vmatpush.bf16.msra.mxu0 %v3379
        %3731 = vmatpush.bf16.msra.mxu0 %v3377
        %3732 = vmatpush.bf16.msra.mxu0 %v3375
        %3733 = vmatpush.bf16.msra.mxu0 %v3373
        %3734 = vmatmul.bf16.gmra.mxu0 %v2743
        %v3735 = vpop.f32.mrf.mxu0
        %v3736 = vadd.f32 %v3722, %v3735
        %v3737 = vpop.f32.mrf.mxu0
        %v3738 = vadd.f32 %v3724, %v3737
        %3739 = vdwg.mxu0
        %v3740 = vadd.f32 %v2744, %v3624
        %v3741 = vadd.f32 %v2745, %v3736
        %v3742 = vadd.f32 %v2746, %v3626
        %v3743 = vadd.f32 %v2747, %v3738
        %3744 = vst [vmem:[#allocation2] sm:$0xff] %v3740
        %3745 = vst [vmem:[#allocation2 + $0x8] sm:$0xff] %v3741
        %3746 = vst [vmem:[#allocation2 + $0x10] sm:$0xff] %v3742
        %3747 = vst [vmem:[#allocation2 + $0x18] sm:$0xff] %v3743
        // Predicated region
        $region57: #{expert_choice_moe_forward.1} parent=39 // pred_check
          %p3748 = pneg %p396
        $region58: #{expert_choice_moe_forward.1} parent=39 // pred_check_branch
          %3750 = sbr.rel (%p3748) target = $region60
        $region59: #{expert_choice_moe_forward.1} parent=39 // pred_region
          %v3751 = vld [vmem:[#allocation2] sm:$0xff]
          %v3752 = vld [vmem:[#allocation2 + $0x8] sm:$0xff]
          %v3753 = vld [vmem:[#allocation2 + $0x10] sm:$0xff]
          %v3754 = vld [vmem:[#allocation2 + $0x18] sm:$0xff]
          %v3755 = vld [vmem:[%s390] sm:$0xff]
          %v3756 = vld [vmem:[%s390 + $0x8] sm:$0xff]
          %3758 = vset.pattern.permute.xlu0 0
          %3759 = vperm.xlu0 %3758, %v3755
          %v3760 = vpop.permute.xlu0 %3759
          %3763 = vset.pattern.permute.xlu0 0
          %3764 = vperm.xlu0 %3763, %v3756
          %v3765 = vpop.permute.xlu0 %3764
          %v3767 = vmul.f32 %v3751, %v3760
          %v3768 = vmul.f32 %v3752, %v3760
          %v3769 = vmul.f32 %v3753, %v3765
          %v3770 = vmul.f32 %v3754, %v3765
          %v3771 = vpack.c.bf16 %v3768, %v3767
          %v3772 = vpack.c.bf16 %v3770, %v3769
          %3773 = vst [vmem:[%s395] sm:$0xff] %v3771
          %3774 = vst [vmem:[%s395 + $0x8] sm:$0xff] %v3772
        $region60: #{expert_choice_moe_forward.1} parent=39 // pred_fallthru
          _
        %p3775 = scmp.lt.s32.totalorder %s26, 7
        %s3776 = scalar_select %p3775, %s26, 7
        %s3777 = smul.addr %s3776, 4
        %s3778 = smul.addr %s3777, 4
        %s3779 = scalar_lea.vmem %s5, %s3778
        // Predicated region
        $region61: #{expert_choice_moe_forward.1} parent=39 // pred_check
          %p3780 = pneg %p188
        $region62: #{expert_choice_moe_forward.1} parent=39 // pred_check_branch
          %3782 = sbr.rel (%p3780) target = $region64
        $region63: #{expert_choice_moe_forward.1} parent=39 // pred_region
          _
        $region64: #{expert_choice_moe_forward.1} parent=39 // pred_fallthru
          _
      $region40: #{expert_choice_moe_forward.1} parent=5 // pred_fallthru
        _
      %p3783 = scmp.le.s32.totalorder 2, %s17
      // Predicated region
      $region65: #{expert_choice_moe_forward.1} parent=5 // pred_check
        %p3784 = pneg %p3783
      $region66: #{expert_choice_moe_forward.1} parent=5 // pred_check_branch
        %3786 = sbr.rel (%p3784) target = $region68
      $region67: #{expert_choice_moe_forward.1} parent=5 // pred_region
        %s3787 = ssub.s32 %s17, 2
        // Predicated region
        $region69: #{expert_choice_moe_forward.1} parent=67 // pred_check
          %p3788 = pneg %p194
        $region70: #{expert_choice_moe_forward.1} parent=67 // pred_check_branch
          %3790 = sbr.rel (%p3788) target = $region72
        $region71: #{expert_choice_moe_forward.1} parent=67 // pred_region
          %p3791 = scmp.lt.s32.totalorder %s28, 7
          %s3792 = scalar_select %p3791, %s28, 7
          %s3793 = smul.addr %s3792, 4
          %s3794 = smul.addr %s3793, 4
          %s3795 = scalar_lea.vmem %s5, %s3794
        $region72: #{expert_choice_moe_forward.1} parent=67 // pred_fallthru
          _
      $region68: #{expert_choice_moe_forward.1} parent=5 // pred_fallthru
        _
    $region6: #{expert_choice_moe_forward.1} parent=1 // loop_footer
      %s21 = sadd.s32 1, %s17
    $region7: #{expert_choice_moe_forward.1} parent=1 // loop_footer_branch
      %16 = sbr.rel target = $region3
    $region8: #{expert_choice_moe_forward.1} parent=1 // loop_exit
      _
    %3796 = vsyncpa [#allocation4], 1
    %s3797 = scalar_lea.sflag [#allocation4], 1
    %3798 = vsyncpa %s3797, 1
    %3799 = vsyncpa [#allocation6], 1
    %s3800 = scalar_lea.sflag [#allocation6], 1
    %3801 = vsyncpa %s3800, 1

</llo_original>
